<compile_context>
chip_gen: v6e
topology: v6e:2x2x1
jax: 0.10.0
libtpu: 0.0.40
codegen_flags: <defaults>
</compile_context>

<pallas_src>
import math

import jax
import jax.numpy as jnp
from jax.experimental import pallas as pl
from jax.experimental.pallas import tpu as pltpu


# ----------------------------- model dims (small) -----------------------------
B = 2            # batch
S = 8            # seq_length
F = 4            # input_size (CartPole observation dim)
D = 32           # d_model
H = 4            # nhead
HD = D // H      # head dim = 8
DFF = 64         # feed-forward dim
A = 2            # num_actions
NUM_LAYERS = 2
LN_EPS = 1e-5
M = B * S        # flattened rows

# ---------------------- constants-slab row layout (8-aligned) -----------------
OFF_WI = 0                         # [0:F,   0:D ]  wi.T * sqrt(D)
OFF_PE = 8                         # [8:8+M, 0:D ]  bi*sqrt(D) + PE, tiled over batch
OFF_MASK = 24                      # [.. :+M, 0:M]  block-diagonal additive mask
OFF_SEL = 40                       # [.. :+8, 0:M]  last-token selector (rows 0..B-1)
OFF_WF = 48                        # [.. :+D, 0:128] fc weight wf.T padded (lanes 0:A)
OFF_BF = 80                        # [.. :+1, 0:128] fc bias padded
OFF_LAYER = 88                     # per-layer 8-row blocks
VEC_ROWS = OFF_LAYER + 8 * NUM_LAYERS          # 104
W_ROWS = 3 * D + DFF                           # 160 (wqkv | wo | w1 | w2)
W_COLS = 3 * D                                 # 96
OUT_PAD = (8, 128)                             # lane-dense padded output


# ------------------------------- kernel helpers --------------------------------
def _layer_norm(x, w, b):
    mu = jnp.mean(x, axis=-1, keepdims=True)
    var = jnp.mean((x - mu) * (x - mu), axis=-1, keepdims=True)
    return (x - mu) * jax.lax.rsqrt(var + LN_EPS) * w + b


# ------------------------------- fused kernel ----------------------------------
def fused_forward_kernel(x_ref, vec_ref, w_ref, o_ref):
    scale = 1.0 / math.sqrt(HD)
    vec = vec_ref[...]                                    # (VEC_ROWS, 128) constants

    wi = vec[OFF_WI:OFF_WI + F, 0:D]                      # (F, D), pre-scaled by sqrt(D)
    pe_bias = vec[OFF_PE:OFF_PE + M, 0:D]                 # (M, D)  bi*sqrt(D) + PE
    mask = vec[OFF_MASK:OFF_MASK + M, 0:M]                # (M, M)  block-diag additive mask
    sel = vec[OFF_SEL:OFF_SEL + 8, 0:M]                   # (8, M)  last-token selector
    wf = vec[OFF_WF:OFF_WF + D, :]                        # (D, 128) fc head (lanes 0:A valid)
    bf = vec[OFF_BF:OFF_BF + 1, :]                        # (1, 128)

    # ---- embedding; sqrt(D) and positional encoding folded into wi / pe_bias ----
    h = jnp.dot(x_ref[...], wi, preferred_element_type=jnp.float32) + pe_bias   # (M, D)

    # ---- 2 encoder layers, statically unrolled; weights stay VMEM-resident ----
    for l in range(NUM_LAYERS):
        w_l = w_ref[l]                                    # (W_ROWS, W_COLS)
        wqkv = w_l[0:D, 0:3 * D]                          # (D, 3D)
        wo = w_l[D:2 * D, 0:D]                            # (D, D)
        w1 = w_l[2 * D:3 * D, 0:DFF]                      # (D, DFF)
        w2 = w_l[3 * D:3 * D + DFF, 0:D]                  # (DFF, D)

        base = OFF_LAYER + 8 * l
        bqkv = vec[base + 0:base + 1, 0:3 * D]
        bo = vec[base + 1:base + 2, 0:D]
        ln1w = vec[base + 2:base + 3, 0:D]
        ln1b = vec[base + 3:base + 4, 0:D]
        b1 = vec[base + 4:base + 5, 0:DFF]
        b2 = vec[base + 5:base + 6, 0:D]
        ln2w = vec[base + 6:base + 7, 0:D]
        ln2b = vec[base + 7:base + 8, 0:D]

        # fused QKV projection: one (M,D)@(D,3D) MXU pass
        qkv = jnp.dot(h, wqkv, preferred_element_type=jnp.float32) + bqkv       # (M, 3D)

        # per-head attention; out-projection folded per head (no lane concat)
        attn = jnp.zeros((M, D), jnp.float32)
        for hh in range(H):
            qh = qkv[:, hh * HD:(hh + 1) * HD]                                   # (M, HD)
            kh = qkv[:, (H + hh) * HD:(H + hh + 1) * HD]                         # (M, HD)
            vh = qkv[:, (2 * H + hh) * HD:(2 * H + hh + 1) * HD]                 # (M, HD)
            s = jax.lax.dot_general(qh, kh, (((1,), (1,)), ((), ())),
                                    preferred_element_type=jnp.float32)          # (M, M)
            s = s * scale + mask
            s = s - jnp.max(s, axis=-1, keepdims=True)
            p = jnp.exp(s)
            p = p / jnp.sum(p, axis=-1, keepdims=True)      # exact divide (argmax parity)
            oh = jnp.dot(p, vh, preferred_element_type=jnp.float32)              # (M, HD)
            attn = attn + jnp.dot(oh, wo[hh * HD:(hh + 1) * HD, :],
                                  preferred_element_type=jnp.float32)            # (M, D)
        attn = attn + bo

        # residual + LayerNorm1 (post-norm; dropout == identity in eval)
        h1 = _layer_norm(h + attn, ln1w, ln1b)

        # feed-forward (ReLU) + residual + LayerNorm2
        f = jnp.dot(h1, w1, preferred_element_type=jnp.float32) + b1
        f = jnp.maximum(f, 0.0)
        f = jnp.dot(f, w2, preferred_element_type=jnp.float32) + b2
        h = _layer_norm(h1 + f, ln2w, ln2b)

    # ---- last-token select via precomputed selector + fc, lane-dense store ----
    h_last = jnp.dot(sel, h, preferred_element_type=jnp.float32)                 # (8, D)
    o_ref[...] = jnp.dot(h_last, wf, preferred_element_type=jnp.float32) + bf    # (8, 128)


# ------------------------------- wrappers --------------------------------------
def _full(shape):
    nd = len(shape)
    return pl.BlockSpec(shape, lambda *_: (0,) * nd)


def pack_kernel_params(params):
    """One-time repack of PyTorch-layout params into two lane-dense slabs."""
    sqrt_d = math.sqrt(D)

    vec = jnp.zeros((VEC_ROWS, 128), jnp.float32)
    # input projection (scaled) and folded bias'/PE
    vec = vec.at[OFF_WI:OFF_WI + F, 0:D].set(params["wi"].T * sqrt_d)
    pe_bias = jnp.tile(params["bi"] * sqrt_d + params["pe"], (B, 1))            # (M, D)
    vec = vec.at[OFF_PE:OFF_PE + M, 0:D].set(pe_bias)
    # block-diagonal batch mask (flattened rows must not attend across batches)
    rb = jnp.arange(M)[:, None] // S
    cb = jnp.arange(M)[None, :] // S
    vec = vec.at[OFF_MASK:OFF_MASK + M, 0:M].set(
        jnp.where(rb == cb, 0.0, -1e30).astype(jnp.float32))
    # last-token selector
    sel = jnp.zeros((8, M), jnp.float32)
    for b in range(B):
        sel = sel.at[b, b * S + S - 1].set(1.0)
    vec = vec.at[OFF_SEL:OFF_SEL + 8, 0:M].set(sel)
    # final fc head, padded to 128 output lanes
    vec = vec.at[OFF_WF:OFF_WF + D, 0:A].set(params["wf"].T)
    vec = vec.at[OFF_BF, 0:A].set(params["bf"][0])
    # per-layer vector params
    for l, (inw, inb, outw, outb, l1w, l1b,
            f1w, f1b, f2w, f2b, l2w, l2b) in enumerate(params["layers"]):
        base = OFF_LAYER + 8 * l
        vec = vec.at[base + 0, 0:3 * D].set(inb[0])
        vec = vec.at[base + 1, 0:D].set(outb[0])
        vec = vec.at[base + 2, 0:D].set(l1w[0])
        vec = vec.at[base + 3, 0:D].set(l1b[0])
        vec = vec.at[base + 4, 0:DFF].set(f1b[0])
        vec = vec.at[base + 5, 0:D].set(f2b[0])
        vec = vec.at[base + 6, 0:D].set(l2w[0])
        vec = vec.at[base + 7, 0:D].set(l2b[0])

    # matrix weight slab: rows [wqkv^T | wo^T | w1^T | w2^T]
    w = jnp.zeros((NUM_LAYERS, W_ROWS, W_COLS), jnp.float32)
    for l, (inw, inb, outw, outb, l1w, l1b,
            f1w, f1b, f2w, f2b, l2w, l2b) in enumerate(params["layers"]):
        w = w.at[l, 0:D, 0:3 * D].set(inw.T)
        w = w.at[l, D:2 * D, 0:D].set(outw.T)
        w = w.at[l, 2 * D:3 * D, 0:DFF].set(f1w.T)
        w = w.at[l, 3 * D:3 * D + DFF, 0:D].set(f2w.T)

    return {"vec": vec, "w": w}


@jax.jit
def transformer_qnetwork_forward(src, vec_slab, w_slab):
    x_flat = src.reshape(M, F)
    out_pad = pl.pallas_call(
        fused_forward_kernel,
        out_shape=jax.ShapeDtypeStruct(OUT_PAD, jnp.float32),
        grid=(1,),
        in_specs=[_full((M, F)), _full((VEC_ROWS, 128)),
                  _full((NUM_LAYERS, W_ROWS, W_COLS))],
        out_specs=_full(OUT_PAD),
        compiler_params=pltpu.CompilerParams(dimension_semantics=("arbitrary",)),
    )(x_flat, vec_slab, w_slab)
    return out_pad[:B, :A]


# --------------------------- parameter construction ----------------------------
def make_positional_encoding(seq_len, d_model):
    pos = jnp.arange(seq_len, dtype=jnp.float32)[:, None]
    div = jnp.exp(jnp.arange(0, d_model, 2, dtype=jnp.float32)
                  * (-math.log(10000.0) / d_model))
    pe = jnp.zeros((seq_len, d_model), dtype=jnp.float32)
    pe = pe.at[:, 0::2].set(jnp.sin(pos * div))
    pe = pe.at[:, 1::2].set(jnp.cos(pos * div))
    return pe


def init_params(key):
    def lin(k, out_dim, in_dim):
        bound = 1.0 / math.sqrt(in_dim)
        kw, kb = jax.random.split(k)
        w = jax.random.uniform(kw, (out_dim, in_dim), jnp.float32, -bound, bound)
        b = jax.random.uniform(kb, (1, out_dim), jnp.float32, -bound, bound)
        return w, b

    keys = jax.random.split(key, 4 + NUM_LAYERS)
    wi, bi = lin(keys[0], D, F)
    wf, bf = lin(keys[1], A, D)
    layers = []
    for l in range(NUM_LAYERS):
        lk = jax.random.split(keys[2 + l], 4)
        inw, inb = lin(lk[0], 3 * D, D)
        outw, outb = lin(lk[1], D, D)
        ff1w, ff1b = lin(lk[2], DFF, D)
        ff2w, ff2b = lin(lk[3], D, DFF)
        ln1w = jnp.ones((1, D), jnp.float32); ln1b = jnp.zeros((1, D), jnp.float32)
        ln2w = jnp.ones((1, D), jnp.float32); ln2b = jnp.zeros((1, D), jnp.float32)
        layers.append((inw, inb, outw, outb, ln1w, ln1b,
                       ff1w, ff1b, ff2w, ff2b, ln2w, ln2b))
    return {"wi": wi, "bi": bi, "wf": wf, "bf": bf,
            "pe": make_positional_encoding(S, D), "layers": layers}


# ------------------------------ pure-JAX reference ------------------------------
def reference_forward(src, params):
    h = (src @ params["wi"].T + params["bi"]) * math.sqrt(D) + params["pe"]
    for (inw, inb, outw, outb, ln1w, ln1b,
         ff1w, ff1b, ff2w, ff2b, ln2w, ln2b) in params["layers"]:
        qkv = h @ inw.T + inb
        q, k, v = qkv[..., :D], qkv[..., D:2 * D], qkv[..., 2 * D:]
        qh = q.reshape(B, S, H, HD).transpose(0, 2, 1, 3)
        kh = k.reshape(B, S, H, HD).transpose(0, 2, 1, 3)
        vh = v.reshape(B, S, H, HD).transpose(0, 2, 1, 3)
        s = jnp.einsum("bhqd,bhkd->bhqk", qh, kh) / math.sqrt(HD)
        p = jax.nn.softmax(s, axis=-1)
        o = jnp.einsum("bhqk,bhkd->bhqd", p, vh).transpose(0, 2, 1, 3).reshape(B, S, D)
        o = o @ outw.T + outb

        def ln(x, w, b):
            mu = x.mean(-1, keepdims=True)
            var = ((x - mu) ** 2).mean(-1, keepdims=True)
            return (x - mu) / jnp.sqrt(var + LN_EPS) * w + b

        h = ln(h + o, ln1w, ln1b)
        f = jnp.maximum(h @ ff1w.T + ff1b, 0.0) @ ff2w.T + ff2b
        h = ln(h + f, ln2w, ln2b)
    return h[:, -1, :] @ params["wf"].T + params["bf"]


# ------------------------------------ main --------------------------------------
if __name__ == "__main__":
    key = jax.random.PRNGKey(0)
    k_src, k_param = jax.random.split(key)
    src = jax.random.normal(k_src, (B, S, F), dtype=jnp.float32)
    params = init_params(k_param)

    # One-time repack (outside the per-call hot path).
    packed = pack_kernel_params(params)
    packed = jax.tree_util.tree_map(jax.block_until_ready, packed)

    out = transformer_qnetwork_forward(src, packed["vec"], packed["w"])
    out = jax.block_until_ready(out)

    ref = reference_forward(src, params)
    assert out.shape == (B, A)
    # exact softmax divide; residual diff is only matmul accumulation order.
    assert jnp.allclose(out, ref, rtol=1e-3, atol=1e-3), "mismatch vs. JAX reference"

    # TODO(synk): training-mode dropout / Adam optimizer / MSE loss are not part
    # of the forward hot path and are intentionally not implemented in the kernel.
    print("KERNEL_OK")
</pallas_src>

<mosaic_0001>
module attributes {stable_mosaic.version = 11 : i64} {
  func.func @fused_forward_kernel(%arg0: i32, %arg1: memref<16x4xf32, #tpu.memory_space<vmem>>, %arg2: memref<104x128xf32, #tpu.memory_space<vmem>>, %arg3: memref<2x160x96xf32, #tpu.memory_space<vmem>>, %arg4: memref<8x128xf32, #tpu.memory_space<vmem>>) attributes {dimension_semantics = [#tpu.dimension_semantics<arbitrary>], iteration_bounds = array<i64: 1>, scalar_prefetch = 0 : i64, scratch_operands = 0 : i64, tpu.core_type = #tpu.core_type<tc>, window_params = [{pipeline_mode = #tpu.pipeline_mode<synchronous>, transform_indices = @transform_0, window_bounds = array<i64: 16, 4>}, {pipeline_mode = #tpu.pipeline_mode<synchronous>, transform_indices = @transform_1, window_bounds = array<i64: 104, 128>}, {pipeline_mode = #tpu.pipeline_mode<synchronous>, transform_indices = @transform_2, window_bounds = array<i64: 2, 160, 96>}, {pipeline_mode = #tpu.pipeline_mode<synchronous>, transform_indices = @transform_3, window_bounds = array<i64: 8, 128>}]} {
    %c0 = arith.constant 0 : index
    %c0_0 = arith.constant 0 : index
    %0 = vector.load %arg2[%c0, %c0_0] : memref<104x128xf32, #tpu.memory_space<vmem>>, vector<104x128xf32>
    %1 = vector.extract_strided_slice %0 {offsets = [0, 0], sizes = [4, 32], strides = [1, 1]} : vector<104x128xf32> to vector<4x32xf32>
    %2 = vector.extract_strided_slice %0 {offsets = [8, 0], sizes = [16, 32], strides = [1, 1]} : vector<104x128xf32> to vector<16x32xf32>
    %3 = vector.extract_strided_slice %0 {offsets = [24, 0], sizes = [16, 16], strides = [1, 1]} : vector<104x128xf32> to vector<16x16xf32>
    %4 = vector.extract_strided_slice %0 {offsets = [40, 0], sizes = [8, 16], strides = [1, 1]} : vector<104x128xf32> to vector<8x16xf32>
    %5 = vector.extract_strided_slice %0 {offsets = [48, 0], sizes = [32, 128], strides = [1, 1]} : vector<104x128xf32> to vector<32x128xf32>
    %6 = vector.extract_strided_slice %0 {offsets = [80, 0], sizes = [1, 128], strides = [1, 1]} : vector<104x128xf32> to vector<1x128xf32>
    %c0_1 = arith.constant 0 : index
    %c0_2 = arith.constant 0 : index
    %7 = vector.load %arg1[%c0_1, %c0_2] : memref<16x4xf32, #tpu.memory_space<vmem>>, vector<16x4xf32>
    %cst = arith.constant dense<0.000000e+00> : vector<16x32xf32>
    %8 = tpu.matmul %7, %1, %cst {dimension_numbers = #tpu.dot_dimension_numbers<[1], [0], [0], [1], [0, 0, 1, 1], [], []>} : vector<16x4xf32>, vector<4x32xf32>, vector<16x32xf32> -> vector<16x32xf32>
    %9 = arith.addf %8, %2 : vector<16x32xf32>
    %c0_3 = arith.constant 0 : index
    %c0_4 = arith.constant 0 : index
    %c0_5 = arith.constant 0 : index
    %10 = vector.load %arg3[%c0_3, %c0_4, %c0_5] : memref<2x160x96xf32, #tpu.memory_space<vmem>>, vector<1x160x96xf32>
    %11 = vector.shape_cast %10 : vector<1x160x96xf32> to vector<160x96xf32>
    %12 = vector.extract_strided_slice %11 {offsets = [0, 0], sizes = [32, 96], strides = [1, 1]} : vector<160x96xf32> to vector<32x96xf32>
    %13 = vector.extract_strided_slice %11 {offsets = [32, 0], sizes = [32, 32], strides = [1, 1]} : vector<160x96xf32> to vector<32x32xf32>
    %14 = vector.extract_strided_slice %11 {offsets = [64, 0], sizes = [32, 64], strides = [1, 1]} : vector<160x96xf32> to vector<32x64xf32>
    %15 = vector.extract_strided_slice %11 {offsets = [96, 0], sizes = [64, 32], strides = [1, 1]} : vector<160x96xf32> to vector<64x32xf32>
    %16 = vector.extract_strided_slice %0 {offsets = [88, 0], sizes = [1, 96], strides = [1, 1]} : vector<104x128xf32> to vector<1x96xf32>
    %17 = vector.extract_strided_slice %0 {offsets = [89, 0], sizes = [1, 32], strides = [1, 1]} : vector<104x128xf32> to vector<1x32xf32>
    %18 = vector.extract_strided_slice %0 {offsets = [90, 0], sizes = [1, 32], strides = [1, 1]} : vector<104x128xf32> to vector<1x32xf32>
    %19 = vector.extract_strided_slice %0 {offsets = [91, 0], sizes = [1, 32], strides = [1, 1]} : vector<104x128xf32> to vector<1x32xf32>
    %20 = vector.extract_strided_slice %0 {offsets = [92, 0], sizes = [1, 64], strides = [1, 1]} : vector<104x128xf32> to vector<1x64xf32>
    %21 = vector.extract_strided_slice %0 {offsets = [93, 0], sizes = [1, 32], strides = [1, 1]} : vector<104x128xf32> to vector<1x32xf32>
    %22 = vector.extract_strided_slice %0 {offsets = [94, 0], sizes = [1, 32], strides = [1, 1]} : vector<104x128xf32> to vector<1x32xf32>
    %23 = vector.extract_strided_slice %0 {offsets = [95, 0], sizes = [1, 32], strides = [1, 1]} : vector<104x128xf32> to vector<1x32xf32>
    %cst_6 = arith.constant dense<0.000000e+00> : vector<16x96xf32>
    %24 = tpu.matmul %9, %12, %cst_6 {dimension_numbers = #tpu.dot_dimension_numbers<[1], [0], [0], [1], [0, 0, 1, 1], [], []>} : vector<16x32xf32>, vector<32x96xf32>, vector<16x96xf32> -> vector<16x96xf32>
    %25 = vector.broadcast %16 : vector<1x96xf32> to vector<16x96xf32>
    %26 = arith.addf %24, %25 : vector<16x96xf32>
    %cst_7 = arith.constant 0.000000e+00 : f32
    %27 = vector.broadcast %cst_7 : f32 to vector<16x32xf32>
    %28 = vector.extract_strided_slice %26 {offsets = [0, 0], sizes = [16, 8], strides = [1, 1]} : vector<16x96xf32> to vector<16x8xf32>
    %29 = vector.extract_strided_slice %26 {offsets = [0, 32], sizes = [16, 8], strides = [1, 1]} : vector<16x96xf32> to vector<16x8xf32>
    %30 = vector.extract_strided_slice %26 {offsets = [0, 64], sizes = [16, 8], strides = [1, 1]} : vector<16x96xf32> to vector<16x8xf32>
    %cst_8 = arith.constant dense<0.000000e+00> : vector<16x16xf32>
    %31 = tpu.matmul %28, %29, %cst_8 {dimension_numbers = #tpu.dot_dimension_numbers<[1], [1], [0], [0], [0, 0, 1, 0], [], []>} : vector<16x8xf32>, vector<16x8xf32>, vector<16x16xf32> -> vector<16x16xf32>
    %cst_9 = arith.constant 0.353553385 : f32
    %32 = vector.broadcast %cst_9 : f32 to vector<16x16xf32>
    %33 = arith.mulf %31, %32 : vector<16x16xf32>
    %34 = arith.addf %33, %3 : vector<16x16xf32>
    %cst_10 = arith.constant dense<0xFF800000> : vector<16xf32>
    %35 = vector.multi_reduction <maximumf>, %34, %cst_10 [1] : vector<16x16xf32> to vector<16xf32>
    %36 = vector.shape_cast %35 : vector<16xf32> to vector<16x1xf32>
    %37 = vector.broadcast %36 : vector<16x1xf32> to vector<16x16xf32>
    %38 = arith.subf %34, %37 : vector<16x16xf32>
    %39 = math.exp %38 : vector<16x16xf32>
    %cst_11 = arith.constant dense<0.000000e+00> : vector<16xf32>
    %40 = vector.multi_reduction <add>, %39, %cst_11 [1] : vector<16x16xf32> to vector<16xf32>
    %41 = vector.shape_cast %40 : vector<16xf32> to vector<16x1xf32>
    %42 = vector.broadcast %41 : vector<16x1xf32> to vector<16x16xf32>
    %43 = arith.divf %39, %42 : vector<16x16xf32>
    %cst_12 = arith.constant dense<0.000000e+00> : vector<16x8xf32>
    %44 = tpu.matmul %43, %30, %cst_12 {dimension_numbers = #tpu.dot_dimension_numbers<[1], [0], [0], [1], [0, 0, 1, 1], [], []>} : vector<16x16xf32>, vector<16x8xf32>, vector<16x8xf32> -> vector<16x8xf32>
    %45 = vector.extract_strided_slice %13 {offsets = [0, 0], sizes = [8, 32], strides = [1, 1]} : vector<32x32xf32> to vector<8x32xf32>
    %cst_13 = arith.constant dense<0.000000e+00> : vector<16x32xf32>
    %46 = tpu.matmul %44, %45, %cst_13 {dimension_numbers = #tpu.dot_dimension_numbers<[1], [0], [0], [1], [0, 0, 1, 1], [], []>} : vector<16x8xf32>, vector<8x32xf32>, vector<16x32xf32> -> vector<16x32xf32>
    %47 = arith.addf %27, %46 : vector<16x32xf32>
    %48 = vector.extract_strided_slice %26 {offsets = [0, 8], sizes = [16, 8], strides = [1, 1]} : vector<16x96xf32> to vector<16x8xf32>
    %49 = vector.extract_strided_slice %26 {offsets = [0, 40], sizes = [16, 8], strides = [1, 1]} : vector<16x96xf32> to vector<16x8xf32>
    %50 = vector.extract_strided_slice %26 {offsets = [0, 72], sizes = [16, 8], strides = [1, 1]} : vector<16x96xf32> to vector<16x8xf32>
    %cst_14 = arith.constant dense<0.000000e+00> : vector<16x16xf32>
    %51 = tpu.matmul %48, %49, %cst_14 {dimension_numbers = #tpu.dot_dimension_numbers<[1], [1], [0], [0], [0, 0, 1, 0], [], []>} : vector<16x8xf32>, vector<16x8xf32>, vector<16x16xf32> -> vector<16x16xf32>
    %cst_15 = arith.constant 0.353553385 : f32
    %52 = vector.broadcast %cst_15 : f32 to vector<16x16xf32>
    %53 = arith.mulf %51, %52 : vector<16x16xf32>
    %54 = arith.addf %53, %3 : vector<16x16xf32>
    %cst_16 = arith.constant dense<0xFF800000> : vector<16xf32>
    %55 = vector.multi_reduction <maximumf>, %54, %cst_16 [1] : vector<16x16xf32> to vector<16xf32>
    %56 = vector.shape_cast %55 : vector<16xf32> to vector<16x1xf32>
    %57 = vector.broadcast %56 : vector<16x1xf32> to vector<16x16xf32>
    %58 = arith.subf %54, %57 : vector<16x16xf32>
    %59 = math.exp %58 : vector<16x16xf32>
    %cst_17 = arith.constant dense<0.000000e+00> : vector<16xf32>
    %60 = vector.multi_reduction <add>, %59, %cst_17 [1] : vector<16x16xf32> to vector<16xf32>
    %61 = vector.shape_cast %60 : vector<16xf32> to vector<16x1xf32>
    %62 = vector.broadcast %61 : vector<16x1xf32> to vector<16x16xf32>
    %63 = arith.divf %59, %62 : vector<16x16xf32>
    %cst_18 = arith.constant dense<0.000000e+00> : vector<16x8xf32>
    %64 = tpu.matmul %63, %50, %cst_18 {dimension_numbers = #tpu.dot_dimension_numbers<[1], [0], [0], [1], [0, 0, 1, 1], [], []>} : vector<16x16xf32>, vector<16x8xf32>, vector<16x8xf32> -> vector<16x8xf32>
    %65 = vector.extract_strided_slice %13 {offsets = [8, 0], sizes = [8, 32], strides = [1, 1]} : vector<32x32xf32> to vector<8x32xf32>
    %cst_19 = arith.constant dense<0.000000e+00> : vector<16x32xf32>
    %66 = tpu.matmul %64, %65, %cst_19 {dimension_numbers = #tpu.dot_dimension_numbers<[1], [0], [0], [1], [0, 0, 1, 1], [], []>} : vector<16x8xf32>, vector<8x32xf32>, vector<16x32xf32> -> vector<16x32xf32>
    %67 = arith.addf %47, %66 : vector<16x32xf32>
    %68 = vector.extract_strided_slice %26 {offsets = [0, 16], sizes = [16, 8], strides = [1, 1]} : vector<16x96xf32> to vector<16x8xf32>
    %69 = vector.extract_strided_slice %26 {offsets = [0, 48], sizes = [16, 8], strides = [1, 1]} : vector<16x96xf32> to vector<16x8xf32>
    %70 = vector.extract_strided_slice %26 {offsets = [0, 80], sizes = [16, 8], strides = [1, 1]} : vector<16x96xf32> to vector<16x8xf32>
    %cst_20 = arith.constant dense<0.000000e+00> : vector<16x16xf32>
    %71 = tpu.matmul %68, %69, %cst_20 {dimension_numbers = #tpu.dot_dimension_numbers<[1], [1], [0], [0], [0, 0, 1, 0], [], []>} : vector<16x8xf32>, vector<16x8xf32>, vector<16x16xf32> -> vector<16x16xf32>
    %cst_21 = arith.constant 0.353553385 : f32
    %72 = vector.broadcast %cst_21 : f32 to vector<16x16xf32>
    %73 = arith.mulf %71, %72 : vector<16x16xf32>
    %74 = arith.addf %73, %3 : vector<16x16xf32>
    %cst_22 = arith.constant dense<0xFF800000> : vector<16xf32>
    %75 = vector.multi_reduction <maximumf>, %74, %cst_22 [1] : vector<16x16xf32> to vector<16xf32>
    %76 = vector.shape_cast %75 : vector<16xf32> to vector<16x1xf32>
    %77 = vector.broadcast %76 : vector<16x1xf32> to vector<16x16xf32>
    %78 = arith.subf %74, %77 : vector<16x16xf32>
    %79 = math.exp %78 : vector<16x16xf32>
    %cst_23 = arith.constant dense<0.000000e+00> : vector<16xf32>
    %80 = vector.multi_reduction <add>, %79, %cst_23 [1] : vector<16x16xf32> to vector<16xf32>
    %81 = vector.shape_cast %80 : vector<16xf32> to vector<16x1xf32>
    %82 = vector.broadcast %81 : vector<16x1xf32> to vector<16x16xf32>
    %83 = arith.divf %79, %82 : vector<16x16xf32>
    %cst_24 = arith.constant dense<0.000000e+00> : vector<16x8xf32>
    %84 = tpu.matmul %83, %70, %cst_24 {dimension_numbers = #tpu.dot_dimension_numbers<[1], [0], [0], [1], [0, 0, 1, 1], [], []>} : vector<16x16xf32>, vector<16x8xf32>, vector<16x8xf32> -> vector<16x8xf32>
    %85 = vector.extract_strided_slice %13 {offsets = [16, 0], sizes = [8, 32], strides = [1, 1]} : vector<32x32xf32> to vector<8x32xf32>
    %cst_25 = arith.constant dense<0.000000e+00> : vector<16x32xf32>
    %86 = tpu.matmul %84, %85, %cst_25 {dimension_numbers = #tpu.dot_dimension_numbers<[1], [0], [0], [1], [0, 0, 1, 1], [], []>} : vector<16x8xf32>, vector<8x32xf32>, vector<16x32xf32> -> vector<16x32xf32>
    %87 = arith.addf %67, %86 : vector<16x32xf32>
    %88 = vector.extract_strided_slice %26 {offsets = [0, 24], sizes = [16, 8], strides = [1, 1]} : vector<16x96xf32> to vector<16x8xf32>
    %89 = vector.extract_strided_slice %26 {offsets = [0, 56], sizes = [16, 8], strides = [1, 1]} : vector<16x96xf32> to vector<16x8xf32>
    %90 = vector.extract_strided_slice %26 {offsets = [0, 88], sizes = [16, 8], strides = [1, 1]} : vector<16x96xf32> to vector<16x8xf32>
    %cst_26 = arith.constant dense<0.000000e+00> : vector<16x16xf32>
    %91 = tpu.matmul %88, %89, %cst_26 {dimension_numbers = #tpu.dot_dimension_numbers<[1], [1], [0], [0], [0, 0, 1, 0], [], []>} : vector<16x8xf32>, vector<16x8xf32>, vector<16x16xf32> -> vector<16x16xf32>
    %cst_27 = arith.constant 0.353553385 : f32
    %92 = vector.broadcast %cst_27 : f32 to vector<16x16xf32>
    %93 = arith.mulf %91, %92 : vector<16x16xf32>
    %94 = arith.addf %93, %3 : vector<16x16xf32>
    %cst_28 = arith.constant dense<0xFF800000> : vector<16xf32>
    %95 = vector.multi_reduction <maximumf>, %94, %cst_28 [1] : vector<16x16xf32> to vector<16xf32>
    %96 = vector.shape_cast %95 : vector<16xf32> to vector<16x1xf32>
    %97 = vector.broadcast %96 : vector<16x1xf32> to vector<16x16xf32>
    %98 = arith.subf %94, %97 : vector<16x16xf32>
    %99 = math.exp %98 : vector<16x16xf32>
    %cst_29 = arith.constant dense<0.000000e+00> : vector<16xf32>
    %100 = vector.multi_reduction <add>, %99, %cst_29 [1] : vector<16x16xf32> to vector<16xf32>
    %101 = vector.shape_cast %100 : vector<16xf32> to vector<16x1xf32>
    %102 = vector.broadcast %101 : vector<16x1xf32> to vector<16x16xf32>
    %103 = arith.divf %99, %102 : vector<16x16xf32>
    %cst_30 = arith.constant dense<0.000000e+00> : vector<16x8xf32>
    %104 = tpu.matmul %103, %90, %cst_30 {dimension_numbers = #tpu.dot_dimension_numbers<[1], [0], [0], [1], [0, 0, 1, 1], [], []>} : vector<16x16xf32>, vector<16x8xf32>, vector<16x8xf32> -> vector<16x8xf32>
    %105 = vector.extract_strided_slice %13 {offsets = [24, 0], sizes = [8, 32], strides = [1, 1]} : vector<32x32xf32> to vector<8x32xf32>
    %cst_31 = arith.constant dense<0.000000e+00> : vector<16x32xf32>
    %106 = tpu.matmul %104, %105, %cst_31 {dimension_numbers = #tpu.dot_dimension_numbers<[1], [0], [0], [1], [0, 0, 1, 1], [], []>} : vector<16x8xf32>, vector<8x32xf32>, vector<16x32xf32> -> vector<16x32xf32>
    %107 = arith.addf %87, %106 : vector<16x32xf32>
    %108 = vector.broadcast %17 : vector<1x32xf32> to vector<16x32xf32>
    %109 = arith.addf %107, %108 : vector<16x32xf32>
    %110 = arith.addf %9, %109 : vector<16x32xf32>
    %cst_32 = arith.constant dense<0.000000e+00> : vector<16xf32>
    %111 = vector.multi_reduction <add>, %110, %cst_32 [1] : vector<16x32xf32> to vector<16xf32>
    %112 = vector.shape_cast %111 : vector<16xf32> to vector<16x1xf32>
    %cst_33 = arith.constant 3.200000e+01 : f32
    %113 = vector.broadcast %cst_33 : f32 to vector<16x1xf32>
    %114 = arith.divf %112, %113 : vector<16x1xf32>
    %115 = vector.broadcast %114 : vector<16x1xf32> to vector<16x32xf32>
    %116 = arith.subf %110, %115 : vector<16x32xf32>
    %117 = vector.broadcast %114 : vector<16x1xf32> to vector<16x32xf32>
    %118 = arith.subf %110, %117 : vector<16x32xf32>
    %119 = arith.mulf %116, %118 : vector<16x32xf32>
    %cst_34 = arith.constant dense<0.000000e+00> : vector<16xf32>
    %120 = vector.multi_reduction <add>, %119, %cst_34 [1] : vector<16x32xf32> to vector<16xf32>
    %121 = vector.shape_cast %120 : vector<16xf32> to vector<16x1xf32>
    %cst_35 = arith.constant 3.200000e+01 : f32
    %122 = vector.broadcast %cst_35 : f32 to vector<16x1xf32>
    %123 = arith.divf %121, %122 : vector<16x1xf32>
    %124 = vector.broadcast %114 : vector<16x1xf32> to vector<16x32xf32>
    %125 = arith.subf %110, %124 : vector<16x32xf32>
    %cst_36 = arith.constant 9.99999974E-6 : f32
    %126 = vector.broadcast %cst_36 : f32 to vector<16x1xf32>
    %127 = arith.addf %123, %126 : vector<16x1xf32>
    %128 = math.rsqrt %127 : vector<16x1xf32>
    %129 = vector.broadcast %128 : vector<16x1xf32> to vector<16x32xf32>
    %130 = arith.mulf %125, %129 : vector<16x32xf32>
    %131 = vector.broadcast %18 : vector<1x32xf32> to vector<16x32xf32>
    %132 = arith.mulf %130, %131 : vector<16x32xf32>
    %133 = vector.broadcast %19 : vector<1x32xf32> to vector<16x32xf32>
    %134 = arith.addf %132, %133 : vector<16x32xf32>
    %cst_37 = arith.constant dense<0.000000e+00> : vector<16x64xf32>
    %135 = tpu.matmul %134, %14, %cst_37 {dimension_numbers = #tpu.dot_dimension_numbers<[1], [0], [0], [1], [0, 0, 1, 1], [], []>} : vector<16x32xf32>, vector<32x64xf32>, vector<16x64xf32> -> vector<16x64xf32>
    %136 = vector.broadcast %20 : vector<1x64xf32> to vector<16x64xf32>
    %137 = arith.addf %135, %136 : vector<16x64xf32>
    %cst_38 = arith.constant 0.000000e+00 : f32
    %138 = vector.broadcast %cst_38 : f32 to vector<16x64xf32>
    %139 = arith.maximumf %137, %138 : vector<16x64xf32>
    %cst_39 = arith.constant dense<0.000000e+00> : vector<16x32xf32>
    %140 = tpu.matmul %139, %15, %cst_39 {dimension_numbers = #tpu.dot_dimension_numbers<[1], [0], [0], [1], [0, 0, 1, 1], [], []>} : vector<16x64xf32>, vector<64x32xf32>, vector<16x32xf32> -> vector<16x32xf32>
    %141 = vector.broadcast %21 : vector<1x32xf32> to vector<16x32xf32>
    %142 = arith.addf %140, %141 : vector<16x32xf32>
    %143 = arith.addf %134, %142 : vector<16x32xf32>
    %cst_40 = arith.constant dense<0.000000e+00> : vector<16xf32>
    %144 = vector.multi_reduction <add>, %143, %cst_40 [1] : vector<16x32xf32> to vector<16xf32>
    %145 = vector.shape_cast %144 : vector<16xf32> to vector<16x1xf32>
    %cst_41 = arith.constant 3.200000e+01 : f32
    %146 = vector.broadcast %cst_41 : f32 to vector<16x1xf32>
    %147 = arith.divf %145, %146 : vector<16x1xf32>
    %148 = vector.broadcast %147 : vector<16x1xf32> to vector<16x32xf32>
    %149 = arith.subf %143, %148 : vector<16x32xf32>
    %150 = vector.broadcast %147 : vector<16x1xf32> to vector<16x32xf32>
    %151 = arith.subf %143, %150 : vector<16x32xf32>
    %152 = arith.mulf %149, %151 : vector<16x32xf32>
    %cst_42 = arith.constant dense<0.000000e+00> : vector<16xf32>
    %153 = vector.multi_reduction <add>, %152, %cst_42 [1] : vector<16x32xf32> to vector<16xf32>
    %154 = vector.shape_cast %153 : vector<16xf32> to vector<16x1xf32>
    %cst_43 = arith.constant 3.200000e+01 : f32
    %155 = vector.broadcast %cst_43 : f32 to vector<16x1xf32>
    %156 = arith.divf %154, %155 : vector<16x1xf32>
    %157 = vector.broadcast %147 : vector<16x1xf32> to vector<16x32xf32>
    %158 = arith.subf %143, %157 : vector<16x32xf32>
    %cst_44 = arith.constant 9.99999974E-6 : f32
    %159 = vector.broadcast %cst_44 : f32 to vector<16x1xf32>
    %160 = arith.addf %156, %159 : vector<16x1xf32>
    %161 = math.rsqrt %160 : vector<16x1xf32>
    %162 = vector.broadcast %161 : vector<16x1xf32> to vector<16x32xf32>
    %163 = arith.mulf %158, %162 : vector<16x32xf32>
    %164 = vector.broadcast %22 : vector<1x32xf32> to vector<16x32xf32>
    %165 = arith.mulf %163, %164 : vector<16x32xf32>
    %166 = vector.broadcast %23 : vector<1x32xf32> to vector<16x32xf32>
    %167 = arith.addf %165, %166 : vector<16x32xf32>
    %c1 = arith.constant 1 : index
    %c0_45 = arith.constant 0 : index
    %c0_46 = arith.constant 0 : index
    %168 = vector.load %arg3[%c1, %c0_45, %c0_46] : memref<2x160x96xf32, #tpu.memory_space<vmem>>, vector<1x160x96xf32>
    %169 = vector.shape_cast %168 : vector<1x160x96xf32> to vector<160x96xf32>
    %170 = vector.extract_strided_slice %169 {offsets = [0, 0], sizes = [32, 96], strides = [1, 1]} : vector<160x96xf32> to vector<32x96xf32>
    %171 = vector.extract_strided_slice %169 {offsets = [32, 0], sizes = [32, 32], strides = [1, 1]} : vector<160x96xf32> to vector<32x32xf32>
    %172 = vector.extract_strided_slice %169 {offsets = [64, 0], sizes = [32, 64], strides = [1, 1]} : vector<160x96xf32> to vector<32x64xf32>
    %173 = vector.extract_strided_slice %169 {offsets = [96, 0], sizes = [64, 32], strides = [1, 1]} : vector<160x96xf32> to vector<64x32xf32>
    %174 = vector.extract_strided_slice %0 {offsets = [96, 0], sizes = [1, 96], strides = [1, 1]} : vector<104x128xf32> to vector<1x96xf32>
    %175 = vector.extract_strided_slice %0 {offsets = [97, 0], sizes = [1, 32], strides = [1, 1]} : vector<104x128xf32> to vector<1x32xf32>
    %176 = vector.extract_strided_slice %0 {offsets = [98, 0], sizes = [1, 32], strides = [1, 1]} : vector<104x128xf32> to vector<1x32xf32>
    %177 = vector.extract_strided_slice %0 {offsets = [99, 0], sizes = [1, 32], strides = [1, 1]} : vector<104x128xf32> to vector<1x32xf32>
    %178 = vector.extract_strided_slice %0 {offsets = [100, 0], sizes = [1, 64], strides = [1, 1]} : vector<104x128xf32> to vector<1x64xf32>
    %179 = vector.extract_strided_slice %0 {offsets = [101, 0], sizes = [1, 32], strides = [1, 1]} : vector<104x128xf32> to vector<1x32xf32>
    %180 = vector.extract_strided_slice %0 {offsets = [102, 0], sizes = [1, 32], strides = [1, 1]} : vector<104x128xf32> to vector<1x32xf32>
    %181 = vector.extract_strided_slice %0 {offsets = [103, 0], sizes = [1, 32], strides = [1, 1]} : vector<104x128xf32> to vector<1x32xf32>
    %cst_47 = arith.constant dense<0.000000e+00> : vector<16x96xf32>
    %182 = tpu.matmul %167, %170, %cst_47 {dimension_numbers = #tpu.dot_dimension_numbers<[1], [0], [0], [1], [0, 0, 1, 1], [], []>} : vector<16x32xf32>, vector<32x96xf32>, vector<16x96xf32> -> vector<16x96xf32>
    %183 = vector.broadcast %174 : vector<1x96xf32> to vector<16x96xf32>
    %184 = arith.addf %182, %183 : vector<16x96xf32>
    %cst_48 = arith.constant 0.000000e+00 : f32
    %185 = vector.broadcast %cst_48 : f32 to vector<16x32xf32>
    %186 = vector.extract_strided_slice %184 {offsets = [0, 0], sizes = [16, 8], strides = [1, 1]} : vector<16x96xf32> to vector<16x8xf32>
    %187 = vector.extract_strided_slice %184 {offsets = [0, 32], sizes = [16, 8], strides = [1, 1]} : vector<16x96xf32> to vector<16x8xf32>
    %188 = vector.extract_strided_slice %184 {offsets = [0, 64], sizes = [16, 8], strides = [1, 1]} : vector<16x96xf32> to vector<16x8xf32>
    %cst_49 = arith.constant dense<0.000000e+00> : vector<16x16xf32>
    %189 = tpu.matmul %186, %187, %cst_49 {dimension_numbers = #tpu.dot_dimension_numbers<[1], [1], [0], [0], [0, 0, 1, 0], [], []>} : vector<16x8xf32>, vector<16x8xf32>, vector<16x16xf32> -> vector<16x16xf32>
    %cst_50 = arith.constant 0.353553385 : f32
    %190 = vector.broadcast %cst_50 : f32 to vector<16x16xf32>
    %191 = arith.mulf %189, %190 : vector<16x16xf32>
    %192 = arith.addf %191, %3 : vector<16x16xf32>
    %cst_51 = arith.constant dense<0xFF800000> : vector<16xf32>
    %193 = vector.multi_reduction <maximumf>, %192, %cst_51 [1] : vector<16x16xf32> to vector<16xf32>
    %194 = vector.shape_cast %193 : vector<16xf32> to vector<16x1xf32>
    %195 = vector.broadcast %194 : vector<16x1xf32> to vector<16x16xf32>
    %196 = arith.subf %192, %195 : vector<16x16xf32>
    %197 = math.exp %196 : vector<16x16xf32>
    %cst_52 = arith.constant dense<0.000000e+00> : vector<16xf32>
    %198 = vector.multi_reduction <add>, %197, %cst_52 [1] : vector<16x16xf32> to vector<16xf32>
    %199 = vector.shape_cast %198 : vector<16xf32> to vector<16x1xf32>
    %200 = vector.broadcast %199 : vector<16x1xf32> to vector<16x16xf32>
    %201 = arith.divf %197, %200 : vector<16x16xf32>
    %cst_53 = arith.constant dense<0.000000e+00> : vector<16x8xf32>
    %202 = tpu.matmul %201, %188, %cst_53 {dimension_numbers = #tpu.dot_dimension_numbers<[1], [0], [0], [1], [0, 0, 1, 1], [], []>} : vector<16x16xf32>, vector<16x8xf32>, vector<16x8xf32> -> vector<16x8xf32>
    %203 = vector.extract_strided_slice %171 {offsets = [0, 0], sizes = [8, 32], strides = [1, 1]} : vector<32x32xf32> to vector<8x32xf32>
    %cst_54 = arith.constant dense<0.000000e+00> : vector<16x32xf32>
    %204 = tpu.matmul %202, %203, %cst_54 {dimension_numbers = #tpu.dot_dimension_numbers<[1], [0], [0], [1], [0, 0, 1, 1], [], []>} : vector<16x8xf32>, vector<8x32xf32>, vector<16x32xf32> -> vector<16x32xf32>
    %205 = arith.addf %185, %204 : vector<16x32xf32>
    %206 = vector.extract_strided_slice %184 {offsets = [0, 8], sizes = [16, 8], strides = [1, 1]} : vector<16x96xf32> to vector<16x8xf32>
    %207 = vector.extract_strided_slice %184 {offsets = [0, 40], sizes = [16, 8], strides = [1, 1]} : vector<16x96xf32> to vector<16x8xf32>
    %208 = vector.extract_strided_slice %184 {offsets = [0, 72], sizes = [16, 8], strides = [1, 1]} : vector<16x96xf32> to vector<16x8xf32>
    %cst_55 = arith.constant dense<0.000000e+00> : vector<16x16xf32>
    %209 = tpu.matmul %206, %207, %cst_55 {dimension_numbers = #tpu.dot_dimension_numbers<[1], [1], [0], [0], [0, 0, 1, 0], [], []>} : vector<16x8xf32>, vector<16x8xf32>, vector<16x16xf32> -> vector<16x16xf32>
    %cst_56 = arith.constant 0.353553385 : f32
    %210 = vector.broadcast %cst_56 : f32 to vector<16x16xf32>
    %211 = arith.mulf %209, %210 : vector<16x16xf32>
    %212 = arith.addf %211, %3 : vector<16x16xf32>
    %cst_57 = arith.constant dense<0xFF800000> : vector<16xf32>
    %213 = vector.multi_reduction <maximumf>, %212, %cst_57 [1] : vector<16x16xf32> to vector<16xf32>
    %214 = vector.shape_cast %213 : vector<16xf32> to vector<16x1xf32>
    %215 = vector.broadcast %214 : vector<16x1xf32> to vector<16x16xf32>
    %216 = arith.subf %212, %215 : vector<16x16xf32>
    %217 = math.exp %216 : vector<16x16xf32>
    %cst_58 = arith.constant dense<0.000000e+00> : vector<16xf32>
    %218 = vector.multi_reduction <add>, %217, %cst_58 [1] : vector<16x16xf32> to vector<16xf32>
    %219 = vector.shape_cast %218 : vector<16xf32> to vector<16x1xf32>
    %220 = vector.broadcast %219 : vector<16x1xf32> to vector<16x16xf32>
    %221 = arith.divf %217, %220 : vector<16x16xf32>
    %cst_59 = arith.constant dense<0.000000e+00> : vector<16x8xf32>
    %222 = tpu.matmul %221, %208, %cst_59 {dimension_numbers = #tpu.dot_dimension_numbers<[1], [0], [0], [1], [0, 0, 1, 1], [], []>} : vector<16x16xf32>, vector<16x8xf32>, vector<16x8xf32> -> vector<16x8xf32>
    %223 = vector.extract_strided_slice %171 {offsets = [8, 0], sizes = [8, 32], strides = [1, 1]} : vector<32x32xf32> to vector<8x32xf32>
    %cst_60 = arith.constant dense<0.000000e+00> : vector<16x32xf32>
    %224 = tpu.matmul %222, %223, %cst_60 {dimension_numbers = #tpu.dot_dimension_numbers<[1], [0], [0], [1], [0, 0, 1, 1], [], []>} : vector<16x8xf32>, vector<8x32xf32>, vector<16x32xf32> -> vector<16x32xf32>
    %225 = arith.addf %205, %224 : vector<16x32xf32>
    %226 = vector.extract_strided_slice %184 {offsets = [0, 16], sizes = [16, 8], strides = [1, 1]} : vector<16x96xf32> to vector<16x8xf32>
    %227 = vector.extract_strided_slice %184 {offsets = [0, 48], sizes = [16, 8], strides = [1, 1]} : vector<16x96xf32> to vector<16x8xf32>
    %228 = vector.extract_strided_slice %184 {offsets = [0, 80], sizes = [16, 8], strides = [1, 1]} : vector<16x96xf32> to vector<16x8xf32>
    %cst_61 = arith.constant dense<0.000000e+00> : vector<16x16xf32>
    %229 = tpu.matmul %226, %227, %cst_61 {dimension_numbers = #tpu.dot_dimension_numbers<[1], [1], [0], [0], [0, 0, 1, 0], [], []>} : vector<16x8xf32>, vector<16x8xf32>, vector<16x16xf32> -> vector<16x16xf32>
    %cst_62 = arith.constant 0.353553385 : f32
    %230 = vector.broadcast %cst_62 : f32 to vector<16x16xf32>
    %231 = arith.mulf %229, %230 : vector<16x16xf32>
    %232 = arith.addf %231, %3 : vector<16x16xf32>
    %cst_63 = arith.constant dense<0xFF800000> : vector<16xf32>
    %233 = vector.multi_reduction <maximumf>, %232, %cst_63 [1] : vector<16x16xf32> to vector<16xf32>
    %234 = vector.shape_cast %233 : vector<16xf32> to vector<16x1xf32>
    %235 = vector.broadcast %234 : vector<16x1xf32> to vector<16x16xf32>
    %236 = arith.subf %232, %235 : vector<16x16xf32>
    %237 = math.exp %236 : vector<16x16xf32>
    %cst_64 = arith.constant dense<0.000000e+00> : vector<16xf32>
    %238 = vector.multi_reduction <add>, %237, %cst_64 [1] : vector<16x16xf32> to vector<16xf32>
    %239 = vector.shape_cast %238 : vector<16xf32> to vector<16x1xf32>
    %240 = vector.broadcast %239 : vector<16x1xf32> to vector<16x16xf32>
    %241 = arith.divf %237, %240 : vector<16x16xf32>
    %cst_65 = arith.constant dense<0.000000e+00> : vector<16x8xf32>
    %242 = tpu.matmul %241, %228, %cst_65 {dimension_numbers = #tpu.dot_dimension_numbers<[1], [0], [0], [1], [0, 0, 1, 1], [], []>} : vector<16x16xf32>, vector<16x8xf32>, vector<16x8xf32> -> vector<16x8xf32>
    %243 = vector.extract_strided_slice %171 {offsets = [16, 0], sizes = [8, 32], strides = [1, 1]} : vector<32x32xf32> to vector<8x32xf32>
    %cst_66 = arith.constant dense<0.000000e+00> : vector<16x32xf32>
    %244 = tpu.matmul %242, %243, %cst_66 {dimension_numbers = #tpu.dot_dimension_numbers<[1], [0], [0], [1], [0, 0, 1, 1], [], []>} : vector<16x8xf32>, vector<8x32xf32>, vector<16x32xf32> -> vector<16x32xf32>
    %245 = arith.addf %225, %244 : vector<16x32xf32>
    %246 = vector.extract_strided_slice %184 {offsets = [0, 24], sizes = [16, 8], strides = [1, 1]} : vector<16x96xf32> to vector<16x8xf32>
    %247 = vector.extract_strided_slice %184 {offsets = [0, 56], sizes = [16, 8], strides = [1, 1]} : vector<16x96xf32> to vector<16x8xf32>
    %248 = vector.extract_strided_slice %184 {offsets = [0, 88], sizes = [16, 8], strides = [1, 1]} : vector<16x96xf32> to vector<16x8xf32>
    %cst_67 = arith.constant dense<0.000000e+00> : vector<16x16xf32>
    %249 = tpu.matmul %246, %247, %cst_67 {dimension_numbers = #tpu.dot_dimension_numbers<[1], [1], [0], [0], [0, 0, 1, 0], [], []>} : vector<16x8xf32>, vector<16x8xf32>, vector<16x16xf32> -> vector<16x16xf32>
    %cst_68 = arith.constant 0.353553385 : f32
    %250 = vector.broadcast %cst_68 : f32 to vector<16x16xf32>
    %251 = arith.mulf %249, %250 : vector<16x16xf32>
    %252 = arith.addf %251, %3 : vector<16x16xf32>
    %cst_69 = arith.constant dense<0xFF800000> : vector<16xf32>
    %253 = vector.multi_reduction <maximumf>, %252, %cst_69 [1] : vector<16x16xf32> to vector<16xf32>
    %254 = vector.shape_cast %253 : vector<16xf32> to vector<16x1xf32>
    %255 = vector.broadcast %254 : vector<16x1xf32> to vector<16x16xf32>
    %256 = arith.subf %252, %255 : vector<16x16xf32>
    %257 = math.exp %256 : vector<16x16xf32>
    %cst_70 = arith.constant dense<0.000000e+00> : vector<16xf32>
    %258 = vector.multi_reduction <add>, %257, %cst_70 [1] : vector<16x16xf32> to vector<16xf32>
    %259 = vector.shape_cast %258 : vector<16xf32> to vector<16x1xf32>
    %260 = vector.broadcast %259 : vector<16x1xf32> to vector<16x16xf32>
    %261 = arith.divf %257, %260 : vector<16x16xf32>
    %cst_71 = arith.constant dense<0.000000e+00> : vector<16x8xf32>
    %262 = tpu.matmul %261, %248, %cst_71 {dimension_numbers = #tpu.dot_dimension_numbers<[1], [0], [0], [1], [0, 0, 1, 1], [], []>} : vector<16x16xf32>, vector<16x8xf32>, vector<16x8xf32> -> vector<16x8xf32>
    %263 = vector.extract_strided_slice %171 {offsets = [24, 0], sizes = [8, 32], strides = [1, 1]} : vector<32x32xf32> to vector<8x32xf32>
    %cst_72 = arith.constant dense<0.000000e+00> : vector<16x32xf32>
    %264 = tpu.matmul %262, %263, %cst_72 {dimension_numbers = #tpu.dot_dimension_numbers<[1], [0], [0], [1], [0, 0, 1, 1], [], []>} : vector<16x8xf32>, vector<8x32xf32>, vector<16x32xf32> -> vector<16x32xf32>
    %265 = arith.addf %245, %264 : vector<16x32xf32>
    %266 = vector.broadcast %175 : vector<1x32xf32> to vector<16x32xf32>
    %267 = arith.addf %265, %266 : vector<16x32xf32>
    %268 = arith.addf %167, %267 : vector<16x32xf32>
    %cst_73 = arith.constant dense<0.000000e+00> : vector<16xf32>
    %269 = vector.multi_reduction <add>, %268, %cst_73 [1] : vector<16x32xf32> to vector<16xf32>
    %270 = vector.shape_cast %269 : vector<16xf32> to vector<16x1xf32>
    %cst_74 = arith.constant 3.200000e+01 : f32
    %271 = vector.broadcast %cst_74 : f32 to vector<16x1xf32>
    %272 = arith.divf %270, %271 : vector<16x1xf32>
    %273 = vector.broadcast %272 : vector<16x1xf32> to vector<16x32xf32>
    %274 = arith.subf %268, %273 : vector<16x32xf32>
    %275 = vector.broadcast %272 : vector<16x1xf32> to vector<16x32xf32>
    %276 = arith.subf %268, %275 : vector<16x32xf32>
    %277 = arith.mulf %274, %276 : vector<16x32xf32>
    %cst_75 = arith.constant dense<0.000000e+00> : vector<16xf32>
    %278 = vector.multi_reduction <add>, %277, %cst_75 [1] : vector<16x32xf32> to vector<16xf32>
    %279 = vector.shape_cast %278 : vector<16xf32> to vector<16x1xf32>
    %cst_76 = arith.constant 3.200000e+01 : f32
    %280 = vector.broadcast %cst_76 : f32 to vector<16x1xf32>
    %281 = arith.divf %279, %280 : vector<16x1xf32>
    %282 = vector.broadcast %272 : vector<16x1xf32> to vector<16x32xf32>
    %283 = arith.subf %268, %282 : vector<16x32xf32>
    %cst_77 = arith.constant 9.99999974E-6 : f32
    %284 = vector.broadcast %cst_77 : f32 to vector<16x1xf32>
    %285 = arith.addf %281, %284 : vector<16x1xf32>
    %286 = math.rsqrt %285 : vector<16x1xf32>
    %287 = vector.broadcast %286 : vector<16x1xf32> to vector<16x32xf32>
    %288 = arith.mulf %283, %287 : vector<16x32xf32>
    %289 = vector.broadcast %176 : vector<1x32xf32> to vector<16x32xf32>
    %290 = arith.mulf %288, %289 : vector<16x32xf32>
    %291 = vector.broadcast %177 : vector<1x32xf32> to vector<16x32xf32>
    %292 = arith.addf %290, %291 : vector<16x32xf32>
    %cst_78 = arith.constant dense<0.000000e+00> : vector<16x64xf32>
    %293 = tpu.matmul %292, %172, %cst_78 {dimension_numbers = #tpu.dot_dimension_numbers<[1], [0], [0], [1], [0, 0, 1, 1], [], []>} : vector<16x32xf32>, vector<32x64xf32>, vector<16x64xf32> -> vector<16x64xf32>
    %294 = vector.broadcast %178 : vector<1x64xf32> to vector<16x64xf32>
    %295 = arith.addf %293, %294 : vector<16x64xf32>
    %cst_79 = arith.constant 0.000000e+00 : f32
    %296 = vector.broadcast %cst_79 : f32 to vector<16x64xf32>
    %297 = arith.maximumf %295, %296 : vector<16x64xf32>
    %cst_80 = arith.constant dense<0.000000e+00> : vector<16x32xf32>
    %298 = tpu.matmul %297, %173, %cst_80 {dimension_numbers = #tpu.dot_dimension_numbers<[1], [0], [0], [1], [0, 0, 1, 1], [], []>} : vector<16x64xf32>, vector<64x32xf32>, vector<16x32xf32> -> vector<16x32xf32>
    %299 = vector.broadcast %179 : vector<1x32xf32> to vector<16x32xf32>
    %300 = arith.addf %298, %299 : vector<16x32xf32>
    %301 = arith.addf %292, %300 : vector<16x32xf32>
    %cst_81 = arith.constant dense<0.000000e+00> : vector<16xf32>
    %302 = vector.multi_reduction <add>, %301, %cst_81 [1] : vector<16x32xf32> to vector<16xf32>
    %303 = vector.shape_cast %302 : vector<16xf32> to vector<16x1xf32>
    %cst_82 = arith.constant 3.200000e+01 : f32
    %304 = vector.broadcast %cst_82 : f32 to vector<16x1xf32>
    %305 = arith.divf %303, %304 : vector<16x1xf32>
    %306 = vector.broadcast %305 : vector<16x1xf32> to vector<16x32xf32>
    %307 = arith.subf %301, %306 : vector<16x32xf32>
    %308 = vector.broadcast %305 : vector<16x1xf32> to vector<16x32xf32>
    %309 = arith.subf %301, %308 : vector<16x32xf32>
    %310 = arith.mulf %307, %309 : vector<16x32xf32>
    %cst_83 = arith.constant dense<0.000000e+00> : vector<16xf32>
    %311 = vector.multi_reduction <add>, %310, %cst_83 [1] : vector<16x32xf32> to vector<16xf32>
    %312 = vector.shape_cast %311 : vector<16xf32> to vector<16x1xf32>
    %cst_84 = arith.constant 3.200000e+01 : f32
    %313 = vector.broadcast %cst_84 : f32 to vector<16x1xf32>
    %314 = arith.divf %312, %313 : vector<16x1xf32>
    %315 = vector.broadcast %305 : vector<16x1xf32> to vector<16x32xf32>
    %316 = arith.subf %301, %315 : vector<16x32xf32>
    %cst_85 = arith.constant 9.99999974E-6 : f32
    %317 = vector.broadcast %cst_85 : f32 to vector<16x1xf32>
    %318 = arith.addf %314, %317 : vector<16x1xf32>
    %319 = math.rsqrt %318 : vector<16x1xf32>
    %320 = vector.broadcast %319 : vector<16x1xf32> to vector<16x32xf32>
    %321 = arith.mulf %316, %320 : vector<16x32xf32>
    %322 = vector.broadcast %180 : vector<1x32xf32> to vector<16x32xf32>
    %323 = arith.mulf %321, %322 : vector<16x32xf32>
    %324 = vector.broadcast %181 : vector<1x32xf32> to vector<16x32xf32>
    %325 = arith.addf %323, %324 : vector<16x32xf32>
    %cst_86 = arith.constant dense<0.000000e+00> : vector<8x32xf32>
    %326 = tpu.matmul %4, %325, %cst_86 {dimension_numbers = #tpu.dot_dimension_numbers<[1], [0], [0], [1], [0, 0, 1, 1], [], []>} : vector<8x16xf32>, vector<16x32xf32>, vector<8x32xf32> -> vector<8x32xf32>
    %cst_87 = arith.constant dense<0.000000e+00> : vector<8x128xf32>
    %327 = tpu.matmul %326, %5, %cst_87 {dimension_numbers = #tpu.dot_dimension_numbers<[1], [0], [0], [1], [0, 0, 1, 1], [], []>} : vector<8x32xf32>, vector<32x128xf32>, vector<8x128xf32> -> vector<8x128xf32>
    %328 = vector.broadcast %6 : vector<1x128xf32> to vector<8x128xf32>
    %329 = arith.addf %327, %328 : vector<8x128xf32>
    %c0_88 = arith.constant 0 : index
    %c0_89 = arith.constant 0 : index
    %330 = vector.load %arg4[%c0_88, %c0_89] : memref<8x128xf32, #tpu.memory_space<vmem>>, vector<8x128xf32>
    tpu.vector_store %arg4[%c0_88, %c0_89], %329 {strides = array<i32>} : memref<8x128xf32, #tpu.memory_space<vmem>>, vector<8x128xf32>,
    return
  }
  func.func @transform_0(%arg0: i32) -> (i32, i32) {
    %c0_i32 = arith.constant 0 : i32
    %c0_i32_0 = arith.constant 0 : i32
    %c0_i32_1 = arith.constant 0 : i32
    return %c0_i32, %c0_i32_0 : i32, i32
  }
  func.func @transform_1(%arg0: i32) -> (i32, i32) {
    %c0_i32 = arith.constant 0 : i32
    %c0_i32_0 = arith.constant 0 : i32
    %c0_i32_1 = arith.constant 0 : i32
    return %c0_i32, %c0_i32_0 : i32, i32
  }
  func.func @transform_2(%arg0: i32) -> (i32, i32, i32) {
    %c0_i32 = arith.constant 0 : i32
    %c0_i32_0 = arith.constant 0 : i32
    %c0_i32_1 = arith.constant 0 : i32
    %c0_i32_2 = arith.constant 0 : i32
    return %c0_i32, %c0_i32_0, %c0_i32_1 : i32, i32, i32
  }
  func.func @transform_3(%arg0: i32) -> (i32, i32) {
    %c0_i32 = arith.constant 0 : i32
    %c0_i32_0 = arith.constant 0 : i32
    %c0_i32_1 = arith.constant 0 : i32
    return %c0_i32, %c0_i32_0 : i32, i32
  }
}

</mosaic_0001>

<llo_original>
// kernel: transformer_qnetwork_forward.1
$region0: #{transformer_qnetwork_forward.1}
  #allocation0 [shape = 'u32[]', space=smem, size = 0x4, offset = 0x4, fixed_abs, tag = 'smem constant byte address 0x4 - core index']
  #allocation1 [shape = 'u32[144,128]{1,0:T(1,128)}', space=vmem, size = 0x12000, scoped, tag = 'internal scratch']
  %s0 = inlined_call_operand.vmem [shape: f32[16,4], index: 0, kind: input, shape index: {}]
  %s1 = inlined_call_operand.hbm [shape: f32[104,128], index: 1, kind: input, shape index: {}]
  %s2 = inlined_call_operand.hbm [shape: f32[2,160,96], index: 2, kind: input, shape index: {}]
  %s3 = inlined_call_operand.vmem [shape: f32[8,128], index: 3, kind: output, shape index: {}]
  %s4 = sld [smem:[#allocation0]]
  $region30: #{transformer_qnetwork_forward.1} parent=0
    _
  %s6 = ssub.s32 1, %s4
  %s7 = scalar_select 0, %s6, %s4
  $region1: #{transformer_qnetwork_forward.1} parent=0
    #allocation2 [shape = 'u8[53248]{0}', space=vmem, size = 0xd000, scoped, tag = 'input window, operand 1, single buffered']
    #allocation3 [shape = 's32[1]{0}', space=sflag, size = 0x4, scoped, tag = 'scoped memory for transformer_qnetwork_forward.1']
    #allocation4 [shape = 'u8[163840]{0}', space=vmem, size = 0x28000, scoped, tag = 'input window, operand 2, single buffered']
    #allocation5 [shape = 's32[1]{0}', space=sflag, size = 0x4, scoped, tag = 'scoped memory for transformer_qnetwork_forward.1']
    %8 = vsyncpa [#allocation3], 0
    %9 = vsyncpa [#allocation5], 0
    // Predicated region
    $region2: #{transformer_qnetwork_forward.1} parent=1 // pred_check
      _
    $region3: #{transformer_qnetwork_forward.1} parent=1 // pred_check_branch
      %11 = sbr.rel (0) target = $region5
    $region4: #{transformer_qnetwork_forward.1} parent=1 // pred_region
      _
    $region5: #{transformer_qnetwork_forward.1} parent=1 // pred_fallthru
      _
    // Predicated region
    $region6: #{transformer_qnetwork_forward.1} parent=1 // pred_check
      _
    $region7: #{transformer_qnetwork_forward.1} parent=1 // pred_check_branch
      %13 = sbr.rel (0) target = $region9
    $region8: #{transformer_qnetwork_forward.1} parent=1 // pred_region
      %s15 = ssub.s32 1664, 1664
      %16 = vsyncadd [#allocation3], %s15
      %s17 = sshll.u32 [#allocation2], 4
      %s18 = int_to_ptr.vmem [resolvable:$true] %s17
      %23 = dma.hbm_to_vmem [thread:$0]  %s1, 1664, %s18, [#allocation3], 128, 128, 8
    $region9: #{transformer_qnetwork_forward.1} parent=1 // pred_fallthru
      _
    // Predicated region
    $region10: #{transformer_qnetwork_forward.1} parent=1 // pred_check
      _
    $region11: #{transformer_qnetwork_forward.1} parent=1 // pred_check_branch
      %25 = sbr.rel (0) target = $region13
    $region12: #{transformer_qnetwork_forward.1} parent=1 // pred_region
      %s27 = ssub.s32 5120, 5120
      %28 = vsyncadd [#allocation5], %s27
      %s29 = sshll.u32 [#allocation4], 4
      %s30 = int_to_ptr.vmem [resolvable:$true] %s29
      %35 = dma.hbm_to_vmem [thread:$0]  %s2, 5120, %s30, [#allocation5], 128, 128, 8
    $region13: #{transformer_qnetwork_forward.1} parent=1 // pred_fallthru
      _
    // Predicated region
    $region14: #{transformer_qnetwork_forward.1} parent=1 // pred_check
      _
    $region15: #{transformer_qnetwork_forward.1} parent=1 // pred_check_branch
      %37 = sbr.rel (0) target = $region17
    $region16: #{transformer_qnetwork_forward.1} parent=1 // pred_region
      %38 = dma.done [#allocation3], 1664
    $region17: #{transformer_qnetwork_forward.1} parent=1 // pred_fallthru
      _
    // Predicated region
    $region18: #{transformer_qnetwork_forward.1} parent=1 // pred_check
      _
    $region19: #{transformer_qnetwork_forward.1} parent=1 // pred_check_branch
      %40 = sbr.rel (0) target = $region21
    $region20: #{transformer_qnetwork_forward.1} parent=1 // pred_region
      %41 = dma.done [#allocation5], 5120
    $region21: #{transformer_qnetwork_forward.1} parent=1 // pred_fallthru
      _
    %v42 = vld [vmem:[#allocation2] sm:$0xff]
    %v43 = vld [vmem:[#allocation2 + $0x8] sm:$0xff]
    %v44 = vld [vmem:[#allocation2 + $0x10] sm:$0xff]
    %v45 = vld [vmem:[#allocation2 + $0x18] sm:$0xff]
    %v46 = vld [vmem:[#allocation2 + $0x20] sm:$0xff]
    %v47 = vld [vmem:[#allocation2 + $0x28] sm:$0xff]
    %v48 = vld [vmem:[#allocation2 + $0x30] sm:$0xff]
    %v49 = vld [vmem:[#allocation2 + $0x38] sm:$0xff]
    %v50 = vld [vmem:[#allocation2 + $0x40] sm:$0xff]
    %v51 = vld [vmem:[#allocation2 + $0x48] sm:$0xff]
    %v52 = vld [vmem:[#allocation2 + $0x50] sm:$0xff]
    %v53 = vld [vmem:[#allocation2 + $0x58] sm:$0xff]
    %v54 = vld [vmem:[#allocation2 + $0x60] sm:$0xff]
    %v55 = vld [vmem:[%s0] sm:$0xff]
    %v56 = vld [vmem:[%s0 + $0x8] sm:$0xff]
    %vm57 = vcmask 31744
    %v59 = vsel %vm57, %v55, 0
    %v62 = vsel %vm57, %v56, 0
    %vm64 = vcmask 1043456
    %v66 = vsel %vm64, %v42, 0
    %68 = vmatprep.subr.mxu0 0.0
    %69 = vmatpush1.msra.mxu0 0.0
    %70 = vmatprep.subr.mxu0 0.0
    %71 = vmatpush1.msra.mxu0 0.0
    %72 = vmatprep.subr.mxu0 0.0
    %73 = vmatpush1.msra.mxu0 0.0
    %74 = vmatprep.subr.mxu0 0.0
    %75 = vmatpush1.msra.mxu0 0.0
    %76 = vmatprep.subr.mxu0 0.0
    %77 = vmatpush1.msra.mxu0 0.0
    %78 = vmatprep.subr.mxu0 0.0
    %79 = vmatpush1.msra.mxu0 0.0
    %80 = vmatprep.subr.mxu0 0.0
    %81 = vmatpush1.msra.mxu0 0.0
    %82 = vmatprep.subr.mxu0 0.0
    %83 = vmatpush1.msra.mxu0 0.0
    %84 = vmatprep.subr.mxu0 0.0
    %85 = vmatpush1.msra.mxu0 0.0
    %86 = vmatprep.subr.mxu0 0.0
    %87 = vmatpush1.msra.mxu0 0.0
    %88 = vmatprep.subr.mxu0 0.0
    %89 = vmatpush1.msra.mxu0 0.0
    %90 = vmatprep.subr.mxu0 0.0
    %91 = vmatpush1.msra.mxu0 0.0
    %92 = vmatprep.subr.mxu0 0.0
    %93 = vmatpush1.msra.mxu0 0.0
    %94 = vmatprep.subr.mxu0 0.0
    %95 = vmatpush1.msra.mxu0 0.0
    %96 = vmatprep.subr.mxu0 0.0
    %97 = vmatpush1.msra.mxu0 0.0
    %98 = vmatprep.subr.mxu0 0.0
    %99 = vmatpush1.msra.mxu0 %v66
    %100 = vmatprep.subr.mxu0 0.0
    %101 = vmatpush2.msra.mxu0 0.0
    %102 = vmatprep.subr.mxu0 0.0
    %103 = vmatpush2.msra.mxu0 0.0
    %104 = vmatprep.subr.mxu0 0.0
    %105 = vmatpush2.msra.mxu0 0.0
    %106 = vmatprep.subr.mxu0 0.0
    %107 = vmatpush2.msra.mxu0 0.0
    %108 = vmatprep.subr.mxu0 0.0
    %109 = vmatpush2.msra.mxu0 0.0
    %110 = vmatprep.subr.mxu0 0.0
    %111 = vmatpush2.msra.mxu0 0.0
    %112 = vmatprep.subr.mxu0 0.0
    %113 = vmatpush2.msra.mxu0 0.0
    %114 = vmatprep.subr.mxu0 0.0
    %115 = vmatpush2.msra.mxu0 0.0
    %116 = vmatprep.subr.mxu0 0.0
    %117 = vmatpush2.msra.mxu0 0.0
    %118 = vmatprep.subr.mxu0 0.0
    %119 = vmatpush2.msra.mxu0 0.0
    %120 = vmatprep.subr.mxu0 0.0
    %121 = vmatpush2.msra.mxu0 0.0
    %122 = vmatprep.subr.mxu0 0.0
    %123 = vmatpush2.msra.mxu0 0.0
    %124 = vmatprep.subr.mxu0 0.0
    %125 = vmatpush2.msra.mxu0 0.0
    %126 = vmatprep.subr.mxu0 0.0
    %127 = vmatpush2.msra.mxu0 0.0
    %128 = vmatprep.subr.mxu0 0.0
    %129 = vmatpush2.msra.mxu0 0.0
    %130 = vmatprep.subr.mxu0 0.0
    %131 = vmatpush2.msra.mxu0 0.0
    %132 = vmatprep.mubr.f32.mxu0 0.0
    %133 = vmatmul.mubr.f32.gmra.mxu0 %v59
    %v134 = vpop.f32.mrf.mxu0
    %v135 = vadd.f32 %v43, %v134
    %v136 = vpop.f32.mrf.mxu0
    %137 = vmatprep.mubr.f32.mxu0 0.0
    %138 = vmatmul.mubr.f32.gmra.mxu0 %v62
    %v139 = vpop.f32.mrf.mxu0
    %v140 = vadd.f32 %v44, %v139
    %v141 = vpop.f32.mrf.mxu0
    %142 = vdwg.mxu0
    %v143 = vld [vmem:[#allocation4] sm:$0xff]
    %v144 = vld [vmem:[#allocation4 + $0x8] sm:$0xff]
    %v145 = vld [vmem:[#allocation4 + $0x10] sm:$0xff]
    %v146 = vld [vmem:[#allocation4 + $0x18] sm:$0xff]
    %v147 = vld [vmem:[#allocation4 + $0x20] sm:$0xff]
    %v148 = vld [vmem:[#allocation4 + $0x28] sm:$0xff]
    %v149 = vld [vmem:[#allocation4 + $0x30] sm:$0xff]
    %v150 = vld [vmem:[#allocation4 + $0x38] sm:$0xff]
    %v151 = vld [vmem:[#allocation4 + $0x40] sm:$0xff]
    %v152 = vld [vmem:[#allocation4 + $0x48] sm:$0xff]
    %v153 = vld [vmem:[#allocation4 + $0x50] sm:$0xff]
    %v154 = vld [vmem:[#allocation4 + $0x58] sm:$0xff]
    %v155 = vld [vmem:[#allocation4 + $0x60] sm:$0xff]
    %v156 = vld [vmem:[#allocation4 + $0x68] sm:$0xff]
    %v157 = vld [vmem:[#allocation4 + $0x70] sm:$0xff]
    %v158 = vld [vmem:[#allocation4 + $0x78] sm:$0xff]
    %v159 = vld [vmem:[#allocation4 + $0x80] sm:$0xff]
    %v160 = vld [vmem:[#allocation4 + $0x88] sm:$0xff]
    %v161 = vld [vmem:[#allocation4 + $0x90] sm:$0xff]
    %v162 = vld [vmem:[#allocation4 + $0x98] sm:$0xff]
    %v163 = vlaneseq
    %v164 = vshrl.u32 %v163, 7
    %v165 = vsub.s32 0, %v164
    %v166 = vrot.slane %v53, %v165
    %vm167 = vcmask 261120
    %v169 = vsel %vm167, %v135, 0
    %v172 = vsel %vm167, %v140, 0
    %174 = vmatprep.subr.mxu0 0.0
    %175 = vmatpush1.msra.mxu0 0.0
    %176 = vmatprep.subr.mxu0 0.0
    %177 = vmatpush1.msra.mxu0 0.0
    %178 = vmatprep.subr.mxu0 0.0
    %179 = vmatpush1.msra.mxu0 0.0
    %180 = vmatprep.subr.mxu0 0.0
    %181 = vmatpush1.msra.mxu0 0.0
    %182 = vmatprep.subr.mxu0 0.0
    %183 = vmatpush1.msra.mxu0 0.0
    %184 = vmatprep.subr.mxu0 0.0
    %185 = vmatpush1.msra.mxu0 0.0
    %186 = vmatprep.subr.mxu0 0.0
    %187 = vmatpush1.msra.mxu0 0.0
    %188 = vmatprep.subr.mxu0 0.0
    %189 = vmatpush1.msra.mxu0 0.0
    %190 = vmatprep.subr.mxu0 0.0
    %191 = vmatpush1.msra.mxu0 0.0
    %192 = vmatprep.subr.mxu0 0.0
    %193 = vmatpush1.msra.mxu0 0.0
    %194 = vmatprep.subr.mxu0 0.0
    %195 = vmatpush1.msra.mxu0 0.0
    %196 = vmatprep.subr.mxu0 0.0
    %197 = vmatpush1.msra.mxu0 0.0
    %198 = vmatprep.subr.mxu0 0.0
    %199 = vmatpush1.msra.mxu0 %v146
    %200 = vmatprep.subr.mxu0 0.0
    %201 = vmatpush1.msra.mxu0 %v145
    %202 = vmatprep.subr.mxu0 0.0
    %203 = vmatpush1.msra.mxu0 %v144
    %204 = vmatprep.subr.mxu0 0.0
    %205 = vmatpush1.msra.mxu0 %v143
    %206 = vmatprep.subr.mxu0 0.0
    %207 = vmatpush2.msra.mxu0 0.0
    %208 = vmatprep.subr.mxu0 0.0
    %209 = vmatpush2.msra.mxu0 0.0
    %210 = vmatprep.subr.mxu0 0.0
    %211 = vmatpush2.msra.mxu0 0.0
    %212 = vmatprep.subr.mxu0 0.0
    %213 = vmatpush2.msra.mxu0 0.0
    %214 = vmatprep.subr.mxu0 0.0
    %215 = vmatpush2.msra.mxu0 0.0
    %216 = vmatprep.subr.mxu0 0.0
    %217 = vmatpush2.msra.mxu0 0.0
    %218 = vmatprep.subr.mxu0 0.0
    %219 = vmatpush2.msra.mxu0 0.0
    %220 = vmatprep.subr.mxu0 0.0
    %221 = vmatpush2.msra.mxu0 0.0
    %222 = vmatprep.subr.mxu0 0.0
    %223 = vmatpush2.msra.mxu0 0.0
    %224 = vmatprep.subr.mxu0 0.0
    %225 = vmatpush2.msra.mxu0 0.0
    %226 = vmatprep.subr.mxu0 0.0
    %227 = vmatpush2.msra.mxu0 0.0
    %228 = vmatprep.subr.mxu0 0.0
    %229 = vmatpush2.msra.mxu0 0.0
    %230 = vmatprep.subr.mxu0 0.0
    %231 = vmatpush2.msra.mxu0 0.0
    %232 = vmatprep.subr.mxu0 0.0
    %233 = vmatpush2.msra.mxu0 0.0
    %234 = vmatprep.subr.mxu0 0.0
    %235 = vmatpush2.msra.mxu0 0.0
    %236 = vmatprep.subr.mxu0 0.0
    %237 = vmatpush2.msra.mxu0 0.0
    %238 = vmatprep.mubr.f32.mxu0 0.0
    %239 = vmatmul.mubr.f32.gmra.mxu0 %v169
    %v240 = vpop.f32.mrf.mxu0
    %v241 = vadd.f32 %v166, %v240
    %v242 = vpop.f32.mrf.mxu0
    %243 = vmatprep.mubr.f32.mxu0 0.0
    %244 = vmatmul.mubr.f32.gmra.mxu0 %v172
    %v245 = vpop.f32.mrf.mxu0
    %v246 = vadd.f32 %v166, %v245
    %v247 = vpop.f32.mrf.mxu0
    %248 = vdwg.mxu0
    %251 = vrot.lane.b32.xlu0 %v241, 96
    %v252 = vpop.permute.xlu0 %251
    %253 = vrot.lane.b32.xlu0 %v246, 96
    %v254 = vpop.permute.xlu0 %253
    %vm255 = vcmask 64512
    %v256 = vsel %vm255, %v241, 0
    %v258 = vsel %vm255, %v246, 0
    %v260 = vsel %vm255, %v252, 0
    %v262 = vsel %vm255, %v254, 0
    %264 = vmatprep.subr.mxu0 0.0
    %265 = vmatpush1.xpose.msra.mxu0 0.0
    %266 = vmatprep.subr.mxu0 0.0
    %267 = vmatpush1.xpose.msra.mxu0 0.0
    %268 = vmatprep.subr.mxu0 0.0
    %269 = vmatpush1.xpose.msra.mxu0 0.0
    %270 = vmatprep.subr.mxu0 0.0
    %271 = vmatpush1.xpose.msra.mxu0 0.0
    %272 = vmatprep.subr.mxu0 0.0
    %273 = vmatpush1.xpose.msra.mxu0 0.0
    %274 = vmatprep.subr.mxu0 0.0
    %275 = vmatpush1.xpose.msra.mxu0 0.0
    %276 = vmatprep.subr.mxu0 0.0
    %277 = vmatpush1.xpose.msra.mxu0 0.0
    %278 = vmatprep.subr.mxu0 0.0
    %279 = vmatpush1.xpose.msra.mxu0 0.0
    %280 = vmatprep.subr.mxu0 0.0
    %281 = vmatpush1.xpose.msra.mxu0 0.0
    %282 = vmatprep.subr.mxu0 0.0
    %283 = vmatpush1.xpose.msra.mxu0 0.0
    %284 = vmatprep.subr.mxu0 0.0
    %285 = vmatpush1.xpose.msra.mxu0 0.0
    %286 = vmatprep.subr.mxu0 0.0
    %287 = vmatpush1.xpose.msra.mxu0 0.0
    %288 = vmatprep.subr.mxu0 0.0
    %289 = vmatpush1.xpose.msra.mxu0 0.0
    %290 = vmatprep.subr.mxu0 0.0
    %291 = vmatpush1.xpose.msra.mxu0 0.0
    %292 = vmatprep.subr.mxu0 0.0
    %293 = vmatpush1.xpose.msra.mxu0 %v262
    %294 = vmatprep.subr.mxu0 0.0
    %295 = vmatpush1.xpose.msra.mxu0 %v260
    %296 = vmatprep.subr.mxu0 0.0
    %297 = vmatpush2.xpose.msra.mxu0 0.0
    %298 = vmatprep.subr.mxu0 0.0
    %299 = vmatpush2.xpose.msra.mxu0 0.0
    %300 = vmatprep.subr.mxu0 0.0
    %301 = vmatpush2.xpose.msra.mxu0 0.0
    %302 = vmatprep.subr.mxu0 0.0
    %303 = vmatpush2.xpose.msra.mxu0 0.0
    %304 = vmatprep.subr.mxu0 0.0
    %305 = vmatpush2.xpose.msra.mxu0 0.0
    %306 = vmatprep.subr.mxu0 0.0
    %307 = vmatpush2.xpose.msra.mxu0 0.0
    %308 = vmatprep.subr.mxu0 0.0
    %309 = vmatpush2.xpose.msra.mxu0 0.0
    %310 = vmatprep.subr.mxu0 0.0
    %311 = vmatpush2.xpose.msra.mxu0 0.0
    %312 = vmatprep.subr.mxu0 0.0
    %313 = vmatpush2.xpose.msra.mxu0 0.0
    %314 = vmatprep.subr.mxu0 0.0
    %315 = vmatpush2.xpose.msra.mxu0 0.0
    %316 = vmatprep.subr.mxu0 0.0
    %317 = vmatpush2.xpose.msra.mxu0 0.0
    %318 = vmatprep.subr.mxu0 0.0
    %319 = vmatpush2.xpose.msra.mxu0 0.0
    %320 = vmatprep.subr.mxu0 0.0
    %321 = vmatpush2.xpose.msra.mxu0 0.0
    %322 = vmatprep.subr.mxu0 0.0
    %323 = vmatpush2.xpose.msra.mxu0 0.0
    %324 = vmatprep.subr.mxu0 0.0
    %325 = vmatpush2.xpose.msra.mxu0 0.0
    %326 = vmatprep.subr.mxu0 0.0
    %327 = vmatpush2.xpose.msra.mxu0 0.0
    %328 = vmatprep.mubr.f32.mxu0 0.0
    %329 = vmatmul.mubr.f32.gmra.mxu0 %v256
    %v330 = vpop.f32.mrf.mxu0
    %v331 = vadd.f32 0.0, %v330
    %v332 = vpop.f32.mrf.mxu0
    %333 = vmatprep.mubr.f32.mxu0 0.0
    %334 = vmatmul.mubr.f32.gmra.mxu0 %v258
    %v335 = vpop.f32.mrf.mxu0
    %v336 = vadd.f32 0.0, %v335
    %v337 = vpop.f32.mrf.mxu0
    %338 = vdwg.mxu0
    %v339 = vmul.f32 %v331, 0.35355338
    %v340 = vmul.f32 %v336, 0.35355338
    %v341 = vadd.f32 %v339, %v45
    %v342 = vadd.f32 %v340, %v46
    %vm343 = vcmask 130048
    %v344 = vsel %vm343, %v341, -inf
    %345 = vmax.xlane.f32.xlu0 %v344
    %v346 = vpop.xlane.xlu0 %345
    %v347 = vsel %vm343, %v342, -inf
    %348 = vmax.xlane.f32.xlu0 %v347
    %v349 = vpop.xlane.xlu0 %348
    %v350 = vsub.f32 %v341, %v346
    %v351 = vsub.f32 %v342, %v349
    %v352 = vmul.f32 %v350, 1.442695
    %v353 = vpow.pop %v352
    %v354 = vmul.f32 %v351, 1.442695
    %v355 = vpow.pop %v354
    %v356 = vsel %vm343, %v353, 0.0
    %357 = vadd.xlane.f32.xlu0 %v356
    %v358 = vpop.xlane.xlu0 %357
    %v359 = vsel %vm343, %v355, 0.0
    %360 = vadd.xlane.f32.xlu0 %v359
    %v361 = vpop.xlane.xlu0 %360
    %v362 = vrcp.pop %v358
    %v363 = vmul.f32 %v353, %v362
    %v364 = vrcp.pop %v361
    %v365 = vmul.f32 %v355, %v364
    %366 = vrot.lane.b32.xlu0 %v241, 64
    %v367 = vpop.permute.xlu0 %366
    %368 = vrot.lane.b32.xlu0 %v246, 64
    %v369 = vpop.permute.xlu0 %368
    %v373 = vsel %vm343, %v363, 0
    %v376 = vsel %vm343, %v365, 0
    %378 = vmatprep.subr.mxu0 0.0
    %379 = vmatpush1.msra.mxu0 0.0
    %380 = vmatprep.subr.mxu0 0.0
    %381 = vmatpush1.msra.mxu0 0.0
    %382 = vmatprep.subr.mxu0 0.0
    %383 = vmatpush1.msra.mxu0 0.0
    %384 = vmatprep.subr.mxu0 0.0
    %385 = vmatpush1.msra.mxu0 0.0
    %386 = vmatprep.subr.mxu0 0.0
    %387 = vmatpush1.msra.mxu0 0.0
    %388 = vmatprep.subr.mxu0 0.0
    %389 = vmatpush1.msra.mxu0 0.0
    %390 = vmatprep.subr.mxu0 0.0
    %391 = vmatpush1.msra.mxu0 0.0
    %392 = vmatprep.subr.mxu0 0.0
    %393 = vmatpush1.msra.mxu0 0.0
    %394 = vmatprep.subr.mxu0 0.0
    %395 = vmatpush1.msra.mxu0 0.0
    %396 = vmatprep.subr.mxu0 0.0
    %397 = vmatpush1.msra.mxu0 0.0
    %398 = vmatprep.subr.mxu0 0.0
    %399 = vmatpush1.msra.mxu0 0.0
    %400 = vmatprep.subr.mxu0 0.0
    %401 = vmatpush1.msra.mxu0 0.0
    %402 = vmatprep.subr.mxu0 0.0
    %403 = vmatpush1.msra.mxu0 0.0
    %404 = vmatprep.subr.mxu0 0.0
    %405 = vmatpush1.msra.mxu0 0.0
    %406 = vmatprep.subr.mxu0 0.0
    %407 = vmatpush1.msra.mxu0 %v369
    %408 = vmatprep.subr.mxu0 0.0
    %409 = vmatpush1.msra.mxu0 %v367
    %410 = vmatprep.subr.mxu0 0.0
    %411 = vmatpush2.msra.mxu0 0.0
    %412 = vmatprep.subr.mxu0 0.0
    %413 = vmatpush2.msra.mxu0 0.0
    %414 = vmatprep.subr.mxu0 0.0
    %415 = vmatpush2.msra.mxu0 0.0
    %416 = vmatprep.subr.mxu0 0.0
    %417 = vmatpush2.msra.mxu0 0.0
    %418 = vmatprep.subr.mxu0 0.0
    %419 = vmatpush2.msra.mxu0 0.0
    %420 = vmatprep.subr.mxu0 0.0
    %421 = vmatpush2.msra.mxu0 0.0
    %422 = vmatprep.subr.mxu0 0.0
    %423 = vmatpush2.msra.mxu0 0.0
    %424 = vmatprep.subr.mxu0 0.0
    %425 = vmatpush2.msra.mxu0 0.0
    %426 = vmatprep.subr.mxu0 0.0
    %427 = vmatpush2.msra.mxu0 0.0
    %428 = vmatprep.subr.mxu0 0.0
    %429 = vmatpush2.msra.mxu0 0.0
    %430 = vmatprep.subr.mxu0 0.0
    %431 = vmatpush2.msra.mxu0 0.0
    %432 = vmatprep.subr.mxu0 0.0
    %433 = vmatpush2.msra.mxu0 0.0
    %434 = vmatprep.subr.mxu0 0.0
    %435 = vmatpush2.msra.mxu0 0.0
    %436 = vmatprep.subr.mxu0 0.0
    %437 = vmatpush2.msra.mxu0 0.0
    %438 = vmatprep.subr.mxu0 0.0
    %439 = vmatpush2.msra.mxu0 0.0
    %440 = vmatprep.subr.mxu0 0.0
    %441 = vmatpush2.msra.mxu0 0.0
    %442 = vmatprep.mubr.f32.mxu0 0.0
    %443 = vmatmul.mubr.f32.gmra.mxu0 %v373
    %v444 = vpop.f32.mrf.mxu0
    %v445 = vadd.f32 0.0, %v444
    %v446 = vpop.f32.mrf.mxu0
    %447 = vmatprep.mubr.f32.mxu0 0.0
    %448 = vmatmul.mubr.f32.gmra.mxu0 %v376
    %v449 = vpop.f32.mrf.mxu0
    %v450 = vadd.f32 0.0, %v449
    %v451 = vpop.f32.mrf.mxu0
    %452 = vdwg.mxu0
    %453 = vrot.lane.b32.xlu0 %v241, 120
    %v454 = vpop.permute.xlu0 %453
    %455 = vrot.lane.b32.xlu0 %v246, 120
    %v456 = vpop.permute.xlu0 %455
    %457 = vrot.lane.b32.xlu0 %v241, 88
    %v458 = vpop.permute.xlu0 %457
    %459 = vrot.lane.b32.xlu0 %v246, 88
    %v460 = vpop.permute.xlu0 %459
    %v461 = vsel %vm255, %v454, 0
    %v463 = vsel %vm255, %v456, 0
    %v465 = vsel %vm255, %v458, 0
    %v467 = vsel %vm255, %v460, 0
    %469 = vmatprep.subr.mxu0 0.0
    %470 = vmatpush1.xpose.msra.mxu0 0.0
    %471 = vmatprep.subr.mxu0 0.0
    %472 = vmatpush1.xpose.msra.mxu0 0.0
    %473 = vmatprep.subr.mxu0 0.0
    %474 = vmatpush1.xpose.msra.mxu0 0.0
    %475 = vmatprep.subr.mxu0 0.0
    %476 = vmatpush1.xpose.msra.mxu0 0.0
    %477 = vmatprep.subr.mxu0 0.0
    %478 = vmatpush1.xpose.msra.mxu0 0.0
    %479 = vmatprep.subr.mxu0 0.0
    %480 = vmatpush1.xpose.msra.mxu0 0.0
    %481 = vmatprep.subr.mxu0 0.0
    %482 = vmatpush1.xpose.msra.mxu0 0.0
    %483 = vmatprep.subr.mxu0 0.0
    %484 = vmatpush1.xpose.msra.mxu0 0.0
    %485 = vmatprep.subr.mxu0 0.0
    %486 = vmatpush1.xpose.msra.mxu0 0.0
    %487 = vmatprep.subr.mxu0 0.0
    %488 = vmatpush1.xpose.msra.mxu0 0.0
    %489 = vmatprep.subr.mxu0 0.0
    %490 = vmatpush1.xpose.msra.mxu0 0.0
    %491 = vmatprep.subr.mxu0 0.0
    %492 = vmatpush1.xpose.msra.mxu0 0.0
    %493 = vmatprep.subr.mxu0 0.0
    %494 = vmatpush1.xpose.msra.mxu0 0.0
    %495 = vmatprep.subr.mxu0 0.0
    %496 = vmatpush1.xpose.msra.mxu0 0.0
    %497 = vmatprep.subr.mxu0 0.0
    %498 = vmatpush1.xpose.msra.mxu0 %v467
    %499 = vmatprep.subr.mxu0 0.0
    %500 = vmatpush1.xpose.msra.mxu0 %v465
    %501 = vmatprep.subr.mxu0 0.0
    %502 = vmatpush2.xpose.msra.mxu0 0.0
    %503 = vmatprep.subr.mxu0 0.0
    %504 = vmatpush2.xpose.msra.mxu0 0.0
    %505 = vmatprep.subr.mxu0 0.0
    %506 = vmatpush2.xpose.msra.mxu0 0.0
    %507 = vmatprep.subr.mxu0 0.0
    %508 = vmatpush2.xpose.msra.mxu0 0.0
    %509 = vmatprep.subr.mxu0 0.0
    %510 = vmatpush2.xpose.msra.mxu0 0.0
    %511 = vmatprep.subr.mxu0 0.0
    %512 = vmatpush2.xpose.msra.mxu0 0.0
    %513 = vmatprep.subr.mxu0 0.0
    %514 = vmatpush2.xpose.msra.mxu0 0.0
    %515 = vmatprep.subr.mxu0 0.0
    %516 = vmatpush2.xpose.msra.mxu0 0.0
    %517 = vmatprep.subr.mxu0 0.0
    %518 = vmatpush2.xpose.msra.mxu0 0.0
    %519 = vmatprep.subr.mxu0 0.0
    %520 = vmatpush2.xpose.msra.mxu0 0.0
    %521 = vmatprep.subr.mxu0 0.0
    %522 = vmatpush2.xpose.msra.mxu0 0.0
    %523 = vmatprep.subr.mxu0 0.0
    %524 = vmatpush2.xpose.msra.mxu0 0.0
    %525 = vmatprep.subr.mxu0 0.0
    %526 = vmatpush2.xpose.msra.mxu0 0.0
    %527 = vmatprep.subr.mxu0 0.0
    %528 = vmatpush2.xpose.msra.mxu0 0.0
    %529 = vmatprep.subr.mxu0 0.0
    %530 = vmatpush2.xpose.msra.mxu0 0.0
    %531 = vmatprep.subr.mxu0 0.0
    %532 = vmatpush2.xpose.msra.mxu0 0.0
    %533 = vmatprep.mubr.f32.mxu0 0.0
    %534 = vmatmul.mubr.f32.gmra.mxu0 %v461
    %v535 = vpop.f32.mrf.mxu0
    %v536 = vadd.f32 0.0, %v535
    %v537 = vpop.f32.mrf.mxu0
    %538 = vmatprep.mubr.f32.mxu0 0.0
    %539 = vmatmul.mubr.f32.gmra.mxu0 %v463
    %v540 = vpop.f32.mrf.mxu0
    %v541 = vadd.f32 0.0, %v540
    %v542 = vpop.f32.mrf.mxu0
    %543 = vdwg.mxu0
    %v544 = vmul.f32 %v536, 0.35355338
    %v545 = vmul.f32 %v541, 0.35355338
    %v546 = vadd.f32 %v544, %v45
    %v547 = vadd.f32 %v545, %v46
    %v548 = vsel %vm343, %v546, -inf
    %549 = vmax.xlane.f32.xlu0 %v548
    %v550 = vpop.xlane.xlu0 %549
    %v551 = vsel %vm343, %v547, -inf
    %552 = vmax.xlane.f32.xlu0 %v551
    %v553 = vpop.xlane.xlu0 %552
    %v554 = vsub.f32 %v546, %v550
    %v555 = vsub.f32 %v547, %v553
    %v556 = vmul.f32 %v554, 1.442695
    %v557 = vpow.pop %v556
    %v558 = vmul.f32 %v555, 1.442695
    %v559 = vpow.pop %v558
    %v560 = vsel %vm343, %v557, 0.0
    %561 = vadd.xlane.f32.xlu0 %v560
    %v562 = vpop.xlane.xlu0 %561
    %v563 = vsel %vm343, %v559, 0.0
    %564 = vadd.xlane.f32.xlu0 %v563
    %v565 = vpop.xlane.xlu0 %564
    %v566 = vrcp.pop %v562
    %v567 = vmul.f32 %v557, %v566
    %v568 = vrcp.pop %v565
    %v569 = vmul.f32 %v559, %v568
    %570 = vrot.lane.b32.xlu0 %v241, 56
    %v571 = vpop.permute.xlu0 %570
    %572 = vrot.lane.b32.xlu0 %v246, 56
    %v573 = vpop.permute.xlu0 %572
    %v577 = vsel %vm343, %v567, 0
    %v580 = vsel %vm343, %v569, 0
    %582 = vmatprep.subr.mxu0 0.0
    %583 = vmatpush1.msra.mxu0 0.0
    %584 = vmatprep.subr.mxu0 0.0
    %585 = vmatpush1.msra.mxu0 0.0
    %586 = vmatprep.subr.mxu0 0.0
    %587 = vmatpush1.msra.mxu0 0.0
    %588 = vmatprep.subr.mxu0 0.0
    %589 = vmatpush1.msra.mxu0 0.0
    %590 = vmatprep.subr.mxu0 0.0
    %591 = vmatpush1.msra.mxu0 0.0
    %592 = vmatprep.subr.mxu0 0.0
    %593 = vmatpush1.msra.mxu0 0.0
    %594 = vmatprep.subr.mxu0 0.0
    %595 = vmatpush1.msra.mxu0 0.0
    %596 = vmatprep.subr.mxu0 0.0
    %597 = vmatpush1.msra.mxu0 0.0
    %598 = vmatprep.subr.mxu0 0.0
    %599 = vmatpush1.msra.mxu0 0.0
    %600 = vmatprep.subr.mxu0 0.0
    %601 = vmatpush1.msra.mxu0 0.0
    %602 = vmatprep.subr.mxu0 0.0
    %603 = vmatpush1.msra.mxu0 0.0
    %604 = vmatprep.subr.mxu0 0.0
    %605 = vmatpush1.msra.mxu0 0.0
    %606 = vmatprep.subr.mxu0 0.0
    %607 = vmatpush1.msra.mxu0 0.0
    %608 = vmatprep.subr.mxu0 0.0
    %609 = vmatpush1.msra.mxu0 0.0
    %610 = vmatprep.subr.mxu0 0.0
    %611 = vmatpush1.msra.mxu0 %v573
    %612 = vmatprep.subr.mxu0 0.0
    %613 = vmatpush1.msra.mxu0 %v571
    %614 = vmatprep.subr.mxu0 0.0
    %615 = vmatpush2.msra.mxu0 0.0
    %616 = vmatprep.subr.mxu0 0.0
    %617 = vmatpush2.msra.mxu0 0.0
    %618 = vmatprep.subr.mxu0 0.0
    %619 = vmatpush2.msra.mxu0 0.0
    %620 = vmatprep.subr.mxu0 0.0
    %621 = vmatpush2.msra.mxu0 0.0
    %622 = vmatprep.subr.mxu0 0.0
    %623 = vmatpush2.msra.mxu0 0.0
    %624 = vmatprep.subr.mxu0 0.0
    %625 = vmatpush2.msra.mxu0 0.0
    %626 = vmatprep.subr.mxu0 0.0
    %627 = vmatpush2.msra.mxu0 0.0
    %628 = vmatprep.subr.mxu0 0.0
    %629 = vmatpush2.msra.mxu0 0.0
    %630 = vmatprep.subr.mxu0 0.0
    %631 = vmatpush2.msra.mxu0 0.0
    %632 = vmatprep.subr.mxu0 0.0
    %633 = vmatpush2.msra.mxu0 0.0
    %634 = vmatprep.subr.mxu0 0.0
    %635 = vmatpush2.msra.mxu0 0.0
    %636 = vmatprep.subr.mxu0 0.0
    %637 = vmatpush2.msra.mxu0 0.0
    %638 = vmatprep.subr.mxu0 0.0
    %639 = vmatpush2.msra.mxu0 0.0
    %640 = vmatprep.subr.mxu0 0.0
    %641 = vmatpush2.msra.mxu0 0.0
    %642 = vmatprep.subr.mxu0 0.0
    %643 = vmatpush2.msra.mxu0 0.0
    %644 = vmatprep.subr.mxu0 0.0
    %645 = vmatpush2.msra.mxu0 0.0
    %646 = vmatprep.mubr.f32.mxu0 0.0
    %647 = vmatmul.mubr.f32.gmra.mxu0 %v577
    %v648 = vpop.f32.mrf.mxu0
    %v649 = vadd.f32 0.0, %v648
    %v650 = vpop.f32.mrf.mxu0
    %651 = vmatprep.mubr.f32.mxu0 0.0
    %652 = vmatmul.mubr.f32.gmra.mxu0 %v580
    %v653 = vpop.f32.mrf.mxu0
    %v654 = vadd.f32 0.0, %v653
    %v655 = vpop.f32.mrf.mxu0
    %656 = vdwg.mxu0
    %v658 = vsel %vm255, %v649, 0
    %v661 = vsel %vm255, %v654, 0
    %663 = vmatprep.subr.mxu0 0.0
    %664 = vmatpush1.msra.mxu0 0.0
    %665 = vmatprep.subr.mxu0 0.0
    %666 = vmatpush1.msra.mxu0 0.0
    %667 = vmatprep.subr.mxu0 0.0
    %668 = vmatpush1.msra.mxu0 0.0
    %669 = vmatprep.subr.mxu0 0.0
    %670 = vmatpush1.msra.mxu0 0.0
    %671 = vmatprep.subr.mxu0 0.0
    %672 = vmatpush1.msra.mxu0 0.0
    %673 = vmatprep.subr.mxu0 0.0
    %674 = vmatpush1.msra.mxu0 0.0
    %675 = vmatprep.subr.mxu0 0.0
    %676 = vmatpush1.msra.mxu0 0.0
    %677 = vmatprep.subr.mxu0 0.0
    %678 = vmatpush1.msra.mxu0 0.0
    %679 = vmatprep.subr.mxu0 0.0
    %680 = vmatpush1.msra.mxu0 0.0
    %681 = vmatprep.subr.mxu0 0.0
    %682 = vmatpush1.msra.mxu0 0.0
    %683 = vmatprep.subr.mxu0 0.0
    %684 = vmatpush1.msra.mxu0 0.0
    %685 = vmatprep.subr.mxu0 0.0
    %686 = vmatpush1.msra.mxu0 0.0
    %687 = vmatprep.subr.mxu0 0.0
    %688 = vmatpush1.msra.mxu0 0.0
    %689 = vmatprep.subr.mxu0 0.0
    %690 = vmatpush1.msra.mxu0 0.0
    %691 = vmatprep.subr.mxu0 0.0
    %692 = vmatpush1.msra.mxu0 0.0
    %693 = vmatprep.subr.mxu0 0.0
    %694 = vmatpush1.msra.mxu0 %v148
    %695 = vmatprep.subr.mxu0 0.0
    %696 = vmatpush2.msra.mxu0 0.0
    %697 = vmatprep.subr.mxu0 0.0
    %698 = vmatpush2.msra.mxu0 0.0
    %699 = vmatprep.subr.mxu0 0.0
    %700 = vmatpush2.msra.mxu0 0.0
    %701 = vmatprep.subr.mxu0 0.0
    %702 = vmatpush2.msra.mxu0 0.0
    %703 = vmatprep.subr.mxu0 0.0
    %704 = vmatpush2.msra.mxu0 0.0
    %705 = vmatprep.subr.mxu0 0.0
    %706 = vmatpush2.msra.mxu0 0.0
    %707 = vmatprep.subr.mxu0 0.0
    %708 = vmatpush2.msra.mxu0 0.0
    %709 = vmatprep.subr.mxu0 0.0
    %710 = vmatpush2.msra.mxu0 0.0
    %711 = vmatprep.subr.mxu0 0.0
    %712 = vmatpush2.msra.mxu0 0.0
    %713 = vmatprep.subr.mxu0 0.0
    %714 = vmatpush2.msra.mxu0 0.0
    %715 = vmatprep.subr.mxu0 0.0
    %716 = vmatpush2.msra.mxu0 0.0
    %717 = vmatprep.subr.mxu0 0.0
    %718 = vmatpush2.msra.mxu0 0.0
    %719 = vmatprep.subr.mxu0 0.0
    %720 = vmatpush2.msra.mxu0 0.0
    %721 = vmatprep.subr.mxu0 0.0
    %722 = vmatpush2.msra.mxu0 0.0
    %723 = vmatprep.subr.mxu0 0.0
    %724 = vmatpush2.msra.mxu0 0.0
    %725 = vmatprep.subr.mxu0 0.0
    %726 = vmatpush2.msra.mxu0 0.0
    %727 = vmatprep.mubr.f32.mxu0 0.0
    %728 = vmatmul.mubr.f32.gmra.mxu0 %v658
    %v729 = vpop.f32.mrf.mxu0
    %v730 = vadd.f32 0.0, %v729
    %v731 = vpop.f32.mrf.mxu0
    %732 = vmatprep.mubr.f32.mxu0 0.0
    %733 = vmatmul.mubr.f32.gmra.mxu0 %v661
    %v734 = vpop.f32.mrf.mxu0
    %v735 = vadd.f32 0.0, %v734
    %v736 = vpop.f32.mrf.mxu0
    %737 = vdwg.mxu0
    %v739 = vsel %vm255, %v445, 0
    %v742 = vsel %vm255, %v450, 0
    %744 = vmatprep.subr.mxu0 0.0
    %745 = vmatpush1.msra.mxu0 0.0
    %746 = vmatprep.subr.mxu0 0.0
    %747 = vmatpush1.msra.mxu0 0.0
    %748 = vmatprep.subr.mxu0 0.0
    %749 = vmatpush1.msra.mxu0 0.0
    %750 = vmatprep.subr.mxu0 0.0
    %751 = vmatpush1.msra.mxu0 0.0
    %752 = vmatprep.subr.mxu0 0.0
    %753 = vmatpush1.msra.mxu0 0.0
    %754 = vmatprep.subr.mxu0 0.0
    %755 = vmatpush1.msra.mxu0 0.0
    %756 = vmatprep.subr.mxu0 0.0
    %757 = vmatpush1.msra.mxu0 0.0
    %758 = vmatprep.subr.mxu0 0.0
    %759 = vmatpush1.msra.mxu0 0.0
    %760 = vmatprep.subr.mxu0 0.0
    %761 = vmatpush1.msra.mxu0 0.0
    %762 = vmatprep.subr.mxu0 0.0
    %763 = vmatpush1.msra.mxu0 0.0
    %764 = vmatprep.subr.mxu0 0.0
    %765 = vmatpush1.msra.mxu0 0.0
    %766 = vmatprep.subr.mxu0 0.0
    %767 = vmatpush1.msra.mxu0 0.0
    %768 = vmatprep.subr.mxu0 0.0
    %769 = vmatpush1.msra.mxu0 0.0
    %770 = vmatprep.subr.mxu0 0.0
    %771 = vmatpush1.msra.mxu0 0.0
    %772 = vmatprep.subr.mxu0 0.0
    %773 = vmatpush1.msra.mxu0 0.0
    %774 = vmatprep.subr.mxu0 0.0
    %775 = vmatpush1.msra.mxu0 %v147
    %776 = vmatprep.subr.mxu0 0.0
    %777 = vmatpush2.msra.mxu0 0.0
    %778 = vmatprep.subr.mxu0 0.0
    %779 = vmatpush2.msra.mxu0 0.0
    %780 = vmatprep.subr.mxu0 0.0
    %781 = vmatpush2.msra.mxu0 0.0
    %782 = vmatprep.subr.mxu0 0.0
    %783 = vmatpush2.msra.mxu0 0.0
    %784 = vmatprep.subr.mxu0 0.0
    %785 = vmatpush2.msra.mxu0 0.0
    %786 = vmatprep.subr.mxu0 0.0
    %787 = vmatpush2.msra.mxu0 0.0
    %788 = vmatprep.subr.mxu0 0.0
    %789 = vmatpush2.msra.mxu0 0.0
    %790 = vmatprep.subr.mxu0 0.0
    %791 = vmatpush2.msra.mxu0 0.0
    %792 = vmatprep.subr.mxu0 0.0
    %793 = vmatpush2.msra.mxu0 0.0
    %794 = vmatprep.subr.mxu0 0.0
    %795 = vmatpush2.msra.mxu0 0.0
    %796 = vmatprep.subr.mxu0 0.0
    %797 = vmatpush2.msra.mxu0 0.0
    %798 = vmatprep.subr.mxu0 0.0
    %799 = vmatpush2.msra.mxu0 0.0
    %800 = vmatprep.subr.mxu0 0.0
    %801 = vmatpush2.msra.mxu0 0.0
    %802 = vmatprep.subr.mxu0 0.0
    %803 = vmatpush2.msra.mxu0 0.0
    %804 = vmatprep.subr.mxu0 0.0
    %805 = vmatpush2.msra.mxu0 0.0
    %806 = vmatprep.subr.mxu0 0.0
    %807 = vmatpush2.msra.mxu0 0.0
    %808 = vmatprep.mubr.f32.mxu0 0.0
    %809 = vmatmul.mubr.f32.gmra.mxu0 %v739
    %v810 = vpop.f32.mrf.mxu0
    %v811 = vadd.f32 %v730, %v810
    %v812 = vpop.f32.mrf.mxu0
    %813 = vmatprep.mubr.f32.mxu0 0.0
    %814 = vmatmul.mubr.f32.gmra.mxu0 %v742
    %v815 = vpop.f32.mrf.mxu0
    %v816 = vadd.f32 %v735, %v815
    %v817 = vpop.f32.mrf.mxu0
    %818 = vdwg.mxu0
    %819 = vrot.lane.b32.xlu0 %v241, 112
    %v820 = vpop.permute.xlu0 %819
    %821 = vrot.lane.b32.xlu0 %v246, 112
    %v822 = vpop.permute.xlu0 %821
    %823 = vrot.lane.b32.xlu0 %v241, 80
    %v824 = vpop.permute.xlu0 %823
    %825 = vrot.lane.b32.xlu0 %v246, 80
    %v826 = vpop.permute.xlu0 %825
    %v827 = vsel %vm255, %v820, 0
    %v829 = vsel %vm255, %v822, 0
    %v831 = vsel %vm255, %v824, 0
    %v833 = vsel %vm255, %v826, 0
    %835 = vmatprep.subr.mxu0 0.0
    %836 = vmatpush1.xpose.msra.mxu0 0.0
    %837 = vmatprep.subr.mxu0 0.0
    %838 = vmatpush1.xpose.msra.mxu0 0.0
    %839 = vmatprep.subr.mxu0 0.0
    %840 = vmatpush1.xpose.msra.mxu0 0.0
    %841 = vmatprep.subr.mxu0 0.0
    %842 = vmatpush1.xpose.msra.mxu0 0.0
    %843 = vmatprep.subr.mxu0 0.0
    %844 = vmatpush1.xpose.msra.mxu0 0.0
    %845 = vmatprep.subr.mxu0 0.0
    %846 = vmatpush1.xpose.msra.mxu0 0.0
    %847 = vmatprep.subr.mxu0 0.0
    %848 = vmatpush1.xpose.msra.mxu0 0.0
    %849 = vmatprep.subr.mxu0 0.0
    %850 = vmatpush1.xpose.msra.mxu0 0.0
    %851 = vmatprep.subr.mxu0 0.0
    %852 = vmatpush1.xpose.msra.mxu0 0.0
    %853 = vmatprep.subr.mxu0 0.0
    %854 = vmatpush1.xpose.msra.mxu0 0.0
    %855 = vmatprep.subr.mxu0 0.0
    %856 = vmatpush1.xpose.msra.mxu0 0.0
    %857 = vmatprep.subr.mxu0 0.0
    %858 = vmatpush1.xpose.msra.mxu0 0.0
    %859 = vmatprep.subr.mxu0 0.0
    %860 = vmatpush1.xpose.msra.mxu0 0.0
    %861 = vmatprep.subr.mxu0 0.0
    %862 = vmatpush1.xpose.msra.mxu0 0.0
    %863 = vmatprep.subr.mxu0 0.0
    %864 = vmatpush1.xpose.msra.mxu0 %v833
    %865 = vmatprep.subr.mxu0 0.0
    %866 = vmatpush1.xpose.msra.mxu0 %v831
    %867 = vmatprep.subr.mxu0 0.0
    %868 = vmatpush2.xpose.msra.mxu0 0.0
    %869 = vmatprep.subr.mxu0 0.0
    %870 = vmatpush2.xpose.msra.mxu0 0.0
    %871 = vmatprep.subr.mxu0 0.0
    %872 = vmatpush2.xpose.msra.mxu0 0.0
    %873 = vmatprep.subr.mxu0 0.0
    %874 = vmatpush2.xpose.msra.mxu0 0.0
    %875 = vmatprep.subr.mxu0 0.0
    %876 = vmatpush2.xpose.msra.mxu0 0.0
    %877 = vmatprep.subr.mxu0 0.0
    %878 = vmatpush2.xpose.msra.mxu0 0.0
    %879 = vmatprep.subr.mxu0 0.0
    %880 = vmatpush2.xpose.msra.mxu0 0.0
    %881 = vmatprep.subr.mxu0 0.0
    %882 = vmatpush2.xpose.msra.mxu0 0.0
    %883 = vmatprep.subr.mxu0 0.0
    %884 = vmatpush2.xpose.msra.mxu0 0.0
    %885 = vmatprep.subr.mxu0 0.0
    %886 = vmatpush2.xpose.msra.mxu0 0.0
    %887 = vmatprep.subr.mxu0 0.0
    %888 = vmatpush2.xpose.msra.mxu0 0.0
    %889 = vmatprep.subr.mxu0 0.0
    %890 = vmatpush2.xpose.msra.mxu0 0.0
    %891 = vmatprep.subr.mxu0 0.0
    %892 = vmatpush2.xpose.msra.mxu0 0.0
    %893 = vmatprep.subr.mxu0 0.0
    %894 = vmatpush2.xpose.msra.mxu0 0.0
    %895 = vmatprep.subr.mxu0 0.0
    %896 = vmatpush2.xpose.msra.mxu0 0.0
    %897 = vmatprep.subr.mxu0 0.0
    %898 = vmatpush2.xpose.msra.mxu0 0.0
    %899 = vmatprep.mubr.f32.mxu0 0.0
    %900 = vmatmul.mubr.f32.gmra.mxu0 %v827
    %v901 = vpop.f32.mrf.mxu0
    %v902 = vadd.f32 0.0, %v901
    %v903 = vpop.f32.mrf.mxu0
    %904 = vmatprep.mubr.f32.mxu0 0.0
    %905 = vmatmul.mubr.f32.gmra.mxu0 %v829
    %v906 = vpop.f32.mrf.mxu0
    %v907 = vadd.f32 0.0, %v906
    %v908 = vpop.f32.mrf.mxu0
    %909 = vdwg.mxu0
    %v910 = vmul.f32 %v902, 0.35355338
    %v911 = vmul.f32 %v907, 0.35355338
    %v912 = vadd.f32 %v910, %v45
    %v913 = vadd.f32 %v911, %v46
    %v914 = vsel %vm343, %v912, -inf
    %915 = vmax.xlane.f32.xlu0 %v914
    %v916 = vpop.xlane.xlu0 %915
    %v917 = vsel %vm343, %v913, -inf
    %918 = vmax.xlane.f32.xlu0 %v917
    %v919 = vpop.xlane.xlu0 %918
    %v920 = vsub.f32 %v912, %v916
    %v921 = vsub.f32 %v913, %v919
    %v922 = vmul.f32 %v920, 1.442695
    %v923 = vpow.pop %v922
    %v924 = vmul.f32 %v921, 1.442695
    %v925 = vpow.pop %v924
    %v926 = vsel %vm343, %v923, 0.0
    %927 = vadd.xlane.f32.xlu0 %v926
    %v928 = vpop.xlane.xlu0 %927
    %v929 = vsel %vm343, %v925, 0.0
    %930 = vadd.xlane.f32.xlu0 %v929
    %v931 = vpop.xlane.xlu0 %930
    %v932 = vrcp.pop %v928
    %v933 = vmul.f32 %v923, %v932
    %v934 = vrcp.pop %v931
    %v935 = vmul.f32 %v925, %v934
    %936 = vrot.lane.b32.xlu0 %v241, 48
    %v937 = vpop.permute.xlu0 %936
    %938 = vrot.lane.b32.xlu0 %v246, 48
    %v939 = vpop.permute.xlu0 %938
    %v943 = vsel %vm343, %v933, 0
    %v946 = vsel %vm343, %v935, 0
    %948 = vmatprep.subr.mxu0 0.0
    %949 = vmatpush1.msra.mxu0 0.0
    %950 = vmatprep.subr.mxu0 0.0
    %951 = vmatpush1.msra.mxu0 0.0
    %952 = vmatprep.subr.mxu0 0.0
    %953 = vmatpush1.msra.mxu0 0.0
    %954 = vmatprep.subr.mxu0 0.0
    %955 = vmatpush1.msra.mxu0 0.0
    %956 = vmatprep.subr.mxu0 0.0
    %957 = vmatpush1.msra.mxu0 0.0
    %958 = vmatprep.subr.mxu0 0.0
    %959 = vmatpush1.msra.mxu0 0.0
    %960 = vmatprep.subr.mxu0 0.0
    %961 = vmatpush1.msra.mxu0 0.0
    %962 = vmatprep.subr.mxu0 0.0
    %963 = vmatpush1.msra.mxu0 0.0
    %964 = vmatprep.subr.mxu0 0.0
    %965 = vmatpush1.msra.mxu0 0.0
    %966 = vmatprep.subr.mxu0 0.0
    %967 = vmatpush1.msra.mxu0 0.0
    %968 = vmatprep.subr.mxu0 0.0
    %969 = vmatpush1.msra.mxu0 0.0
    %970 = vmatprep.subr.mxu0 0.0
    %971 = vmatpush1.msra.mxu0 0.0
    %972 = vmatprep.subr.mxu0 0.0
    %973 = vmatpush1.msra.mxu0 0.0
    %974 = vmatprep.subr.mxu0 0.0
    %975 = vmatpush1.msra.mxu0 0.0
    %976 = vmatprep.subr.mxu0 0.0
    %977 = vmatpush1.msra.mxu0 %v939
    %978 = vmatprep.subr.mxu0 0.0
    %979 = vmatpush1.msra.mxu0 %v937
    %980 = vmatprep.subr.mxu0 0.0
    %981 = vmatpush2.msra.mxu0 0.0
    %982 = vmatprep.subr.mxu0 0.0
    %983 = vmatpush2.msra.mxu0 0.0
    %984 = vmatprep.subr.mxu0 0.0
    %985 = vmatpush2.msra.mxu0 0.0
    %986 = vmatprep.subr.mxu0 0.0
    %987 = vmatpush2.msra.mxu0 0.0
    %988 = vmatprep.subr.mxu0 0.0
    %989 = vmatpush2.msra.mxu0 0.0
    %990 = vmatprep.subr.mxu0 0.0
    %991 = vmatpush2.msra.mxu0 0.0
    %992 = vmatprep.subr.mxu0 0.0
    %993 = vmatpush2.msra.mxu0 0.0
    %994 = vmatprep.subr.mxu0 0.0
    %995 = vmatpush2.msra.mxu0 0.0
    %996 = vmatprep.subr.mxu0 0.0
    %997 = vmatpush2.msra.mxu0 0.0
    %998 = vmatprep.subr.mxu0 0.0
    %999 = vmatpush2.msra.mxu0 0.0
    %1000 = vmatprep.subr.mxu0 0.0
    %1001 = vmatpush2.msra.mxu0 0.0
    %1002 = vmatprep.subr.mxu0 0.0
    %1003 = vmatpush2.msra.mxu0 0.0
    %1004 = vmatprep.subr.mxu0 0.0
    %1005 = vmatpush2.msra.mxu0 0.0
    %1006 = vmatprep.subr.mxu0 0.0
    %1007 = vmatpush2.msra.mxu0 0.0
    %1008 = vmatprep.subr.mxu0 0.0
    %1009 = vmatpush2.msra.mxu0 0.0
    %1010 = vmatprep.subr.mxu0 0.0
    %1011 = vmatpush2.msra.mxu0 0.0
    %1012 = vmatprep.mubr.f32.mxu0 0.0
    %1013 = vmatmul.mubr.f32.gmra.mxu0 %v943
    %v1014 = vpop.f32.mrf.mxu0
    %v1015 = vadd.f32 0.0, %v1014
    %v1016 = vpop.f32.mrf.mxu0
    %1017 = vmatprep.mubr.f32.mxu0 0.0
    %1018 = vmatmul.mubr.f32.gmra.mxu0 %v946
    %v1019 = vpop.f32.mrf.mxu0
    %v1020 = vadd.f32 0.0, %v1019
    %v1021 = vpop.f32.mrf.mxu0
    %1022 = vdwg.mxu0
    %v1024 = vsel %vm255, %v1015, 0
    %v1027 = vsel %vm255, %v1020, 0
    %1029 = vmatprep.subr.mxu0 0.0
    %1030 = vmatpush1.msra.mxu0 0.0
    %1031 = vmatprep.subr.mxu0 0.0
    %1032 = vmatpush1.msra.mxu0 0.0
    %1033 = vmatprep.subr.mxu0 0.0
    %1034 = vmatpush1.msra.mxu0 0.0
    %1035 = vmatprep.subr.mxu0 0.0
    %1036 = vmatpush1.msra.mxu0 0.0
    %1037 = vmatprep.subr.mxu0 0.0
    %1038 = vmatpush1.msra.mxu0 0.0
    %1039 = vmatprep.subr.mxu0 0.0
    %1040 = vmatpush1.msra.mxu0 0.0
    %1041 = vmatprep.subr.mxu0 0.0
    %1042 = vmatpush1.msra.mxu0 0.0
    %1043 = vmatprep.subr.mxu0 0.0
    %1044 = vmatpush1.msra.mxu0 0.0
    %1045 = vmatprep.subr.mxu0 0.0
    %1046 = vmatpush1.msra.mxu0 0.0
    %1047 = vmatprep.subr.mxu0 0.0
    %1048 = vmatpush1.msra.mxu0 0.0
    %1049 = vmatprep.subr.mxu0 0.0
    %1050 = vmatpush1.msra.mxu0 0.0
    %1051 = vmatprep.subr.mxu0 0.0
    %1052 = vmatpush1.msra.mxu0 0.0
    %1053 = vmatprep.subr.mxu0 0.0
    %1054 = vmatpush1.msra.mxu0 0.0
    %1055 = vmatprep.subr.mxu0 0.0
    %1056 = vmatpush1.msra.mxu0 0.0
    %1057 = vmatprep.subr.mxu0 0.0
    %1058 = vmatpush1.msra.mxu0 0.0
    %1059 = vmatprep.subr.mxu0 0.0
    %1060 = vmatpush1.msra.mxu0 %v149
    %1061 = vmatprep.subr.mxu0 0.0
    %1062 = vmatpush2.msra.mxu0 0.0
    %1063 = vmatprep.subr.mxu0 0.0
    %1064 = vmatpush2.msra.mxu0 0.0
    %1065 = vmatprep.subr.mxu0 0.0
    %1066 = vmatpush2.msra.mxu0 0.0
    %1067 = vmatprep.subr.mxu0 0.0
    %1068 = vmatpush2.msra.mxu0 0.0
    %1069 = vmatprep.subr.mxu0 0.0
    %1070 = vmatpush2.msra.mxu0 0.0
    %1071 = vmatprep.subr.mxu0 0.0
    %1072 = vmatpush2.msra.mxu0 0.0
    %1073 = vmatprep.subr.mxu0 0.0
    %1074 = vmatpush2.msra.mxu0 0.0
    %1075 = vmatprep.subr.mxu0 0.0
    %1076 = vmatpush2.msra.mxu0 0.0
    %1077 = vmatprep.subr.mxu0 0.0
    %1078 = vmatpush2.msra.mxu0 0.0
    %1079 = vmatprep.subr.mxu0 0.0
    %1080 = vmatpush2.msra.mxu0 0.0
    %1081 = vmatprep.subr.mxu0 0.0
    %1082 = vmatpush2.msra.mxu0 0.0
    %1083 = vmatprep.subr.mxu0 0.0
    %1084 = vmatpush2.msra.mxu0 0.0
    %1085 = vmatprep.subr.mxu0 0.0
    %1086 = vmatpush2.msra.mxu0 0.0
    %1087 = vmatprep.subr.mxu0 0.0
    %1088 = vmatpush2.msra.mxu0 0.0
    %1089 = vmatprep.subr.mxu0 0.0
    %1090 = vmatpush2.msra.mxu0 0.0
    %1091 = vmatprep.subr.mxu0 0.0
    %1092 = vmatpush2.msra.mxu0 0.0
    %1093 = vmatprep.mubr.f32.mxu0 0.0
    %1094 = vmatmul.mubr.f32.gmra.mxu0 %v1024
    %v1095 = vpop.f32.mrf.mxu0
    %v1096 = vadd.f32 0.0, %v1095
    %v1097 = vpop.f32.mrf.mxu0
    %1098 = vmatprep.mubr.f32.mxu0 0.0
    %1099 = vmatmul.mubr.f32.gmra.mxu0 %v1027
    %v1100 = vpop.f32.mrf.mxu0
    %v1101 = vadd.f32 0.0, %v1100
    %v1102 = vpop.f32.mrf.mxu0
    %1103 = vdwg.mxu0
    %v1104 = vadd.f32 %v811, %v1096
    %v1105 = vadd.f32 %v816, %v1101
    %1106 = vrot.lane.b32.xlu0 %v241, 104
    %v1107 = vpop.permute.xlu0 %1106
    %1108 = vrot.lane.b32.xlu0 %v246, 104
    %v1109 = vpop.permute.xlu0 %1108
    %1110 = vrot.lane.b32.xlu0 %v241, 72
    %v1111 = vpop.permute.xlu0 %1110
    %1112 = vrot.lane.b32.xlu0 %v246, 72
    %v1113 = vpop.permute.xlu0 %1112
    %v1114 = vsel %vm255, %v1107, 0
    %v1116 = vsel %vm255, %v1109, 0
    %v1118 = vsel %vm255, %v1111, 0
    %v1120 = vsel %vm255, %v1113, 0
    %1122 = vmatprep.subr.mxu0 0.0
    %1123 = vmatpush1.xpose.msra.mxu0 0.0
    %1124 = vmatprep.subr.mxu0 0.0
    %1125 = vmatpush1.xpose.msra.mxu0 0.0
    %1126 = vmatprep.subr.mxu0 0.0
    %1127 = vmatpush1.xpose.msra.mxu0 0.0
    %1128 = vmatprep.subr.mxu0 0.0
    %1129 = vmatpush1.xpose.msra.mxu0 0.0
    %1130 = vmatprep.subr.mxu0 0.0
    %1131 = vmatpush1.xpose.msra.mxu0 0.0
    %1132 = vmatprep.subr.mxu0 0.0
    %1133 = vmatpush1.xpose.msra.mxu0 0.0
    %1134 = vmatprep.subr.mxu0 0.0
    %1135 = vmatpush1.xpose.msra.mxu0 0.0
    %1136 = vmatprep.subr.mxu0 0.0
    %1137 = vmatpush1.xpose.msra.mxu0 0.0
    %1138 = vmatprep.subr.mxu0 0.0
    %1139 = vmatpush1.xpose.msra.mxu0 0.0
    %1140 = vmatprep.subr.mxu0 0.0
    %1141 = vmatpush1.xpose.msra.mxu0 0.0
    %1142 = vmatprep.subr.mxu0 0.0
    %1143 = vmatpush1.xpose.msra.mxu0 0.0
    %1144 = vmatprep.subr.mxu0 0.0
    %1145 = vmatpush1.xpose.msra.mxu0 0.0
    %1146 = vmatprep.subr.mxu0 0.0
    %1147 = vmatpush1.xpose.msra.mxu0 0.0
    %1148 = vmatprep.subr.mxu0 0.0
    %1149 = vmatpush1.xpose.msra.mxu0 0.0
    %1150 = vmatprep.subr.mxu0 0.0
    %1151 = vmatpush1.xpose.msra.mxu0 %v1120
    %1152 = vmatprep.subr.mxu0 0.0
    %1153 = vmatpush1.xpose.msra.mxu0 %v1118
    %1154 = vmatprep.subr.mxu0 0.0
    %1155 = vmatpush2.xpose.msra.mxu0 0.0
    %1156 = vmatprep.subr.mxu0 0.0
    %1157 = vmatpush2.xpose.msra.mxu0 0.0
    %1158 = vmatprep.subr.mxu0 0.0
    %1159 = vmatpush2.xpose.msra.mxu0 0.0
    %1160 = vmatprep.subr.mxu0 0.0
    %1161 = vmatpush2.xpose.msra.mxu0 0.0
    %1162 = vmatprep.subr.mxu0 0.0
    %1163 = vmatpush2.xpose.msra.mxu0 0.0
    %1164 = vmatprep.subr.mxu0 0.0
    %1165 = vmatpush2.xpose.msra.mxu0 0.0
    %1166 = vmatprep.subr.mxu0 0.0
    %1167 = vmatpush2.xpose.msra.mxu0 0.0
    %1168 = vmatprep.subr.mxu0 0.0
    %1169 = vmatpush2.xpose.msra.mxu0 0.0
    %1170 = vmatprep.subr.mxu0 0.0
    %1171 = vmatpush2.xpose.msra.mxu0 0.0
    %1172 = vmatprep.subr.mxu0 0.0
    %1173 = vmatpush2.xpose.msra.mxu0 0.0
    %1174 = vmatprep.subr.mxu0 0.0
    %1175 = vmatpush2.xpose.msra.mxu0 0.0
    %1176 = vmatprep.subr.mxu0 0.0
    %1177 = vmatpush2.xpose.msra.mxu0 0.0
    %1178 = vmatprep.subr.mxu0 0.0
    %1179 = vmatpush2.xpose.msra.mxu0 0.0
    %1180 = vmatprep.subr.mxu0 0.0
    %1181 = vmatpush2.xpose.msra.mxu0 0.0
    %1182 = vmatprep.subr.mxu0 0.0
    %1183 = vmatpush2.xpose.msra.mxu0 0.0
    %1184 = vmatprep.subr.mxu0 0.0
    %1185 = vmatpush2.xpose.msra.mxu0 0.0
    %1186 = vmatprep.mubr.f32.mxu0 0.0
    %1187 = vmatmul.mubr.f32.gmra.mxu0 %v1114
    %v1188 = vpop.f32.mrf.mxu0
    %v1189 = vadd.f32 0.0, %v1188
    %v1190 = vpop.f32.mrf.mxu0
    %1191 = vmatprep.mubr.f32.mxu0 0.0
    %1192 = vmatmul.mubr.f32.gmra.mxu0 %v1116
    %v1193 = vpop.f32.mrf.mxu0
    %v1194 = vadd.f32 0.0, %v1193
    %v1195 = vpop.f32.mrf.mxu0
    %1196 = vdwg.mxu0
    %v1197 = vmul.f32 %v1189, 0.35355338
    %v1198 = vmul.f32 %v1194, 0.35355338
    %v1199 = vadd.f32 %v1197, %v45
    %v1200 = vadd.f32 %v1198, %v46
    %v1201 = vsel %vm343, %v1199, -inf
    %1202 = vmax.xlane.f32.xlu0 %v1201
    %v1203 = vpop.xlane.xlu0 %1202
    %v1204 = vsel %vm343, %v1200, -inf
    %1205 = vmax.xlane.f32.xlu0 %v1204
    %v1206 = vpop.xlane.xlu0 %1205
    %v1207 = vsub.f32 %v1199, %v1203
    %v1208 = vsub.f32 %v1200, %v1206
    %v1209 = vmul.f32 %v1207, 1.442695
    %v1210 = vpow.pop %v1209
    %v1211 = vmul.f32 %v1208, 1.442695
    %v1212 = vpow.pop %v1211
    %v1213 = vsel %vm343, %v1210, 0.0
    %1214 = vadd.xlane.f32.xlu0 %v1213
    %v1215 = vpop.xlane.xlu0 %1214
    %v1216 = vsel %vm343, %v1212, 0.0
    %1217 = vadd.xlane.f32.xlu0 %v1216
    %v1218 = vpop.xlane.xlu0 %1217
    %v1219 = vrcp.pop %v1215
    %v1220 = vmul.f32 %v1210, %v1219
    %v1221 = vrcp.pop %v1218
    %v1222 = vmul.f32 %v1212, %v1221
    %1223 = vrot.lane.b32.xlu0 %v241, 40
    %v1224 = vpop.permute.xlu0 %1223
    %1225 = vrot.lane.b32.xlu0 %v246, 40
    %v1226 = vpop.permute.xlu0 %1225
    %v1230 = vsel %vm343, %v1220, 0
    %v1233 = vsel %vm343, %v1222, 0
    %1235 = vmatprep.subr.mxu0 0.0
    %1236 = vmatpush1.msra.mxu0 0.0
    %1237 = vmatprep.subr.mxu0 0.0
    %1238 = vmatpush1.msra.mxu0 0.0
    %1239 = vmatprep.subr.mxu0 0.0
    %1240 = vmatpush1.msra.mxu0 0.0
    %1241 = vmatprep.subr.mxu0 0.0
    %1242 = vmatpush1.msra.mxu0 0.0
    %1243 = vmatprep.subr.mxu0 0.0
    %1244 = vmatpush1.msra.mxu0 0.0
    %1245 = vmatprep.subr.mxu0 0.0
    %1246 = vmatpush1.msra.mxu0 0.0
    %1247 = vmatprep.subr.mxu0 0.0
    %1248 = vmatpush1.msra.mxu0 0.0
    %1249 = vmatprep.subr.mxu0 0.0
    %1250 = vmatpush1.msra.mxu0 0.0
    %1251 = vmatprep.subr.mxu0 0.0
    %1252 = vmatpush1.msra.mxu0 0.0
    %1253 = vmatprep.subr.mxu0 0.0
    %1254 = vmatpush1.msra.mxu0 0.0
    %1255 = vmatprep.subr.mxu0 0.0
    %1256 = vmatpush1.msra.mxu0 0.0
    %1257 = vmatprep.subr.mxu0 0.0
    %1258 = vmatpush1.msra.mxu0 0.0
    %1259 = vmatprep.subr.mxu0 0.0
    %1260 = vmatpush1.msra.mxu0 0.0
    %1261 = vmatprep.subr.mxu0 0.0
    %1262 = vmatpush1.msra.mxu0 0.0
    %1263 = vmatprep.subr.mxu0 0.0
    %1264 = vmatpush1.msra.mxu0 %v1226
    %1265 = vmatprep.subr.mxu0 0.0
    %1266 = vmatpush1.msra.mxu0 %v1224
    %1267 = vmatprep.subr.mxu0 0.0
    %1268 = vmatpush2.msra.mxu0 0.0
    %1269 = vmatprep.subr.mxu0 0.0
    %1270 = vmatpush2.msra.mxu0 0.0
    %1271 = vmatprep.subr.mxu0 0.0
    %1272 = vmatpush2.msra.mxu0 0.0
    %1273 = vmatprep.subr.mxu0 0.0
    %1274 = vmatpush2.msra.mxu0 0.0
    %1275 = vmatprep.subr.mxu0 0.0
    %1276 = vmatpush2.msra.mxu0 0.0
    %1277 = vmatprep.subr.mxu0 0.0
    %1278 = vmatpush2.msra.mxu0 0.0
    %1279 = vmatprep.subr.mxu0 0.0
    %1280 = vmatpush2.msra.mxu0 0.0
    %1281 = vmatprep.subr.mxu0 0.0
    %1282 = vmatpush2.msra.mxu0 0.0
    %1283 = vmatprep.subr.mxu0 0.0
    %1284 = vmatpush2.msra.mxu0 0.0
    %1285 = vmatprep.subr.mxu0 0.0
    %1286 = vmatpush2.msra.mxu0 0.0
    %1287 = vmatprep.subr.mxu0 0.0
    %1288 = vmatpush2.msra.mxu0 0.0
    %1289 = vmatprep.subr.mxu0 0.0
    %1290 = vmatpush2.msra.mxu0 0.0
    %1291 = vmatprep.subr.mxu0 0.0
    %1292 = vmatpush2.msra.mxu0 0.0
    %1293 = vmatprep.subr.mxu0 0.0
    %1294 = vmatpush2.msra.mxu0 0.0
    %1295 = vmatprep.subr.mxu0 0.0
    %1296 = vmatpush2.msra.mxu0 0.0
    %1297 = vmatprep.subr.mxu0 0.0
    %1298 = vmatpush2.msra.mxu0 0.0
    %1299 = vmatprep.mubr.f32.mxu0 0.0
    %1300 = vmatmul.mubr.f32.gmra.mxu0 %v1230
    %v1301 = vpop.f32.mrf.mxu0
    %v1302 = vadd.f32 0.0, %v1301
    %v1303 = vpop.f32.mrf.mxu0
    %1304 = vmatprep.mubr.f32.mxu0 0.0
    %1305 = vmatmul.mubr.f32.gmra.mxu0 %v1233
    %v1306 = vpop.f32.mrf.mxu0
    %v1307 = vadd.f32 0.0, %v1306
    %v1308 = vpop.f32.mrf.mxu0
    %1309 = vdwg.mxu0
    %v1311 = vsel %vm255, %v1302, 0
    %v1314 = vsel %vm255, %v1307, 0
    %1316 = vmatprep.subr.mxu0 0.0
    %1317 = vmatpush1.msra.mxu0 0.0
    %1318 = vmatprep.subr.mxu0 0.0
    %1319 = vmatpush1.msra.mxu0 0.0
    %1320 = vmatprep.subr.mxu0 0.0
    %1321 = vmatpush1.msra.mxu0 0.0
    %1322 = vmatprep.subr.mxu0 0.0
    %1323 = vmatpush1.msra.mxu0 0.0
    %1324 = vmatprep.subr.mxu0 0.0
    %1325 = vmatpush1.msra.mxu0 0.0
    %1326 = vmatprep.subr.mxu0 0.0
    %1327 = vmatpush1.msra.mxu0 0.0
    %1328 = vmatprep.subr.mxu0 0.0
    %1329 = vmatpush1.msra.mxu0 0.0
    %1330 = vmatprep.subr.mxu0 0.0
    %1331 = vmatpush1.msra.mxu0 0.0
    %1332 = vmatprep.subr.mxu0 0.0
    %1333 = vmatpush1.msra.mxu0 0.0
    %1334 = vmatprep.subr.mxu0 0.0
    %1335 = vmatpush1.msra.mxu0 0.0
    %1336 = vmatprep.subr.mxu0 0.0
    %1337 = vmatpush1.msra.mxu0 0.0
    %1338 = vmatprep.subr.mxu0 0.0
    %1339 = vmatpush1.msra.mxu0 0.0
    %1340 = vmatprep.subr.mxu0 0.0
    %1341 = vmatpush1.msra.mxu0 0.0
    %1342 = vmatprep.subr.mxu0 0.0
    %1343 = vmatpush1.msra.mxu0 0.0
    %1344 = vmatprep.subr.mxu0 0.0
    %1345 = vmatpush1.msra.mxu0 0.0
    %1346 = vmatprep.subr.mxu0 0.0
    %1347 = vmatpush1.msra.mxu0 %v150
    %1348 = vmatprep.subr.mxu0 0.0
    %1349 = vmatpush2.msra.mxu0 0.0
    %1350 = vmatprep.subr.mxu0 0.0
    %1351 = vmatpush2.msra.mxu0 0.0
    %1352 = vmatprep.subr.mxu0 0.0
    %1353 = vmatpush2.msra.mxu0 0.0
    %1354 = vmatprep.subr.mxu0 0.0
    %1355 = vmatpush2.msra.mxu0 0.0
    %1356 = vmatprep.subr.mxu0 0.0
    %1357 = vmatpush2.msra.mxu0 0.0
    %1358 = vmatprep.subr.mxu0 0.0
    %1359 = vmatpush2.msra.mxu0 0.0
    %1360 = vmatprep.subr.mxu0 0.0
    %1361 = vmatpush2.msra.mxu0 0.0
    %1362 = vmatprep.subr.mxu0 0.0
    %1363 = vmatpush2.msra.mxu0 0.0
    %1364 = vmatprep.subr.mxu0 0.0
    %1365 = vmatpush2.msra.mxu0 0.0
    %1366 = vmatprep.subr.mxu0 0.0
    %1367 = vmatpush2.msra.mxu0 0.0
    %1368 = vmatprep.subr.mxu0 0.0
    %1369 = vmatpush2.msra.mxu0 0.0
    %1370 = vmatprep.subr.mxu0 0.0
    %1371 = vmatpush2.msra.mxu0 0.0
    %1372 = vmatprep.subr.mxu0 0.0
    %1373 = vmatpush2.msra.mxu0 0.0
    %1374 = vmatprep.subr.mxu0 0.0
    %1375 = vmatpush2.msra.mxu0 0.0
    %1376 = vmatprep.subr.mxu0 0.0
    %1377 = vmatpush2.msra.mxu0 0.0
    %1378 = vmatprep.subr.mxu0 0.0
    %1379 = vmatpush2.msra.mxu0 0.0
    %1380 = vmatprep.mubr.f32.mxu0 0.0
    %1381 = vmatmul.mubr.f32.gmra.mxu0 %v1311
    %v1382 = vpop.f32.mrf.mxu0
    %v1383 = vadd.f32 0.0, %v1382
    %v1384 = vpop.f32.mrf.mxu0
    %1385 = vmatprep.mubr.f32.mxu0 0.0
    %1386 = vmatmul.mubr.f32.gmra.mxu0 %v1314
    %v1387 = vpop.f32.mrf.mxu0
    %v1388 = vadd.f32 0.0, %v1387
    %v1389 = vpop.f32.mrf.mxu0
    %1390 = vdwg.mxu0
    %v1391 = vadd.f32 %v1104, %v1383
    %v1392 = vadd.f32 %v1105, %v1388
    %v1393 = vlaneseq
    %v1394 = vshrl.u32 %v1393, 7
    %v1395 = vsub.s32 1, %v1394
    %v1396 = vrot.slane %v53, %v1395
    %v1397 = vadd.f32 %v1391, %v1396
    %v1398 = vadd.f32 %v1392, %v1396
    %v1399 = vadd.f32 %v135, %v1397
    %v1400 = vadd.f32 %v140, %v1398
    %v1401 = vsel %vm167, %v1399, 0.0
    %1402 = vadd.xlane.f32.xlu0 %v1401
    %v1403 = vpop.xlane.xlu0 %1402
    %v1404 = vsel %vm167, %v1400, 0.0
    %1405 = vadd.xlane.f32.xlu0 %v1404
    %v1406 = vpop.xlane.xlu0 %1405
    %v1407 = vrcp.pop 32.0
    %v1408 = vmul.f32 %v1403, %v1407
    %v1409 = vmul.f32 %v1406, %v1407
    %v1410 = vsub.f32 %v1399, %v1408
    %v1411 = vsub.f32 %v1400, %v1409
    %v1412 = vmul.f32 %v1410, %v1410
    %v1413 = vmul.f32 %v1411, %v1411
    %v1414 = vsel %vm167, %v1412, 0.0
    %1415 = vadd.xlane.f32.xlu0 %v1414
    %v1416 = vpop.xlane.xlu0 %1415
    %v1417 = vsel %vm167, %v1413, 0.0
    %1418 = vadd.xlane.f32.xlu0 %v1417
    %v1419 = vpop.xlane.xlu0 %1418
    %v1420 = vmul.f32 %v1416, %v1407
    %v1421 = vmul.f32 %v1419, %v1407
    %v1422 = vadd.f32 %v1420, 1e-05
    %v1423 = vadd.f32 %v1421, 1e-05
    %v1424 = vrsqrt.pop %v1422
    %v1425 = vrsqrt.pop %v1423
    %v1426 = vmul.f32 %v1410, %v1424
    %v1427 = vmul.f32 %v1411, %v1425
    %v1428 = vlaneseq
    %v1429 = vshrl.u32 %v1428, 7
    %v1430 = vsub.s32 2, %v1429
    %v1431 = vrot.slane %v53, %v1430
    %v1432 = vmul.f32 %v1426, %v1431
    %v1433 = vmul.f32 %v1427, %v1431
    %v1434 = vlaneseq
    %v1435 = vshrl.u32 %v1434, 7
    %v1436 = vsub.s32 3, %v1435
    %v1437 = vrot.slane %v53, %v1436
    %v1438 = vadd.f32 %v1432, %v1437
    %v1439 = vadd.f32 %v1433, %v1437
    %v1440 = vlaneseq
    %v1441 = vshrl.u32 %v1440, 7
    %v1442 = vsub.s32 4, %v1441
    %v1443 = vrot.slane %v53, %v1442
    %v1445 = vsel %vm167, %v1438, 0
    %v1448 = vsel %vm167, %v1439, 0
    %1450 = vmatprep.subr.mxu0 0.0
    %1451 = vmatpush1.msra.mxu0 0.0
    %1452 = vmatprep.subr.mxu0 0.0
    %1453 = vmatpush1.msra.mxu0 0.0
    %1454 = vmatprep.subr.mxu0 0.0
    %1455 = vmatpush1.msra.mxu0 0.0
    %1456 = vmatprep.subr.mxu0 0.0
    %1457 = vmatpush1.msra.mxu0 0.0
    %1458 = vmatprep.subr.mxu0 0.0
    %1459 = vmatpush1.msra.mxu0 0.0
    %1460 = vmatprep.subr.mxu0 0.0
    %1461 = vmatpush1.msra.mxu0 0.0
    %1462 = vmatprep.subr.mxu0 0.0
    %1463 = vmatpush1.msra.mxu0 0.0
    %1464 = vmatprep.subr.mxu0 0.0
    %1465 = vmatpush1.msra.mxu0 0.0
    %1466 = vmatprep.subr.mxu0 0.0
    %1467 = vmatpush1.msra.mxu0 0.0
    %1468 = vmatprep.subr.mxu0 0.0
    %1469 = vmatpush1.msra.mxu0 0.0
    %1470 = vmatprep.subr.mxu0 0.0
    %1471 = vmatpush1.msra.mxu0 0.0
    %1472 = vmatprep.subr.mxu0 0.0
    %1473 = vmatpush1.msra.mxu0 0.0
    %1474 = vmatprep.subr.mxu0 0.0
    %1475 = vmatpush1.msra.mxu0 %v154
    %1476 = vmatprep.subr.mxu0 0.0
    %1477 = vmatpush1.msra.mxu0 %v153
    %1478 = vmatprep.subr.mxu0 0.0
    %1479 = vmatpush1.msra.mxu0 %v152
    %1480 = vmatprep.subr.mxu0 0.0
    %1481 = vmatpush1.msra.mxu0 %v151
    %1482 = vmatprep.subr.mxu0 0.0
    %1483 = vmatpush2.msra.mxu0 0.0
    %1484 = vmatprep.subr.mxu0 0.0
    %1485 = vmatpush2.msra.mxu0 0.0
    %1486 = vmatprep.subr.mxu0 0.0
    %1487 = vmatpush2.msra.mxu0 0.0
    %1488 = vmatprep.subr.mxu0 0.0
    %1489 = vmatpush2.msra.mxu0 0.0
    %1490 = vmatprep.subr.mxu0 0.0
    %1491 = vmatpush2.msra.mxu0 0.0
    %1492 = vmatprep.subr.mxu0 0.0
    %1493 = vmatpush2.msra.mxu0 0.0
    %1494 = vmatprep.subr.mxu0 0.0
    %1495 = vmatpush2.msra.mxu0 0.0
    %1496 = vmatprep.subr.mxu0 0.0
    %1497 = vmatpush2.msra.mxu0 0.0
    %1498 = vmatprep.subr.mxu0 0.0
    %1499 = vmatpush2.msra.mxu0 0.0
    %1500 = vmatprep.subr.mxu0 0.0
    %1501 = vmatpush2.msra.mxu0 0.0
    %1502 = vmatprep.subr.mxu0 0.0
    %1503 = vmatpush2.msra.mxu0 0.0
    %1504 = vmatprep.subr.mxu0 0.0
    %1505 = vmatpush2.msra.mxu0 0.0
    %1506 = vmatprep.subr.mxu0 0.0
    %1507 = vmatpush2.msra.mxu0 0.0
    %1508 = vmatprep.subr.mxu0 0.0
    %1509 = vmatpush2.msra.mxu0 0.0
    %1510 = vmatprep.subr.mxu0 0.0
    %1511 = vmatpush2.msra.mxu0 0.0
    %1512 = vmatprep.subr.mxu0 0.0
    %1513 = vmatpush2.msra.mxu0 0.0
    %1514 = vmatprep.mubr.f32.mxu0 0.0
    %1515 = vmatmul.mubr.f32.gmra.mxu0 %v1445
    %v1516 = vpop.f32.mrf.mxu0
    %v1517 = vadd.f32 %v1443, %v1516
    %v1518 = vpop.f32.mrf.mxu0
    %1519 = vmatprep.mubr.f32.mxu0 0.0
    %1520 = vmatmul.mubr.f32.gmra.mxu0 %v1448
    %v1521 = vpop.f32.mrf.mxu0
    %v1522 = vadd.f32 %v1443, %v1521
    %v1523 = vpop.f32.mrf.mxu0
    %1524 = vdwg.mxu0
    %v1525 = vmax.f32 %v1517, 0.0
    %v1526 = vmax.f32 %v1522, 0.0
    %v1527 = vlaneseq
    %v1528 = vshrl.u32 %v1527, 7
    %v1529 = vsub.s32 5, %v1528
    %v1530 = vrot.slane %v53, %v1529
    %vm1531 = vcmask 523264
    %v1533 = vsel %vm1531, %v1525, 0
    %v1536 = vsel %vm1531, %v1526, 0
    %1538 = vmatprep.subr.mxu0 0.0
    %1539 = vmatpush1.msra.mxu0 0.0
    %1540 = vmatprep.subr.mxu0 0.0
    %1541 = vmatpush1.msra.mxu0 0.0
    %1542 = vmatprep.subr.mxu0 0.0
    %1543 = vmatpush1.msra.mxu0 0.0
    %1544 = vmatprep.subr.mxu0 0.0
    %1545 = vmatpush1.msra.mxu0 0.0
    %1546 = vmatprep.subr.mxu0 0.0
    %1547 = vmatpush1.msra.mxu0 0.0
    %1548 = vmatprep.subr.mxu0 0.0
    %1549 = vmatpush1.msra.mxu0 0.0
    %1550 = vmatprep.subr.mxu0 0.0
    %1551 = vmatpush1.msra.mxu0 0.0
    %1552 = vmatprep.subr.mxu0 0.0
    %1553 = vmatpush1.msra.mxu0 0.0
    %1554 = vmatprep.subr.mxu0 0.0
    %1555 = vmatpush1.msra.mxu0 %v162
    %1556 = vmatprep.subr.mxu0 0.0
    %1557 = vmatpush1.msra.mxu0 %v161
    %1558 = vmatprep.subr.mxu0 0.0
    %1559 = vmatpush1.msra.mxu0 %v160
    %1560 = vmatprep.subr.mxu0 0.0
    %1561 = vmatpush1.msra.mxu0 %v159
    %1562 = vmatprep.subr.mxu0 0.0
    %1563 = vmatpush1.msra.mxu0 %v158
    %1564 = vmatprep.subr.mxu0 0.0
    %1565 = vmatpush1.msra.mxu0 %v157
    %1566 = vmatprep.subr.mxu0 0.0
    %1567 = vmatpush1.msra.mxu0 %v156
    %1568 = vmatprep.subr.mxu0 0.0
    %1569 = vmatpush1.msra.mxu0 %v155
    %1570 = vmatprep.subr.mxu0 0.0
    %1571 = vmatpush2.msra.mxu0 0.0
    %1572 = vmatprep.subr.mxu0 0.0
    %1573 = vmatpush2.msra.mxu0 0.0
    %1574 = vmatprep.subr.mxu0 0.0
    %1575 = vmatpush2.msra.mxu0 0.0
    %1576 = vmatprep.subr.mxu0 0.0
    %1577 = vmatpush2.msra.mxu0 0.0
    %1578 = vmatprep.subr.mxu0 0.0
    %1579 = vmatpush2.msra.mxu0 0.0
    %1580 = vmatprep.subr.mxu0 0.0
    %1581 = vmatpush2.msra.mxu0 0.0
    %1582 = vmatprep.subr.mxu0 0.0
    %1583 = vmatpush2.msra.mxu0 0.0
    %1584 = vmatprep.subr.mxu0 0.0
    %1585 = vmatpush2.msra.mxu0 0.0
    %1586 = vmatprep.subr.mxu0 0.0
    %1587 = vmatpush2.msra.mxu0 0.0
    %1588 = vmatprep.subr.mxu0 0.0
    %1589 = vmatpush2.msra.mxu0 0.0
    %1590 = vmatprep.subr.mxu0 0.0
    %1591 = vmatpush2.msra.mxu0 0.0
    %1592 = vmatprep.subr.mxu0 0.0
    %1593 = vmatpush2.msra.mxu0 0.0
    %1594 = vmatprep.subr.mxu0 0.0
    %1595 = vmatpush2.msra.mxu0 0.0
    %1596 = vmatprep.subr.mxu0 0.0
    %1597 = vmatpush2.msra.mxu0 0.0
    %1598 = vmatprep.subr.mxu0 0.0
    %1599 = vmatpush2.msra.mxu0 0.0
    %1600 = vmatprep.subr.mxu0 0.0
    %1601 = vmatpush2.msra.mxu0 0.0
    %1602 = vmatprep.mubr.f32.mxu0 0.0
    %1603 = vmatmul.mubr.f32.gmra.mxu0 %v1533
    %v1604 = vpop.f32.mrf.mxu0
    %v1605 = vadd.f32 %v1530, %v1604
    %v1606 = vpop.f32.mrf.mxu0
    %1607 = vmatprep.mubr.f32.mxu0 0.0
    %1608 = vmatmul.mubr.f32.gmra.mxu0 %v1536
    %v1609 = vpop.f32.mrf.mxu0
    %v1610 = vadd.f32 %v1530, %v1609
    %v1611 = vpop.f32.mrf.mxu0
    %1612 = vdwg.mxu0
    %v1613 = vadd.f32 %v1438, %v1605
    %v1614 = vadd.f32 %v1439, %v1610
    %v1615 = vsel %vm167, %v1613, 0.0
    %1616 = vadd.xlane.f32.xlu0 %v1615
    %v1617 = vpop.xlane.xlu0 %1616
    %v1618 = vsel %vm167, %v1614, 0.0
    %1619 = vadd.xlane.f32.xlu0 %v1618
    %v1620 = vpop.xlane.xlu0 %1619
    %v1621 = vmul.f32 %v1617, %v1407
    %v1622 = vmul.f32 %v1620, %v1407
    %v1623 = vsub.f32 %v1613, %v1621
    %v1624 = vsub.f32 %v1614, %v1622
    %v1625 = vmul.f32 %v1623, %v1623
    %v1626 = vmul.f32 %v1624, %v1624
    %v1627 = vsel %vm167, %v1625, 0.0
    %1628 = vadd.xlane.f32.xlu0 %v1627
    %v1629 = vpop.xlane.xlu0 %1628
    %v1630 = vsel %vm167, %v1626, 0.0
    %1631 = vadd.xlane.f32.xlu0 %v1630
    %v1632 = vpop.xlane.xlu0 %1631
    %v1633 = vmul.f32 %v1629, %v1407
    %v1634 = vmul.f32 %v1632, %v1407
    %v1635 = vadd.f32 %v1633, 1e-05
    %v1636 = vadd.f32 %v1634, 1e-05
    %v1637 = vrsqrt.pop %v1635
    %v1638 = vrsqrt.pop %v1636
    %v1639 = vmul.f32 %v1623, %v1637
    %v1640 = vmul.f32 %v1624, %v1638
    %v1641 = vlaneseq
    %v1642 = vshrl.u32 %v1641, 7
    %v1643 = vsub.s32 6, %v1642
    %v1644 = vrot.slane %v53, %v1643
    %v1645 = vmul.f32 %v1639, %v1644
    %v1646 = vmul.f32 %v1640, %v1644
    %v1647 = vlaneseq
    %v1648 = vshrl.u32 %v1647, 7
    %v1649 = vsub.s32 7, %v1648
    %v1650 = vrot.slane %v53, %v1649
    %v1651 = vadd.f32 %v1645, %v1650
    %v1652 = vadd.f32 %v1646, %v1650
    %s1653 = scalar_lea.vmem [#allocation4], 160
    %v1654 = vld [vmem:[%s1653] sm:$0xff]
    %v1655 = vld [vmem:[%s1653 + $0x8] sm:$0xff]
    %v1656 = vld [vmem:[%s1653 + $0x10] sm:$0xff]
    %v1657 = vld [vmem:[%s1653 + $0x18] sm:$0xff]
    %v1658 = vld [vmem:[%s1653 + $0x20] sm:$0xff]
    %v1659 = vld [vmem:[%s1653 + $0x28] sm:$0xff]
    %v1660 = vld [vmem:[%s1653 + $0x30] sm:$0xff]
    %v1661 = vld [vmem:[%s1653 + $0x38] sm:$0xff]
    %v1662 = vld [vmem:[%s1653 + $0x40] sm:$0xff]
    %v1663 = vld [vmem:[%s1653 + $0x48] sm:$0xff]
    %v1664 = vld [vmem:[%s1653 + $0x50] sm:$0xff]
    %v1665 = vld [vmem:[%s1653 + $0x58] sm:$0xff]
    %v1666 = vld [vmem:[%s1653 + $0x60] sm:$0xff]
    %v1667 = vld [vmem:[%s1653 + $0x68] sm:$0xff]
    %v1668 = vld [vmem:[%s1653 + $0x70] sm:$0xff]
    %v1669 = vld [vmem:[%s1653 + $0x78] sm:$0xff]
    %v1670 = vld [vmem:[%s1653 + $0x80] sm:$0xff]
    %v1671 = vld [vmem:[%s1653 + $0x88] sm:$0xff]
    %v1672 = vld [vmem:[%s1653 + $0x90] sm:$0xff]
    %v1673 = vld [vmem:[%s1653 + $0x98] sm:$0xff]
    %v1674 = vlaneseq
    %v1675 = vshrl.u32 %v1674, 7
    %v1676 = vsub.s32 0, %v1675
    %v1677 = vrot.slane %v54, %v1676
    %v1679 = vsel %vm167, %v1651, 0
    %v1682 = vsel %vm167, %v1652, 0
    %1684 = vmatprep.subr.mxu0 0.0
    %1685 = vmatpush1.msra.mxu0 0.0
    %1686 = vmatprep.subr.mxu0 0.0
    %1687 = vmatpush1.msra.mxu0 0.0
    %1688 = vmatprep.subr.mxu0 0.0
    %1689 = vmatpush1.msra.mxu0 0.0
    %1690 = vmatprep.subr.mxu0 0.0
    %1691 = vmatpush1.msra.mxu0 0.0
    %1692 = vmatprep.subr.mxu0 0.0
    %1693 = vmatpush1.msra.mxu0 0.0
    %1694 = vmatprep.subr.mxu0 0.0
    %1695 = vmatpush1.msra.mxu0 0.0
    %1696 = vmatprep.subr.mxu0 0.0
    %1697 = vmatpush1.msra.mxu0 0.0
    %1698 = vmatprep.subr.mxu0 0.0
    %1699 = vmatpush1.msra.mxu0 0.0
    %1700 = vmatprep.subr.mxu0 0.0
    %1701 = vmatpush1.msra.mxu0 0.0
    %1702 = vmatprep.subr.mxu0 0.0
    %1703 = vmatpush1.msra.mxu0 0.0
    %1704 = vmatprep.subr.mxu0 0.0
    %1705 = vmatpush1.msra.mxu0 0.0
    %1706 = vmatprep.subr.mxu0 0.0
    %1707 = vmatpush1.msra.mxu0 0.0
    %1708 = vmatprep.subr.mxu0 0.0
    %1709 = vmatpush1.msra.mxu0 %v1657
    %1710 = vmatprep.subr.mxu0 0.0
    %1711 = vmatpush1.msra.mxu0 %v1656
    %1712 = vmatprep.subr.mxu0 0.0
    %1713 = vmatpush1.msra.mxu0 %v1655
    %1714 = vmatprep.subr.mxu0 0.0
    %1715 = vmatpush1.msra.mxu0 %v1654
    %1716 = vmatprep.subr.mxu0 0.0
    %1717 = vmatpush2.msra.mxu0 0.0
    %1718 = vmatprep.subr.mxu0 0.0
    %1719 = vmatpush2.msra.mxu0 0.0
    %1720 = vmatprep.subr.mxu0 0.0
    %1721 = vmatpush2.msra.mxu0 0.0
    %1722 = vmatprep.subr.mxu0 0.0
    %1723 = vmatpush2.msra.mxu0 0.0
    %1724 = vmatprep.subr.mxu0 0.0
    %1725 = vmatpush2.msra.mxu0 0.0
    %1726 = vmatprep.subr.mxu0 0.0
    %1727 = vmatpush2.msra.mxu0 0.0
    %1728 = vmatprep.subr.mxu0 0.0
    %1729 = vmatpush2.msra.mxu0 0.0
    %1730 = vmatprep.subr.mxu0 0.0
    %1731 = vmatpush2.msra.mxu0 0.0
    %1732 = vmatprep.subr.mxu0 0.0
    %1733 = vmatpush2.msra.mxu0 0.0
    %1734 = vmatprep.subr.mxu0 0.0
    %1735 = vmatpush2.msra.mxu0 0.0
    %1736 = vmatprep.subr.mxu0 0.0
    %1737 = vmatpush2.msra.mxu0 0.0
    %1738 = vmatprep.subr.mxu0 0.0
    %1739 = vmatpush2.msra.mxu0 0.0
    %1740 = vmatprep.subr.mxu0 0.0
    %1741 = vmatpush2.msra.mxu0 0.0
    %1742 = vmatprep.subr.mxu0 0.0
    %1743 = vmatpush2.msra.mxu0 0.0
    %1744 = vmatprep.subr.mxu0 0.0
    %1745 = vmatpush2.msra.mxu0 0.0
    %1746 = vmatprep.subr.mxu0 0.0
    %1747 = vmatpush2.msra.mxu0 0.0
    %1748 = vmatprep.mubr.f32.mxu0 0.0
    %1749 = vmatmul.mubr.f32.gmra.mxu0 %v1679
    %v1750 = vpop.f32.mrf.mxu0
    %v1751 = vadd.f32 %v1677, %v1750
    %v1752 = vpop.f32.mrf.mxu0
    %1753 = vmatprep.mubr.f32.mxu0 0.0
    %1754 = vmatmul.mubr.f32.gmra.mxu0 %v1682
    %v1755 = vpop.f32.mrf.mxu0
    %v1756 = vadd.f32 %v1677, %v1755
    %v1757 = vpop.f32.mrf.mxu0
    %1758 = vdwg.mxu0
    %1761 = vrot.lane.b32.xlu0 %v1751, 96
    %v1762 = vpop.permute.xlu0 %1761
    %1763 = vrot.lane.b32.xlu0 %v1756, 96
    %v1764 = vpop.permute.xlu0 %1763
    %v1765 = vsel %vm255, %v1751, 0
    %v1767 = vsel %vm255, %v1756, 0
    %v1769 = vsel %vm255, %v1762, 0
    %v1771 = vsel %vm255, %v1764, 0
    %1773 = vmatprep.subr.mxu0 0.0
    %1774 = vmatpush1.xpose.msra.mxu0 0.0
    %1775 = vmatprep.subr.mxu0 0.0
    %1776 = vmatpush1.xpose.msra.mxu0 0.0
    %1777 = vmatprep.subr.mxu0 0.0
    %1778 = vmatpush1.xpose.msra.mxu0 0.0
    %1779 = vmatprep.subr.mxu0 0.0
    %1780 = vmatpush1.xpose.msra.mxu0 0.0
    %1781 = vmatprep.subr.mxu0 0.0
    %1782 = vmatpush1.xpose.msra.mxu0 0.0
    %1783 = vmatprep.subr.mxu0 0.0
    %1784 = vmatpush1.xpose.msra.mxu0 0.0
    %1785 = vmatprep.subr.mxu0 0.0
    %1786 = vmatpush1.xpose.msra.mxu0 0.0
    %1787 = vmatprep.subr.mxu0 0.0
    %1788 = vmatpush1.xpose.msra.mxu0 0.0
    %1789 = vmatprep.subr.mxu0 0.0
    %1790 = vmatpush1.xpose.msra.mxu0 0.0
    %1791 = vmatprep.subr.mxu0 0.0
    %1792 = vmatpush1.xpose.msra.mxu0 0.0
    %1793 = vmatprep.subr.mxu0 0.0
    %1794 = vmatpush1.xpose.msra.mxu0 0.0
    %1795 = vmatprep.subr.mxu0 0.0
    %1796 = vmatpush1.xpose.msra.mxu0 0.0
    %1797 = vmatprep.subr.mxu0 0.0
    %1798 = vmatpush1.xpose.msra.mxu0 0.0
    %1799 = vmatprep.subr.mxu0 0.0
    %1800 = vmatpush1.xpose.msra.mxu0 0.0
    %1801 = vmatprep.subr.mxu0 0.0
    %1802 = vmatpush1.xpose.msra.mxu0 %v1771
    %1803 = vmatprep.subr.mxu0 0.0
    %1804 = vmatpush1.xpose.msra.mxu0 %v1769
    %1805 = vmatprep.subr.mxu0 0.0
    %1806 = vmatpush2.xpose.msra.mxu0 0.0
    %1807 = vmatprep.subr.mxu0 0.0
    %1808 = vmatpush2.xpose.msra.mxu0 0.0
    %1809 = vmatprep.subr.mxu0 0.0
    %1810 = vmatpush2.xpose.msra.mxu0 0.0
    %1811 = vmatprep.subr.mxu0 0.0
    %1812 = vmatpush2.xpose.msra.mxu0 0.0
    %1813 = vmatprep.subr.mxu0 0.0
    %1814 = vmatpush2.xpose.msra.mxu0 0.0
    %1815 = vmatprep.subr.mxu0 0.0
    %1816 = vmatpush2.xpose.msra.mxu0 0.0
    %1817 = vmatprep.subr.mxu0 0.0
    %1818 = vmatpush2.xpose.msra.mxu0 0.0
    %1819 = vmatprep.subr.mxu0 0.0
    %1820 = vmatpush2.xpose.msra.mxu0 0.0
    %1821 = vmatprep.subr.mxu0 0.0
    %1822 = vmatpush2.xpose.msra.mxu0 0.0
    %1823 = vmatprep.subr.mxu0 0.0
    %1824 = vmatpush2.xpose.msra.mxu0 0.0
    %1825 = vmatprep.subr.mxu0 0.0
    %1826 = vmatpush2.xpose.msra.mxu0 0.0
    %1827 = vmatprep.subr.mxu0 0.0
    %1828 = vmatpush2.xpose.msra.mxu0 0.0
    %1829 = vmatprep.subr.mxu0 0.0
    %1830 = vmatpush2.xpose.msra.mxu0 0.0
    %1831 = vmatprep.subr.mxu0 0.0
    %1832 = vmatpush2.xpose.msra.mxu0 0.0
    %1833 = vmatprep.subr.mxu0 0.0
    %1834 = vmatpush2.xpose.msra.mxu0 0.0
    %1835 = vmatprep.subr.mxu0 0.0
    %1836 = vmatpush2.xpose.msra.mxu0 0.0
    %1837 = vmatprep.mubr.f32.mxu0 0.0
    %1838 = vmatmul.mubr.f32.gmra.mxu0 %v1765
    %v1839 = vpop.f32.mrf.mxu0
    %v1840 = vadd.f32 0.0, %v1839
    %v1841 = vpop.f32.mrf.mxu0
    %1842 = vmatprep.mubr.f32.mxu0 0.0
    %1843 = vmatmul.mubr.f32.gmra.mxu0 %v1767
    %v1844 = vpop.f32.mrf.mxu0
    %v1845 = vadd.f32 0.0, %v1844
    %v1846 = vpop.f32.mrf.mxu0
    %1847 = vdwg.mxu0
    %v1848 = vmul.f32 %v1840, 0.35355338
    %v1849 = vmul.f32 %v1845, 0.35355338
    %v1850 = vadd.f32 %v1848, %v45
    %v1851 = vadd.f32 %v1849, %v46
    %v1852 = vsel %vm343, %v1850, -inf
    %1853 = vmax.xlane.f32.xlu0 %v1852
    %v1854 = vpop.xlane.xlu0 %1853
    %v1855 = vsel %vm343, %v1851, -inf
    %1856 = vmax.xlane.f32.xlu0 %v1855
    %v1857 = vpop.xlane.xlu0 %1856
    %v1858 = vsub.f32 %v1850, %v1854
    %v1859 = vsub.f32 %v1851, %v1857
    %v1860 = vmul.f32 %v1858, 1.442695
    %v1861 = vpow.pop %v1860
    %v1862 = vmul.f32 %v1859, 1.442695
    %v1863 = vpow.pop %v1862
    %v1864 = vsel %vm343, %v1861, 0.0
    %1865 = vadd.xlane.f32.xlu0 %v1864
    %v1866 = vpop.xlane.xlu0 %1865
    %v1867 = vsel %vm343, %v1863, 0.0
    %1868 = vadd.xlane.f32.xlu0 %v1867
    %v1869 = vpop.xlane.xlu0 %1868
    %v1870 = vrcp.pop %v1866
    %v1871 = vmul.f32 %v1861, %v1870
    %v1872 = vrcp.pop %v1869
    %v1873 = vmul.f32 %v1863, %v1872
    %1874 = vrot.lane.b32.xlu0 %v1751, 64
    %v1875 = vpop.permute.xlu0 %1874
    %1876 = vrot.lane.b32.xlu0 %v1756, 64
    %v1877 = vpop.permute.xlu0 %1876
    %v1881 = vsel %vm343, %v1871, 0
    %v1884 = vsel %vm343, %v1873, 0
    %1886 = vmatprep.subr.mxu0 0.0
    %1887 = vmatpush1.msra.mxu0 0.0
    %1888 = vmatprep.subr.mxu0 0.0
    %1889 = vmatpush1.msra.mxu0 0.0
    %1890 = vmatprep.subr.mxu0 0.0
    %1891 = vmatpush1.msra.mxu0 0.0
    %1892 = vmatprep.subr.mxu0 0.0
    %1893 = vmatpush1.msra.mxu0 0.0
    %1894 = vmatprep.subr.mxu0 0.0
    %1895 = vmatpush1.msra.mxu0 0.0
    %1896 = vmatprep.subr.mxu0 0.0
    %1897 = vmatpush1.msra.mxu0 0.0
    %1898 = vmatprep.subr.mxu0 0.0
    %1899 = vmatpush1.msra.mxu0 0.0
    %1900 = vmatprep.subr.mxu0 0.0
    %1901 = vmatpush1.msra.mxu0 0.0
    %1902 = vmatprep.subr.mxu0 0.0
    %1903 = vmatpush1.msra.mxu0 0.0
    %1904 = vmatprep.subr.mxu0 0.0
    %1905 = vmatpush1.msra.mxu0 0.0
    %1906 = vmatprep.subr.mxu0 0.0
    %1907 = vmatpush1.msra.mxu0 0.0
    %1908 = vmatprep.subr.mxu0 0.0
    %1909 = vmatpush1.msra.mxu0 0.0
    %1910 = vmatprep.subr.mxu0 0.0
    %1911 = vmatpush1.msra.mxu0 0.0
    %1912 = vmatprep.subr.mxu0 0.0
    %1913 = vmatpush1.msra.mxu0 0.0
    %1914 = vmatprep.subr.mxu0 0.0
    %1915 = vmatpush1.msra.mxu0 %v1877
    %1916 = vmatprep.subr.mxu0 0.0
    %1917 = vmatpush1.msra.mxu0 %v1875
    %1918 = vmatprep.subr.mxu0 0.0
    %1919 = vmatpush2.msra.mxu0 0.0
    %1920 = vmatprep.subr.mxu0 0.0
    %1921 = vmatpush2.msra.mxu0 0.0
    %1922 = vmatprep.subr.mxu0 0.0
    %1923 = vmatpush2.msra.mxu0 0.0
    %1924 = vmatprep.subr.mxu0 0.0
    %1925 = vmatpush2.msra.mxu0 0.0
    %1926 = vmatprep.subr.mxu0 0.0
    %1927 = vmatpush2.msra.mxu0 0.0
    %1928 = vmatprep.subr.mxu0 0.0
    %1929 = vmatpush2.msra.mxu0 0.0
    %1930 = vmatprep.subr.mxu0 0.0
    %1931 = vmatpush2.msra.mxu0 0.0
    %1932 = vmatprep.subr.mxu0 0.0
    %1933 = vmatpush2.msra.mxu0 0.0
    %1934 = vmatprep.subr.mxu0 0.0
    %1935 = vmatpush2.msra.mxu0 0.0
    %1936 = vmatprep.subr.mxu0 0.0
    %1937 = vmatpush2.msra.mxu0 0.0
    %1938 = vmatprep.subr.mxu0 0.0
    %1939 = vmatpush2.msra.mxu0 0.0
    %1940 = vmatprep.subr.mxu0 0.0
    %1941 = vmatpush2.msra.mxu0 0.0
    %1942 = vmatprep.subr.mxu0 0.0
    %1943 = vmatpush2.msra.mxu0 0.0
    %1944 = vmatprep.subr.mxu0 0.0
    %1945 = vmatpush2.msra.mxu0 0.0
    %1946 = vmatprep.subr.mxu0 0.0
    %1947 = vmatpush2.msra.mxu0 0.0
    %1948 = vmatprep.subr.mxu0 0.0
    %1949 = vmatpush2.msra.mxu0 0.0
    %1950 = vmatprep.mubr.f32.mxu0 0.0
    %1951 = vmatmul.mubr.f32.gmra.mxu0 %v1881
    %v1952 = vpop.f32.mrf.mxu0
    %v1953 = vadd.f32 0.0, %v1952
    %v1954 = vpop.f32.mrf.mxu0
    %1955 = vmatprep.mubr.f32.mxu0 0.0
    %1956 = vmatmul.mubr.f32.gmra.mxu0 %v1884
    %v1957 = vpop.f32.mrf.mxu0
    %v1958 = vadd.f32 0.0, %v1957
    %v1959 = vpop.f32.mrf.mxu0
    %1960 = vdwg.mxu0
    %1961 = vrot.lane.b32.xlu0 %v1751, 120
    %v1962 = vpop.permute.xlu0 %1961
    %1963 = vrot.lane.b32.xlu0 %v1756, 120
    %v1964 = vpop.permute.xlu0 %1963
    %1965 = vrot.lane.b32.xlu0 %v1751, 88
    %v1966 = vpop.permute.xlu0 %1965
    %1967 = vrot.lane.b32.xlu0 %v1756, 88
    %v1968 = vpop.permute.xlu0 %1967
    %v1969 = vsel %vm255, %v1962, 0
    %v1971 = vsel %vm255, %v1964, 0
    %v1973 = vsel %vm255, %v1966, 0
    %v1975 = vsel %vm255, %v1968, 0
    %1977 = vmatprep.subr.mxu0 0.0
    %1978 = vmatpush1.xpose.msra.mxu0 0.0
    %1979 = vmatprep.subr.mxu0 0.0
    %1980 = vmatpush1.xpose.msra.mxu0 0.0
    %1981 = vmatprep.subr.mxu0 0.0
    %1982 = vmatpush1.xpose.msra.mxu0 0.0
    %1983 = vmatprep.subr.mxu0 0.0
    %1984 = vmatpush1.xpose.msra.mxu0 0.0
    %1985 = vmatprep.subr.mxu0 0.0
    %1986 = vmatpush1.xpose.msra.mxu0 0.0
    %1987 = vmatprep.subr.mxu0 0.0
    %1988 = vmatpush1.xpose.msra.mxu0 0.0
    %1989 = vmatprep.subr.mxu0 0.0
    %1990 = vmatpush1.xpose.msra.mxu0 0.0
    %1991 = vmatprep.subr.mxu0 0.0
    %1992 = vmatpush1.xpose.msra.mxu0 0.0
    %1993 = vmatprep.subr.mxu0 0.0
    %1994 = vmatpush1.xpose.msra.mxu0 0.0
    %1995 = vmatprep.subr.mxu0 0.0
    %1996 = vmatpush1.xpose.msra.mxu0 0.0
    %1997 = vmatprep.subr.mxu0 0.0
    %1998 = vmatpush1.xpose.msra.mxu0 0.0
    %1999 = vmatprep.subr.mxu0 0.0
    %2000 = vmatpush1.xpose.msra.mxu0 0.0
    %2001 = vmatprep.subr.mxu0 0.0
    %2002 = vmatpush1.xpose.msra.mxu0 0.0
    %2003 = vmatprep.subr.mxu0 0.0
    %2004 = vmatpush1.xpose.msra.mxu0 0.0
    %2005 = vmatprep.subr.mxu0 0.0
    %2006 = vmatpush1.xpose.msra.mxu0 %v1975
    %2007 = vmatprep.subr.mxu0 0.0
    %2008 = vmatpush1.xpose.msra.mxu0 %v1973
    %2009 = vmatprep.subr.mxu0 0.0
    %2010 = vmatpush2.xpose.msra.mxu0 0.0
    %2011 = vmatprep.subr.mxu0 0.0
    %2012 = vmatpush2.xpose.msra.mxu0 0.0
    %2013 = vmatprep.subr.mxu0 0.0
    %2014 = vmatpush2.xpose.msra.mxu0 0.0
    %2015 = vmatprep.subr.mxu0 0.0
    %2016 = vmatpush2.xpose.msra.mxu0 0.0
    %2017 = vmatprep.subr.mxu0 0.0
    %2018 = vmatpush2.xpose.msra.mxu0 0.0
    %2019 = vmatprep.subr.mxu0 0.0
    %2020 = vmatpush2.xpose.msra.mxu0 0.0
    %2021 = vmatprep.subr.mxu0 0.0
    %2022 = vmatpush2.xpose.msra.mxu0 0.0
    %2023 = vmatprep.subr.mxu0 0.0
    %2024 = vmatpush2.xpose.msra.mxu0 0.0
    %2025 = vmatprep.subr.mxu0 0.0
    %2026 = vmatpush2.xpose.msra.mxu0 0.0
    %2027 = vmatprep.subr.mxu0 0.0
    %2028 = vmatpush2.xpose.msra.mxu0 0.0
    %2029 = vmatprep.subr.mxu0 0.0
    %2030 = vmatpush2.xpose.msra.mxu0 0.0
    %2031 = vmatprep.subr.mxu0 0.0
    %2032 = vmatpush2.xpose.msra.mxu0 0.0
    %2033 = vmatprep.subr.mxu0 0.0
    %2034 = vmatpush2.xpose.msra.mxu0 0.0
    %2035 = vmatprep.subr.mxu0 0.0
    %2036 = vmatpush2.xpose.msra.mxu0 0.0
    %2037 = vmatprep.subr.mxu0 0.0
    %2038 = vmatpush2.xpose.msra.mxu0 0.0
    %2039 = vmatprep.subr.mxu0 0.0
    %2040 = vmatpush2.xpose.msra.mxu0 0.0
    %2041 = vmatprep.mubr.f32.mxu0 0.0
    %2042 = vmatmul.mubr.f32.gmra.mxu0 %v1969
    %v2043 = vpop.f32.mrf.mxu0
    %v2044 = vadd.f32 0.0, %v2043
    %v2045 = vpop.f32.mrf.mxu0
    %2046 = vmatprep.mubr.f32.mxu0 0.0
    %2047 = vmatmul.mubr.f32.gmra.mxu0 %v1971
    %v2048 = vpop.f32.mrf.mxu0
    %v2049 = vadd.f32 0.0, %v2048
    %v2050 = vpop.f32.mrf.mxu0
    %2051 = vdwg.mxu0
    %v2052 = vmul.f32 %v2044, 0.35355338
    %v2053 = vmul.f32 %v2049, 0.35355338
    %v2054 = vadd.f32 %v2052, %v45
    %v2055 = vadd.f32 %v2053, %v46
    %v2056 = vsel %vm343, %v2054, -inf
    %2057 = vmax.xlane.f32.xlu0 %v2056
    %v2058 = vpop.xlane.xlu0 %2057
    %v2059 = vsel %vm343, %v2055, -inf
    %2060 = vmax.xlane.f32.xlu0 %v2059
    %v2061 = vpop.xlane.xlu0 %2060
    %v2062 = vsub.f32 %v2054, %v2058
    %v2063 = vsub.f32 %v2055, %v2061
    %v2064 = vmul.f32 %v2062, 1.442695
    %v2065 = vpow.pop %v2064
    %v2066 = vmul.f32 %v2063, 1.442695
    %v2067 = vpow.pop %v2066
    %v2068 = vsel %vm343, %v2065, 0.0
    %2069 = vadd.xlane.f32.xlu0 %v2068
    %v2070 = vpop.xlane.xlu0 %2069
    %v2071 = vsel %vm343, %v2067, 0.0
    %2072 = vadd.xlane.f32.xlu0 %v2071
    %v2073 = vpop.xlane.xlu0 %2072
    %v2074 = vrcp.pop %v2070
    %v2075 = vmul.f32 %v2065, %v2074
    %v2076 = vrcp.pop %v2073
    %v2077 = vmul.f32 %v2067, %v2076
    %2078 = vrot.lane.b32.xlu0 %v1751, 56
    %v2079 = vpop.permute.xlu0 %2078
    %2080 = vrot.lane.b32.xlu0 %v1756, 56
    %v2081 = vpop.permute.xlu0 %2080
    %v2085 = vsel %vm343, %v2075, 0
    %v2088 = vsel %vm343, %v2077, 0
    %2090 = vmatprep.subr.mxu0 0.0
    %2091 = vmatpush1.msra.mxu0 0.0
    %2092 = vmatprep.subr.mxu0 0.0
    %2093 = vmatpush1.msra.mxu0 0.0
    %2094 = vmatprep.subr.mxu0 0.0
    %2095 = vmatpush1.msra.mxu0 0.0
    %2096 = vmatprep.subr.mxu0 0.0
    %2097 = vmatpush1.msra.mxu0 0.0
    %2098 = vmatprep.subr.mxu0 0.0
    %2099 = vmatpush1.msra.mxu0 0.0
    %2100 = vmatprep.subr.mxu0 0.0
    %2101 = vmatpush1.msra.mxu0 0.0
    %2102 = vmatprep.subr.mxu0 0.0
    %2103 = vmatpush1.msra.mxu0 0.0
    %2104 = vmatprep.subr.mxu0 0.0
    %2105 = vmatpush1.msra.mxu0 0.0
    %2106 = vmatprep.subr.mxu0 0.0
    %2107 = vmatpush1.msra.mxu0 0.0
    %2108 = vmatprep.subr.mxu0 0.0
    %2109 = vmatpush1.msra.mxu0 0.0
    %2110 = vmatprep.subr.mxu0 0.0
    %2111 = vmatpush1.msra.mxu0 0.0
    %2112 = vmatprep.subr.mxu0 0.0
    %2113 = vmatpush1.msra.mxu0 0.0
    %2114 = vmatprep.subr.mxu0 0.0
    %2115 = vmatpush1.msra.mxu0 0.0
    %2116 = vmatprep.subr.mxu0 0.0
    %2117 = vmatpush1.msra.mxu0 0.0
    %2118 = vmatprep.subr.mxu0 0.0
    %2119 = vmatpush1.msra.mxu0 %v2081
    %2120 = vmatprep.subr.mxu0 0.0
    %2121 = vmatpush1.msra.mxu0 %v2079
    %2122 = vmatprep.subr.mxu0 0.0
    %2123 = vmatpush2.msra.mxu0 0.0
    %2124 = vmatprep.subr.mxu0 0.0
    %2125 = vmatpush2.msra.mxu0 0.0
    %2126 = vmatprep.subr.mxu0 0.0
    %2127 = vmatpush2.msra.mxu0 0.0
    %2128 = vmatprep.subr.mxu0 0.0
    %2129 = vmatpush2.msra.mxu0 0.0
    %2130 = vmatprep.subr.mxu0 0.0
    %2131 = vmatpush2.msra.mxu0 0.0
    %2132 = vmatprep.subr.mxu0 0.0
    %2133 = vmatpush2.msra.mxu0 0.0
    %2134 = vmatprep.subr.mxu0 0.0
    %2135 = vmatpush2.msra.mxu0 0.0
    %2136 = vmatprep.subr.mxu0 0.0
    %2137 = vmatpush2.msra.mxu0 0.0
    %2138 = vmatprep.subr.mxu0 0.0
    %2139 = vmatpush2.msra.mxu0 0.0
    %2140 = vmatprep.subr.mxu0 0.0
    %2141 = vmatpush2.msra.mxu0 0.0
    %2142 = vmatprep.subr.mxu0 0.0
    %2143 = vmatpush2.msra.mxu0 0.0
    %2144 = vmatprep.subr.mxu0 0.0
    %2145 = vmatpush2.msra.mxu0 0.0
    %2146 = vmatprep.subr.mxu0 0.0
    %2147 = vmatpush2.msra.mxu0 0.0
    %2148 = vmatprep.subr.mxu0 0.0
    %2149 = vmatpush2.msra.mxu0 0.0
    %2150 = vmatprep.subr.mxu0 0.0
    %2151 = vmatpush2.msra.mxu0 0.0
    %2152 = vmatprep.subr.mxu0 0.0
    %2153 = vmatpush2.msra.mxu0 0.0
    %2154 = vmatprep.mubr.f32.mxu0 0.0
    %2155 = vmatmul.mubr.f32.gmra.mxu0 %v2085
    %v2156 = vpop.f32.mrf.mxu0
    %v2157 = vadd.f32 0.0, %v2156
    %v2158 = vpop.f32.mrf.mxu0
    %2159 = vmatprep.mubr.f32.mxu0 0.0
    %2160 = vmatmul.mubr.f32.gmra.mxu0 %v2088
    %v2161 = vpop.f32.mrf.mxu0
    %v2162 = vadd.f32 0.0, %v2161
    %v2163 = vpop.f32.mrf.mxu0
    %2164 = vdwg.mxu0
    %v2166 = vsel %vm255, %v2157, 0
    %v2169 = vsel %vm255, %v2162, 0
    %2171 = vmatprep.subr.mxu0 0.0
    %2172 = vmatpush1.msra.mxu0 0.0
    %2173 = vmatprep.subr.mxu0 0.0
    %2174 = vmatpush1.msra.mxu0 0.0
    %2175 = vmatprep.subr.mxu0 0.0
    %2176 = vmatpush1.msra.mxu0 0.0
    %2177 = vmatprep.subr.mxu0 0.0
    %2178 = vmatpush1.msra.mxu0 0.0
    %2179 = vmatprep.subr.mxu0 0.0
    %2180 = vmatpush1.msra.mxu0 0.0
    %2181 = vmatprep.subr.mxu0 0.0
    %2182 = vmatpush1.msra.mxu0 0.0
    %2183 = vmatprep.subr.mxu0 0.0
    %2184 = vmatpush1.msra.mxu0 0.0
    %2185 = vmatprep.subr.mxu0 0.0
    %2186 = vmatpush1.msra.mxu0 0.0
    %2187 = vmatprep.subr.mxu0 0.0
    %2188 = vmatpush1.msra.mxu0 0.0
    %2189 = vmatprep.subr.mxu0 0.0
    %2190 = vmatpush1.msra.mxu0 0.0
    %2191 = vmatprep.subr.mxu0 0.0
    %2192 = vmatpush1.msra.mxu0 0.0
    %2193 = vmatprep.subr.mxu0 0.0
    %2194 = vmatpush1.msra.mxu0 0.0
    %2195 = vmatprep.subr.mxu0 0.0
    %2196 = vmatpush1.msra.mxu0 0.0
    %2197 = vmatprep.subr.mxu0 0.0
    %2198 = vmatpush1.msra.mxu0 0.0
    %2199 = vmatprep.subr.mxu0 0.0
    %2200 = vmatpush1.msra.mxu0 0.0
    %2201 = vmatprep.subr.mxu0 0.0
    %2202 = vmatpush1.msra.mxu0 %v1659
    %2203 = vmatprep.subr.mxu0 0.0
    %2204 = vmatpush2.msra.mxu0 0.0
    %2205 = vmatprep.subr.mxu0 0.0
    %2206 = vmatpush2.msra.mxu0 0.0
    %2207 = vmatprep.subr.mxu0 0.0
    %2208 = vmatpush2.msra.mxu0 0.0
    %2209 = vmatprep.subr.mxu0 0.0
    %2210 = vmatpush2.msra.mxu0 0.0
    %2211 = vmatprep.subr.mxu0 0.0
    %2212 = vmatpush2.msra.mxu0 0.0
    %2213 = vmatprep.subr.mxu0 0.0
    %2214 = vmatpush2.msra.mxu0 0.0
    %2215 = vmatprep.subr.mxu0 0.0
    %2216 = vmatpush2.msra.mxu0 0.0
    %2217 = vmatprep.subr.mxu0 0.0
    %2218 = vmatpush2.msra.mxu0 0.0
    %2219 = vmatprep.subr.mxu0 0.0
    %2220 = vmatpush2.msra.mxu0 0.0
    %2221 = vmatprep.subr.mxu0 0.0
    %2222 = vmatpush2.msra.mxu0 0.0
    %2223 = vmatprep.subr.mxu0 0.0
    %2224 = vmatpush2.msra.mxu0 0.0
    %2225 = vmatprep.subr.mxu0 0.0
    %2226 = vmatpush2.msra.mxu0 0.0
    %2227 = vmatprep.subr.mxu0 0.0
    %2228 = vmatpush2.msra.mxu0 0.0
    %2229 = vmatprep.subr.mxu0 0.0
    %2230 = vmatpush2.msra.mxu0 0.0
    %2231 = vmatprep.subr.mxu0 0.0
    %2232 = vmatpush2.msra.mxu0 0.0
    %2233 = vmatprep.subr.mxu0 0.0
    %2234 = vmatpush2.msra.mxu0 0.0
    %2235 = vmatprep.mubr.f32.mxu0 0.0
    %2236 = vmatmul.mubr.f32.gmra.mxu0 %v2166
    %v2237 = vpop.f32.mrf.mxu0
    %v2238 = vadd.f32 0.0, %v2237
    %v2239 = vpop.f32.mrf.mxu0
    %2240 = vmatprep.mubr.f32.mxu0 0.0
    %2241 = vmatmul.mubr.f32.gmra.mxu0 %v2169
    %v2242 = vpop.f32.mrf.mxu0
    %v2243 = vadd.f32 0.0, %v2242
    %v2244 = vpop.f32.mrf.mxu0
    %2245 = vdwg.mxu0
    %v2247 = vsel %vm255, %v1953, 0
    %v2250 = vsel %vm255, %v1958, 0
    %2252 = vmatprep.subr.mxu0 0.0
    %2253 = vmatpush1.msra.mxu0 0.0
    %2254 = vmatprep.subr.mxu0 0.0
    %2255 = vmatpush1.msra.mxu0 0.0
    %2256 = vmatprep.subr.mxu0 0.0
    %2257 = vmatpush1.msra.mxu0 0.0
    %2258 = vmatprep.subr.mxu0 0.0
    %2259 = vmatpush1.msra.mxu0 0.0
    %2260 = vmatprep.subr.mxu0 0.0
    %2261 = vmatpush1.msra.mxu0 0.0
    %2262 = vmatprep.subr.mxu0 0.0
    %2263 = vmatpush1.msra.mxu0 0.0
    %2264 = vmatprep.subr.mxu0 0.0
    %2265 = vmatpush1.msra.mxu0 0.0
    %2266 = vmatprep.subr.mxu0 0.0
    %2267 = vmatpush1.msra.mxu0 0.0
    %2268 = vmatprep.subr.mxu0 0.0
    %2269 = vmatpush1.msra.mxu0 0.0
    %2270 = vmatprep.subr.mxu0 0.0
    %2271 = vmatpush1.msra.mxu0 0.0
    %2272 = vmatprep.subr.mxu0 0.0
    %2273 = vmatpush1.msra.mxu0 0.0
    %2274 = vmatprep.subr.mxu0 0.0
    %2275 = vmatpush1.msra.mxu0 0.0
    %2276 = vmatprep.subr.mxu0 0.0
    %2277 = vmatpush1.msra.mxu0 0.0
    %2278 = vmatprep.subr.mxu0 0.0
    %2279 = vmatpush1.msra.mxu0 0.0
    %2280 = vmatprep.subr.mxu0 0.0
    %2281 = vmatpush1.msra.mxu0 0.0
    %2282 = vmatprep.subr.mxu0 0.0
    %2283 = vmatpush1.msra.mxu0 %v1658
    %2284 = vmatprep.subr.mxu0 0.0
    %2285 = vmatpush2.msra.mxu0 0.0
    %2286 = vmatprep.subr.mxu0 0.0
    %2287 = vmatpush2.msra.mxu0 0.0
    %2288 = vmatprep.subr.mxu0 0.0
    %2289 = vmatpush2.msra.mxu0 0.0
    %2290 = vmatprep.subr.mxu0 0.0
    %2291 = vmatpush2.msra.mxu0 0.0
    %2292 = vmatprep.subr.mxu0 0.0
    %2293 = vmatpush2.msra.mxu0 0.0
    %2294 = vmatprep.subr.mxu0 0.0
    %2295 = vmatpush2.msra.mxu0 0.0
    %2296 = vmatprep.subr.mxu0 0.0
    %2297 = vmatpush2.msra.mxu0 0.0
    %2298 = vmatprep.subr.mxu0 0.0
    %2299 = vmatpush2.msra.mxu0 0.0
    %2300 = vmatprep.subr.mxu0 0.0
    %2301 = vmatpush2.msra.mxu0 0.0
    %2302 = vmatprep.subr.mxu0 0.0
    %2303 = vmatpush2.msra.mxu0 0.0
    %2304 = vmatprep.subr.mxu0 0.0
    %2305 = vmatpush2.msra.mxu0 0.0
    %2306 = vmatprep.subr.mxu0 0.0
    %2307 = vmatpush2.msra.mxu0 0.0
    %2308 = vmatprep.subr.mxu0 0.0
    %2309 = vmatpush2.msra.mxu0 0.0
    %2310 = vmatprep.subr.mxu0 0.0
    %2311 = vmatpush2.msra.mxu0 0.0
    %2312 = vmatprep.subr.mxu0 0.0
    %2313 = vmatpush2.msra.mxu0 0.0
    %2314 = vmatprep.subr.mxu0 0.0
    %2315 = vmatpush2.msra.mxu0 0.0
    %2316 = vmatprep.mubr.f32.mxu0 0.0
    %2317 = vmatmul.mubr.f32.gmra.mxu0 %v2247
    %v2318 = vpop.f32.mrf.mxu0
    %v2319 = vadd.f32 %v2238, %v2318
    %v2320 = vpop.f32.mrf.mxu0
    %2321 = vmatprep.mubr.f32.mxu0 0.0
    %2322 = vmatmul.mubr.f32.gmra.mxu0 %v2250
    %v2323 = vpop.f32.mrf.mxu0
    %v2324 = vadd.f32 %v2243, %v2323
    %v2325 = vpop.f32.mrf.mxu0
    %2326 = vdwg.mxu0
    %2327 = vrot.lane.b32.xlu0 %v1751, 112
    %v2328 = vpop.permute.xlu0 %2327
    %2329 = vrot.lane.b32.xlu0 %v1756, 112
    %v2330 = vpop.permute.xlu0 %2329
    %2331 = vrot.lane.b32.xlu0 %v1751, 80
    %v2332 = vpop.permute.xlu0 %2331
    %2333 = vrot.lane.b32.xlu0 %v1756, 80
    %v2334 = vpop.permute.xlu0 %2333
    %v2335 = vsel %vm255, %v2328, 0
    %v2337 = vsel %vm255, %v2330, 0
    %v2339 = vsel %vm255, %v2332, 0
    %v2341 = vsel %vm255, %v2334, 0
    %2343 = vmatprep.subr.mxu0 0.0
    %2344 = vmatpush1.xpose.msra.mxu0 0.0
    %2345 = vmatprep.subr.mxu0 0.0
    %2346 = vmatpush1.xpose.msra.mxu0 0.0
    %2347 = vmatprep.subr.mxu0 0.0
    %2348 = vmatpush1.xpose.msra.mxu0 0.0
    %2349 = vmatprep.subr.mxu0 0.0
    %2350 = vmatpush1.xpose.msra.mxu0 0.0
    %2351 = vmatprep.subr.mxu0 0.0
    %2352 = vmatpush1.xpose.msra.mxu0 0.0
    %2353 = vmatprep.subr.mxu0 0.0
    %2354 = vmatpush1.xpose.msra.mxu0 0.0
    %2355 = vmatprep.subr.mxu0 0.0
    %2356 = vmatpush1.xpose.msra.mxu0 0.0
    %2357 = vmatprep.subr.mxu0 0.0
    %2358 = vmatpush1.xpose.msra.mxu0 0.0
    %2359 = vmatprep.subr.mxu0 0.0
    %2360 = vmatpush1.xpose.msra.mxu0 0.0
    %2361 = vmatprep.subr.mxu0 0.0
    %2362 = vmatpush1.xpose.msra.mxu0 0.0
    %2363 = vmatprep.subr.mxu0 0.0
    %2364 = vmatpush1.xpose.msra.mxu0 0.0
    %2365 = vmatprep.subr.mxu0 0.0
    %2366 = vmatpush1.xpose.msra.mxu0 0.0
    %2367 = vmatprep.subr.mxu0 0.0
    %2368 = vmatpush1.xpose.msra.mxu0 0.0
    %2369 = vmatprep.subr.mxu0 0.0
    %2370 = vmatpush1.xpose.msra.mxu0 0.0
    %2371 = vmatprep.subr.mxu0 0.0
    %2372 = vmatpush1.xpose.msra.mxu0 %v2341
    %2373 = vmatprep.subr.mxu0 0.0
    %2374 = vmatpush1.xpose.msra.mxu0 %v2339
    %2375 = vmatprep.subr.mxu0 0.0
    %2376 = vmatpush2.xpose.msra.mxu0 0.0
    %2377 = vmatprep.subr.mxu0 0.0
    %2378 = vmatpush2.xpose.msra.mxu0 0.0
    %2379 = vmatprep.subr.mxu0 0.0
    %2380 = vmatpush2.xpose.msra.mxu0 0.0
    %2381 = vmatprep.subr.mxu0 0.0
    %2382 = vmatpush2.xpose.msra.mxu0 0.0
    %2383 = vmatprep.subr.mxu0 0.0
    %2384 = vmatpush2.xpose.msra.mxu0 0.0
    %2385 = vmatprep.subr.mxu0 0.0
    %2386 = vmatpush2.xpose.msra.mxu0 0.0
    %2387 = vmatprep.subr.mxu0 0.0
    %2388 = vmatpush2.xpose.msra.mxu0 0.0
    %2389 = vmatprep.subr.mxu0 0.0
    %2390 = vmatpush2.xpose.msra.mxu0 0.0
    %2391 = vmatprep.subr.mxu0 0.0
    %2392 = vmatpush2.xpose.msra.mxu0 0.0
    %2393 = vmatprep.subr.mxu0 0.0
    %2394 = vmatpush2.xpose.msra.mxu0 0.0
    %2395 = vmatprep.subr.mxu0 0.0
    %2396 = vmatpush2.xpose.msra.mxu0 0.0
    %2397 = vmatprep.subr.mxu0 0.0
    %2398 = vmatpush2.xpose.msra.mxu0 0.0
    %2399 = vmatprep.subr.mxu0 0.0
    %2400 = vmatpush2.xpose.msra.mxu0 0.0
    %2401 = vmatprep.subr.mxu0 0.0
    %2402 = vmatpush2.xpose.msra.mxu0 0.0
    %2403 = vmatprep.subr.mxu0 0.0
    %2404 = vmatpush2.xpose.msra.mxu0 0.0
    %2405 = vmatprep.subr.mxu0 0.0
    %2406 = vmatpush2.xpose.msra.mxu0 0.0
    %2407 = vmatprep.mubr.f32.mxu0 0.0
    %2408 = vmatmul.mubr.f32.gmra.mxu0 %v2335
    %v2409 = vpop.f32.mrf.mxu0
    %v2410 = vadd.f32 0.0, %v2409
    %v2411 = vpop.f32.mrf.mxu0
    %2412 = vmatprep.mubr.f32.mxu0 0.0
    %2413 = vmatmul.mubr.f32.gmra.mxu0 %v2337
    %v2414 = vpop.f32.mrf.mxu0
    %v2415 = vadd.f32 0.0, %v2414
    %v2416 = vpop.f32.mrf.mxu0
    %2417 = vdwg.mxu0
    %v2418 = vmul.f32 %v2410, 0.35355338
    %v2419 = vmul.f32 %v2415, 0.35355338
    %v2420 = vadd.f32 %v2418, %v45
    %v2421 = vadd.f32 %v2419, %v46
    %v2422 = vsel %vm343, %v2420, -inf
    %2423 = vmax.xlane.f32.xlu0 %v2422
    %v2424 = vpop.xlane.xlu0 %2423
    %v2425 = vsel %vm343, %v2421, -inf
    %2426 = vmax.xlane.f32.xlu0 %v2425
    %v2427 = vpop.xlane.xlu0 %2426
    %v2428 = vsub.f32 %v2420, %v2424
    %v2429 = vsub.f32 %v2421, %v2427
    %v2430 = vmul.f32 %v2428, 1.442695
    %v2431 = vpow.pop %v2430
    %v2432 = vmul.f32 %v2429, 1.442695
    %v2433 = vpow.pop %v2432
    %v2434 = vsel %vm343, %v2431, 0.0
    %2435 = vadd.xlane.f32.xlu0 %v2434
    %v2436 = vpop.xlane.xlu0 %2435
    %v2437 = vsel %vm343, %v2433, 0.0
    %2438 = vadd.xlane.f32.xlu0 %v2437
    %v2439 = vpop.xlane.xlu0 %2438
    %v2440 = vrcp.pop %v2436
    %v2441 = vmul.f32 %v2431, %v2440
    %v2442 = vrcp.pop %v2439
    %v2443 = vmul.f32 %v2433, %v2442
    %2444 = vrot.lane.b32.xlu0 %v1751, 48
    %v2445 = vpop.permute.xlu0 %2444
    %2446 = vrot.lane.b32.xlu0 %v1756, 48
    %v2447 = vpop.permute.xlu0 %2446
    %v2451 = vsel %vm343, %v2441, 0
    %v2454 = vsel %vm343, %v2443, 0
    %2456 = vmatprep.subr.mxu0 0.0
    %2457 = vmatpush1.msra.mxu0 0.0
    %2458 = vmatprep.subr.mxu0 0.0
    %2459 = vmatpush1.msra.mxu0 0.0
    %2460 = vmatprep.subr.mxu0 0.0
    %2461 = vmatpush1.msra.mxu0 0.0
    %2462 = vmatprep.subr.mxu0 0.0
    %2463 = vmatpush1.msra.mxu0 0.0
    %2464 = vmatprep.subr.mxu0 0.0
    %2465 = vmatpush1.msra.mxu0 0.0
    %2466 = vmatprep.subr.mxu0 0.0
    %2467 = vmatpush1.msra.mxu0 0.0
    %2468 = vmatprep.subr.mxu0 0.0
    %2469 = vmatpush1.msra.mxu0 0.0
    %2470 = vmatprep.subr.mxu0 0.0
    %2471 = vmatpush1.msra.mxu0 0.0
    %2472 = vmatprep.subr.mxu0 0.0
    %2473 = vmatpush1.msra.mxu0 0.0
    %2474 = vmatprep.subr.mxu0 0.0
    %2475 = vmatpush1.msra.mxu0 0.0
    %2476 = vmatprep.subr.mxu0 0.0
    %2477 = vmatpush1.msra.mxu0 0.0
    %2478 = vmatprep.subr.mxu0 0.0
    %2479 = vmatpush1.msra.mxu0 0.0
    %2480 = vmatprep.subr.mxu0 0.0
    %2481 = vmatpush1.msra.mxu0 0.0
    %2482 = vmatprep.subr.mxu0 0.0
    %2483 = vmatpush1.msra.mxu0 0.0
    %2484 = vmatprep.subr.mxu0 0.0
    %2485 = vmatpush1.msra.mxu0 %v2447
    %2486 = vmatprep.subr.mxu0 0.0
    %2487 = vmatpush1.msra.mxu0 %v2445
    %2488 = vmatprep.subr.mxu0 0.0
    %2489 = vmatpush2.msra.mxu0 0.0
    %2490 = vmatprep.subr.mxu0 0.0
    %2491 = vmatpush2.msra.mxu0 0.0
    %2492 = vmatprep.subr.mxu0 0.0
    %2493 = vmatpush2.msra.mxu0 0.0
    %2494 = vmatprep.subr.mxu0 0.0
    %2495 = vmatpush2.msra.mxu0 0.0
    %2496 = vmatprep.subr.mxu0 0.0
    %2497 = vmatpush2.msra.mxu0 0.0
    %2498 = vmatprep.subr.mxu0 0.0
    %2499 = vmatpush2.msra.mxu0 0.0
    %2500 = vmatprep.subr.mxu0 0.0
    %2501 = vmatpush2.msra.mxu0 0.0
    %2502 = vmatprep.subr.mxu0 0.0
    %2503 = vmatpush2.msra.mxu0 0.0
    %2504 = vmatprep.subr.mxu0 0.0
    %2505 = vmatpush2.msra.mxu0 0.0
    %2506 = vmatprep.subr.mxu0 0.0
    %2507 = vmatpush2.msra.mxu0 0.0
    %2508 = vmatprep.subr.mxu0 0.0
    %2509 = vmatpush2.msra.mxu0 0.0
    %2510 = vmatprep.subr.mxu0 0.0
    %2511 = vmatpush2.msra.mxu0 0.0
    %2512 = vmatprep.subr.mxu0 0.0
    %2513 = vmatpush2.msra.mxu0 0.0
    %2514 = vmatprep.subr.mxu0 0.0
    %2515 = vmatpush2.msra.mxu0 0.0
    %2516 = vmatprep.subr.mxu0 0.0
    %2517 = vmatpush2.msra.mxu0 0.0
    %2518 = vmatprep.subr.mxu0 0.0
    %2519 = vmatpush2.msra.mxu0 0.0
    %2520 = vmatprep.mubr.f32.mxu0 0.0
    %2521 = vmatmul.mubr.f32.gmra.mxu0 %v2451
    %v2522 = vpop.f32.mrf.mxu0
    %v2523 = vadd.f32 0.0, %v2522
    %v2524 = vpop.f32.mrf.mxu0
    %2525 = vmatprep.mubr.f32.mxu0 0.0
    %2526 = vmatmul.mubr.f32.gmra.mxu0 %v2454
    %v2527 = vpop.f32.mrf.mxu0
    %v2528 = vadd.f32 0.0, %v2527
    %v2529 = vpop.f32.mrf.mxu0
    %2530 = vdwg.mxu0
    %v2532 = vsel %vm255, %v2523, 0
    %v2535 = vsel %vm255, %v2528, 0
    %2537 = vmatprep.subr.mxu0 0.0
    %2538 = vmatpush1.msra.mxu0 0.0
    %2539 = vmatprep.subr.mxu0 0.0
    %2540 = vmatpush1.msra.mxu0 0.0
    %2541 = vmatprep.subr.mxu0 0.0
    %2542 = vmatpush1.msra.mxu0 0.0
    %2543 = vmatprep.subr.mxu0 0.0
    %2544 = vmatpush1.msra.mxu0 0.0
    %2545 = vmatprep.subr.mxu0 0.0
    %2546 = vmatpush1.msra.mxu0 0.0
    %2547 = vmatprep.subr.mxu0 0.0
    %2548 = vmatpush1.msra.mxu0 0.0
    %2549 = vmatprep.subr.mxu0 0.0
    %2550 = vmatpush1.msra.mxu0 0.0
    %2551 = vmatprep.subr.mxu0 0.0
    %2552 = vmatpush1.msra.mxu0 0.0
    %2553 = vmatprep.subr.mxu0 0.0
    %2554 = vmatpush1.msra.mxu0 0.0
    %2555 = vmatprep.subr.mxu0 0.0
    %2556 = vmatpush1.msra.mxu0 0.0
    %2557 = vmatprep.subr.mxu0 0.0
    %2558 = vmatpush1.msra.mxu0 0.0
    %2559 = vmatprep.subr.mxu0 0.0
    %2560 = vmatpush1.msra.mxu0 0.0
    %2561 = vmatprep.subr.mxu0 0.0
    %2562 = vmatpush1.msra.mxu0 0.0
    %2563 = vmatprep.subr.mxu0 0.0
    %2564 = vmatpush1.msra.mxu0 0.0
    %2565 = vmatprep.subr.mxu0 0.0
    %2566 = vmatpush1.msra.mxu0 0.0
    %2567 = vmatprep.subr.mxu0 0.0
    %2568 = vmatpush1.msra.mxu0 %v1660
    %2569 = vmatprep.subr.mxu0 0.0
    %2570 = vmatpush2.msra.mxu0 0.0
    %2571 = vmatprep.subr.mxu0 0.0
    %2572 = vmatpush2.msra.mxu0 0.0
    %2573 = vmatprep.subr.mxu0 0.0
    %2574 = vmatpush2.msra.mxu0 0.0
    %2575 = vmatprep.subr.mxu0 0.0
    %2576 = vmatpush2.msra.mxu0 0.0
    %2577 = vmatprep.subr.mxu0 0.0
    %2578 = vmatpush2.msra.mxu0 0.0
    %2579 = vmatprep.subr.mxu0 0.0
    %2580 = vmatpush2.msra.mxu0 0.0
    %2581 = vmatprep.subr.mxu0 0.0
    %2582 = vmatpush2.msra.mxu0 0.0
    %2583 = vmatprep.subr.mxu0 0.0
    %2584 = vmatpush2.msra.mxu0 0.0
    %2585 = vmatprep.subr.mxu0 0.0
    %2586 = vmatpush2.msra.mxu0 0.0
    %2587 = vmatprep.subr.mxu0 0.0
    %2588 = vmatpush2.msra.mxu0 0.0
    %2589 = vmatprep.subr.mxu0 0.0
    %2590 = vmatpush2.msra.mxu0 0.0
    %2591 = vmatprep.subr.mxu0 0.0
    %2592 = vmatpush2.msra.mxu0 0.0
    %2593 = vmatprep.subr.mxu0 0.0
    %2594 = vmatpush2.msra.mxu0 0.0
    %2595 = vmatprep.subr.mxu0 0.0
    %2596 = vmatpush2.msra.mxu0 0.0
    %2597 = vmatprep.subr.mxu0 0.0
    %2598 = vmatpush2.msra.mxu0 0.0
    %2599 = vmatprep.subr.mxu0 0.0
    %2600 = vmatpush2.msra.mxu0 0.0
    %2601 = vmatprep.mubr.f32.mxu0 0.0
    %2602 = vmatmul.mubr.f32.gmra.mxu0 %v2532
    %v2603 = vpop.f32.mrf.mxu0
    %v2604 = vadd.f32 0.0, %v2603
    %v2605 = vpop.f32.mrf.mxu0
    %2606 = vmatprep.mubr.f32.mxu0 0.0
    %2607 = vmatmul.mubr.f32.gmra.mxu0 %v2535
    %v2608 = vpop.f32.mrf.mxu0
    %v2609 = vadd.f32 0.0, %v2608
    %v2610 = vpop.f32.mrf.mxu0
    %2611 = vdwg.mxu0
    %v2612 = vadd.f32 %v2319, %v2604
    %v2613 = vadd.f32 %v2324, %v2609
    %2614 = vrot.lane.b32.xlu0 %v1751, 104
    %v2615 = vpop.permute.xlu0 %2614
    %2616 = vrot.lane.b32.xlu0 %v1756, 104
    %v2617 = vpop.permute.xlu0 %2616
    %2618 = vrot.lane.b32.xlu0 %v1751, 72
    %v2619 = vpop.permute.xlu0 %2618
    %2620 = vrot.lane.b32.xlu0 %v1756, 72
    %v2621 = vpop.permute.xlu0 %2620
    %v2622 = vsel %vm255, %v2615, 0
    %v2624 = vsel %vm255, %v2617, 0
    %v2626 = vsel %vm255, %v2619, 0
    %v2628 = vsel %vm255, %v2621, 0
    %2630 = vmatprep.subr.mxu0 0.0
    %2631 = vmatpush1.xpose.msra.mxu0 0.0
    %2632 = vmatprep.subr.mxu0 0.0
    %2633 = vmatpush1.xpose.msra.mxu0 0.0
    %2634 = vmatprep.subr.mxu0 0.0
    %2635 = vmatpush1.xpose.msra.mxu0 0.0
    %2636 = vmatprep.subr.mxu0 0.0
    %2637 = vmatpush1.xpose.msra.mxu0 0.0
    %2638 = vmatprep.subr.mxu0 0.0
    %2639 = vmatpush1.xpose.msra.mxu0 0.0
    %2640 = vmatprep.subr.mxu0 0.0
    %2641 = vmatpush1.xpose.msra.mxu0 0.0
    %2642 = vmatprep.subr.mxu0 0.0
    %2643 = vmatpush1.xpose.msra.mxu0 0.0
    %2644 = vmatprep.subr.mxu0 0.0
    %2645 = vmatpush1.xpose.msra.mxu0 0.0
    %2646 = vmatprep.subr.mxu0 0.0
    %2647 = vmatpush1.xpose.msra.mxu0 0.0
    %2648 = vmatprep.subr.mxu0 0.0
    %2649 = vmatpush1.xpose.msra.mxu0 0.0
    %2650 = vmatprep.subr.mxu0 0.0
    %2651 = vmatpush1.xpose.msra.mxu0 0.0
    %2652 = vmatprep.subr.mxu0 0.0
    %2653 = vmatpush1.xpose.msra.mxu0 0.0
    %2654 = vmatprep.subr.mxu0 0.0
    %2655 = vmatpush1.xpose.msra.mxu0 0.0
    %2656 = vmatprep.subr.mxu0 0.0
    %2657 = vmatpush1.xpose.msra.mxu0 0.0
    %2658 = vmatprep.subr.mxu0 0.0
    %2659 = vmatpush1.xpose.msra.mxu0 %v2628
    %2660 = vmatprep.subr.mxu0 0.0
    %2661 = vmatpush1.xpose.msra.mxu0 %v2626
    %2662 = vmatprep.subr.mxu0 0.0
    %2663 = vmatpush2.xpose.msra.mxu0 0.0
    %2664 = vmatprep.subr.mxu0 0.0
    %2665 = vmatpush2.xpose.msra.mxu0 0.0
    %2666 = vmatprep.subr.mxu0 0.0
    %2667 = vmatpush2.xpose.msra.mxu0 0.0
    %2668 = vmatprep.subr.mxu0 0.0
    %2669 = vmatpush2.xpose.msra.mxu0 0.0
    %2670 = vmatprep.subr.mxu0 0.0
    %2671 = vmatpush2.xpose.msra.mxu0 0.0
    %2672 = vmatprep.subr.mxu0 0.0
    %2673 = vmatpush2.xpose.msra.mxu0 0.0
    %2674 = vmatprep.subr.mxu0 0.0
    %2675 = vmatpush2.xpose.msra.mxu0 0.0
    %2676 = vmatprep.subr.mxu0 0.0
    %2677 = vmatpush2.xpose.msra.mxu0 0.0
    %2678 = vmatprep.subr.mxu0 0.0
    %2679 = vmatpush2.xpose.msra.mxu0 0.0
    %2680 = vmatprep.subr.mxu0 0.0
    %2681 = vmatpush2.xpose.msra.mxu0 0.0
    %2682 = vmatprep.subr.mxu0 0.0
    %2683 = vmatpush2.xpose.msra.mxu0 0.0
    %2684 = vmatprep.subr.mxu0 0.0
    %2685 = vmatpush2.xpose.msra.mxu0 0.0
    %2686 = vmatprep.subr.mxu0 0.0
    %2687 = vmatpush2.xpose.msra.mxu0 0.0
    %2688 = vmatprep.subr.mxu0 0.0
    %2689 = vmatpush2.xpose.msra.mxu0 0.0
    %2690 = vmatprep.subr.mxu0 0.0
    %2691 = vmatpush2.xpose.msra.mxu0 0.0
    %2692 = vmatprep.subr.mxu0 0.0
    %2693 = vmatpush2.xpose.msra.mxu0 0.0
    %2694 = vmatprep.mubr.f32.mxu0 0.0
    %2695 = vmatmul.mubr.f32.gmra.mxu0 %v2622
    %v2696 = vpop.f32.mrf.mxu0
    %v2697 = vadd.f32 0.0, %v2696
    %v2698 = vpop.f32.mrf.mxu0
    %2699 = vmatprep.mubr.f32.mxu0 0.0
    %2700 = vmatmul.mubr.f32.gmra.mxu0 %v2624
    %v2701 = vpop.f32.mrf.mxu0
    %v2702 = vadd.f32 0.0, %v2701
    %v2703 = vpop.f32.mrf.mxu0
    %2704 = vdwg.mxu0
    %v2705 = vmul.f32 %v2697, 0.35355338
    %v2706 = vmul.f32 %v2702, 0.35355338
    %v2707 = vadd.f32 %v2705, %v45
    %v2708 = vadd.f32 %v2706, %v46
    %v2709 = vsel %vm343, %v2707, -inf
    %2710 = vmax.xlane.f32.xlu0 %v2709
    %v2711 = vpop.xlane.xlu0 %2710
    %v2712 = vsel %vm343, %v2708, -inf
    %2713 = vmax.xlane.f32.xlu0 %v2712
    %v2714 = vpop.xlane.xlu0 %2713
    %v2715 = vsub.f32 %v2707, %v2711
    %v2716 = vsub.f32 %v2708, %v2714
    %v2717 = vmul.f32 %v2715, 1.442695
    %v2718 = vpow.pop %v2717
    %v2719 = vmul.f32 %v2716, 1.442695
    %v2720 = vpow.pop %v2719
    %v2721 = vsel %vm343, %v2718, 0.0
    %2722 = vadd.xlane.f32.xlu0 %v2721
    %v2723 = vpop.xlane.xlu0 %2722
    %v2724 = vsel %vm343, %v2720, 0.0
    %2725 = vadd.xlane.f32.xlu0 %v2724
    %v2726 = vpop.xlane.xlu0 %2725
    %v2727 = vrcp.pop %v2723
    %v2728 = vmul.f32 %v2718, %v2727
    %v2729 = vrcp.pop %v2726
    %v2730 = vmul.f32 %v2720, %v2729
    %2731 = vrot.lane.b32.xlu0 %v1751, 40
    %v2732 = vpop.permute.xlu0 %2731
    %2733 = vrot.lane.b32.xlu0 %v1756, 40
    %v2734 = vpop.permute.xlu0 %2733
    %v2738 = vsel %vm343, %v2728, 0
    %v2741 = vsel %vm343, %v2730, 0
    %2743 = vmatprep.subr.mxu0 0.0
    %2744 = vmatpush1.msra.mxu0 0.0
    %2745 = vmatprep.subr.mxu0 0.0
    %2746 = vmatpush1.msra.mxu0 0.0
    %2747 = vmatprep.subr.mxu0 0.0
    %2748 = vmatpush1.msra.mxu0 0.0
    %2749 = vmatprep.subr.mxu0 0.0
    %2750 = vmatpush1.msra.mxu0 0.0
    %2751 = vmatprep.subr.mxu0 0.0
    %2752 = vmatpush1.msra.mxu0 0.0
    %2753 = vmatprep.subr.mxu0 0.0
    %2754 = vmatpush1.msra.mxu0 0.0
    %2755 = vmatprep.subr.mxu0 0.0
    %2756 = vmatpush1.msra.mxu0 0.0
    %2757 = vmatprep.subr.mxu0 0.0
    %2758 = vmatpush1.msra.mxu0 0.0
    %2759 = vmatprep.subr.mxu0 0.0
    %2760 = vmatpush1.msra.mxu0 0.0
    %2761 = vmatprep.subr.mxu0 0.0
    %2762 = vmatpush1.msra.mxu0 0.0
    %2763 = vmatprep.subr.mxu0 0.0
    %2764 = vmatpush1.msra.mxu0 0.0
    %2765 = vmatprep.subr.mxu0 0.0
    %2766 = vmatpush1.msra.mxu0 0.0
    %2767 = vmatprep.subr.mxu0 0.0
    %2768 = vmatpush1.msra.mxu0 0.0
    %2769 = vmatprep.subr.mxu0 0.0
    %2770 = vmatpush1.msra.mxu0 0.0
    %2771 = vmatprep.subr.mxu0 0.0
    %2772 = vmatpush1.msra.mxu0 %v2734
    %2773 = vmatprep.subr.mxu0 0.0
    %2774 = vmatpush1.msra.mxu0 %v2732
    %2775 = vmatprep.subr.mxu0 0.0
    %2776 = vmatpush2.msra.mxu0 0.0
    %2777 = vmatprep.subr.mxu0 0.0
    %2778 = vmatpush2.msra.mxu0 0.0
    %2779 = vmatprep.subr.mxu0 0.0
    %2780 = vmatpush2.msra.mxu0 0.0
    %2781 = vmatprep.subr.mxu0 0.0
    %2782 = vmatpush2.msra.mxu0 0.0
    %2783 = vmatprep.subr.mxu0 0.0
    %2784 = vmatpush2.msra.mxu0 0.0
    %2785 = vmatprep.subr.mxu0 0.0
    %2786 = vmatpush2.msra.mxu0 0.0
    %2787 = vmatprep.subr.mxu0 0.0
    %2788 = vmatpush2.msra.mxu0 0.0
    %2789 = vmatprep.subr.mxu0 0.0
    %2790 = vmatpush2.msra.mxu0 0.0
    %2791 = vmatprep.subr.mxu0 0.0
    %2792 = vmatpush2.msra.mxu0 0.0
    %2793 = vmatprep.subr.mxu0 0.0
    %2794 = vmatpush2.msra.mxu0 0.0
    %2795 = vmatprep.subr.mxu0 0.0
    %2796 = vmatpush2.msra.mxu0 0.0
    %2797 = vmatprep.subr.mxu0 0.0
    %2798 = vmatpush2.msra.mxu0 0.0
    %2799 = vmatprep.subr.mxu0 0.0
    %2800 = vmatpush2.msra.mxu0 0.0
    %2801 = vmatprep.subr.mxu0 0.0
    %2802 = vmatpush2.msra.mxu0 0.0
    %2803 = vmatprep.subr.mxu0 0.0
    %2804 = vmatpush2.msra.mxu0 0.0
    %2805 = vmatprep.subr.mxu0 0.0
    %2806 = vmatpush2.msra.mxu0 0.0
    %2807 = vmatprep.mubr.f32.mxu0 0.0
    %2808 = vmatmul.mubr.f32.gmra.mxu0 %v2738
    %v2809 = vpop.f32.mrf.mxu0
    %v2810 = vadd.f32 0.0, %v2809
    %v2811 = vpop.f32.mrf.mxu0
    %2812 = vmatprep.mubr.f32.mxu0 0.0
    %2813 = vmatmul.mubr.f32.gmra.mxu0 %v2741
    %v2814 = vpop.f32.mrf.mxu0
    %v2815 = vadd.f32 0.0, %v2814
    %v2816 = vpop.f32.mrf.mxu0
    %2817 = vdwg.mxu0
    %v2819 = vsel %vm255, %v2810, 0
    %v2822 = vsel %vm255, %v2815, 0
    %2824 = vmatprep.subr.mxu0 0.0
    %2825 = vmatpush1.msra.mxu0 0.0
    %2826 = vmatprep.subr.mxu0 0.0
    %2827 = vmatpush1.msra.mxu0 0.0
    %2828 = vmatprep.subr.mxu0 0.0
    %2829 = vmatpush1.msra.mxu0 0.0
    %2830 = vmatprep.subr.mxu0 0.0
    %2831 = vmatpush1.msra.mxu0 0.0
    %2832 = vmatprep.subr.mxu0 0.0
    %2833 = vmatpush1.msra.mxu0 0.0
    %2834 = vmatprep.subr.mxu0 0.0
    %2835 = vmatpush1.msra.mxu0 0.0
    %2836 = vmatprep.subr.mxu0 0.0
    %2837 = vmatpush1.msra.mxu0 0.0
    %2838 = vmatprep.subr.mxu0 0.0
    %2839 = vmatpush1.msra.mxu0 0.0
    %2840 = vmatprep.subr.mxu0 0.0
    %2841 = vmatpush1.msra.mxu0 0.0
    %2842 = vmatprep.subr.mxu0 0.0
    %2843 = vmatpush1.msra.mxu0 0.0
    %2844 = vmatprep.subr.mxu0 0.0
    %2845 = vmatpush1.msra.mxu0 0.0
    %2846 = vmatprep.subr.mxu0 0.0
    %2847 = vmatpush1.msra.mxu0 0.0
    %2848 = vmatprep.subr.mxu0 0.0
    %2849 = vmatpush1.msra.mxu0 0.0
    %2850 = vmatprep.subr.mxu0 0.0
    %2851 = vmatpush1.msra.mxu0 0.0
    %2852 = vmatprep.subr.mxu0 0.0
    %2853 = vmatpush1.msra.mxu0 0.0
    %2854 = vmatprep.subr.mxu0 0.0
    %2855 = vmatpush1.msra.mxu0 %v1661
    %2856 = vmatprep.subr.mxu0 0.0
    %2857 = vmatpush2.msra.mxu0 0.0
    %2858 = vmatprep.subr.mxu0 0.0
    %2859 = vmatpush2.msra.mxu0 0.0
    %2860 = vmatprep.subr.mxu0 0.0
    %2861 = vmatpush2.msra.mxu0 0.0
    %2862 = vmatprep.subr.mxu0 0.0
    %2863 = vmatpush2.msra.mxu0 0.0
    %2864 = vmatprep.subr.mxu0 0.0
    %2865 = vmatpush2.msra.mxu0 0.0
    %2866 = vmatprep.subr.mxu0 0.0
    %2867 = vmatpush2.msra.mxu0 0.0
    %2868 = vmatprep.subr.mxu0 0.0
    %2869 = vmatpush2.msra.mxu0 0.0
    %2870 = vmatprep.subr.mxu0 0.0
    %2871 = vmatpush2.msra.mxu0 0.0
    %2872 = vmatprep.subr.mxu0 0.0
    %2873 = vmatpush2.msra.mxu0 0.0
    %2874 = vmatprep.subr.mxu0 0.0
    %2875 = vmatpush2.msra.mxu0 0.0
    %2876 = vmatprep.subr.mxu0 0.0
    %2877 = vmatpush2.msra.mxu0 0.0
    %2878 = vmatprep.subr.mxu0 0.0
    %2879 = vmatpush2.msra.mxu0 0.0
    %2880 = vmatprep.subr.mxu0 0.0
    %2881 = vmatpush2.msra.mxu0 0.0
    %2882 = vmatprep.subr.mxu0 0.0
    %2883 = vmatpush2.msra.mxu0 0.0
    %2884 = vmatprep.subr.mxu0 0.0
    %2885 = vmatpush2.msra.mxu0 0.0
    %2886 = vmatprep.subr.mxu0 0.0
    %2887 = vmatpush2.msra.mxu0 0.0
    %2888 = vmatprep.mubr.f32.mxu0 0.0
    %2889 = vmatmul.mubr.f32.gmra.mxu0 %v2819
    %v2890 = vpop.f32.mrf.mxu0
    %v2891 = vadd.f32 0.0, %v2890
    %v2892 = vpop.f32.mrf.mxu0
    %2893 = vmatprep.mubr.f32.mxu0 0.0
    %2894 = vmatmul.mubr.f32.gmra.mxu0 %v2822
    %v2895 = vpop.f32.mrf.mxu0
    %v2896 = vadd.f32 0.0, %v2895
    %v2897 = vpop.f32.mrf.mxu0
    %2898 = vdwg.mxu0
    %v2899 = vadd.f32 %v2612, %v2891
    %v2900 = vadd.f32 %v2613, %v2896
    %v2901 = vlaneseq
    %v2902 = vshrl.u32 %v2901, 7
    %v2903 = vsub.s32 1, %v2902
    %v2904 = vrot.slane %v54, %v2903
    %v2905 = vadd.f32 %v2899, %v2904
    %v2906 = vadd.f32 %v2900, %v2904
    %v2907 = vadd.f32 %v1651, %v2905
    %v2908 = vadd.f32 %v1652, %v2906
    %v2909 = vsel %vm167, %v2907, 0.0
    %2910 = vadd.xlane.f32.xlu0 %v2909
    %v2911 = vpop.xlane.xlu0 %2910
    %v2912 = vsel %vm167, %v2908, 0.0
    %2913 = vadd.xlane.f32.xlu0 %v2912
    %v2914 = vpop.xlane.xlu0 %2913
    %v2915 = vmul.f32 %v2911, %v1407
    %v2916 = vmul.f32 %v2914, %v1407
    %v2917 = vsub.f32 %v2907, %v2915
    %v2918 = vsub.f32 %v2908, %v2916
    %v2919 = vmul.f32 %v2917, %v2917
    %v2920 = vmul.f32 %v2918, %v2918
    %v2921 = vsel %vm167, %v2919, 0.0
    %2922 = vadd.xlane.f32.xlu0 %v2921
    %v2923 = vpop.xlane.xlu0 %2922
    %v2924 = vsel %vm167, %v2920, 0.0
    %2925 = vadd.xlane.f32.xlu0 %v2924
    %v2926 = vpop.xlane.xlu0 %2925
    %v2927 = vmul.f32 %v2923, %v1407
    %v2928 = vmul.f32 %v2926, %v1407
    %v2929 = vadd.f32 %v2927, 1e-05
    %v2930 = vadd.f32 %v2928, 1e-05
    %v2931 = vrsqrt.pop %v2929
    %v2932 = vrsqrt.pop %v2930
    %v2933 = vmul.f32 %v2917, %v2931
    %v2934 = vmul.f32 %v2918, %v2932
    %v2935 = vlaneseq
    %v2936 = vshrl.u32 %v2935, 7
    %v2937 = vsub.s32 2, %v2936
    %v2938 = vrot.slane %v54, %v2937
    %v2939 = vmul.f32 %v2933, %v2938
    %v2940 = vmul.f32 %v2934, %v2938
    %v2941 = vlaneseq
    %v2942 = vshrl.u32 %v2941, 7
    %v2943 = vsub.s32 3, %v2942
    %v2944 = vrot.slane %v54, %v2943
    %v2945 = vadd.f32 %v2939, %v2944
    %v2946 = vadd.f32 %v2940, %v2944
    %v2947 = vlaneseq
    %v2948 = vshrl.u32 %v2947, 7
    %v2949 = vsub.s32 4, %v2948
    %v2950 = vrot.slane %v54, %v2949
    %v2952 = vsel %vm167, %v2945, 0
    %v2955 = vsel %vm167, %v2946, 0
    %2957 = vmatprep.subr.mxu0 0.0
    %2958 = vmatpush1.msra.mxu0 0.0
    %2959 = vmatprep.subr.mxu0 0.0
    %2960 = vmatpush1.msra.mxu0 0.0
    %2961 = vmatprep.subr.mxu0 0.0
    %2962 = vmatpush1.msra.mxu0 0.0
    %2963 = vmatprep.subr.mxu0 0.0
    %2964 = vmatpush1.msra.mxu0 0.0
    %2965 = vmatprep.subr.mxu0 0.0
    %2966 = vmatpush1.msra.mxu0 0.0
    %2967 = vmatprep.subr.mxu0 0.0
    %2968 = vmatpush1.msra.mxu0 0.0
    %2969 = vmatprep.subr.mxu0 0.0
    %2970 = vmatpush1.msra.mxu0 0.0
    %2971 = vmatprep.subr.mxu0 0.0
    %2972 = vmatpush1.msra.mxu0 0.0
    %2973 = vmatprep.subr.mxu0 0.0
    %2974 = vmatpush1.msra.mxu0 0.0
    %2975 = vmatprep.subr.mxu0 0.0
    %2976 = vmatpush1.msra.mxu0 0.0
    %2977 = vmatprep.subr.mxu0 0.0
    %2978 = vmatpush1.msra.mxu0 0.0
    %2979 = vmatprep.subr.mxu0 0.0
    %2980 = vmatpush1.msra.mxu0 0.0
    %2981 = vmatprep.subr.mxu0 0.0
    %2982 = vmatpush1.msra.mxu0 %v1665
    %2983 = vmatprep.subr.mxu0 0.0
    %2984 = vmatpush1.msra.mxu0 %v1664
    %2985 = vmatprep.subr.mxu0 0.0
    %2986 = vmatpush1.msra.mxu0 %v1663
    %2987 = vmatprep.subr.mxu0 0.0
    %2988 = vmatpush1.msra.mxu0 %v1662
    %2989 = vmatprep.subr.mxu0 0.0
    %2990 = vmatpush2.msra.mxu0 0.0
    %2991 = vmatprep.subr.mxu0 0.0
    %2992 = vmatpush2.msra.mxu0 0.0
    %2993 = vmatprep.subr.mxu0 0.0
    %2994 = vmatpush2.msra.mxu0 0.0
    %2995 = vmatprep.subr.mxu0 0.0
    %2996 = vmatpush2.msra.mxu0 0.0
    %2997 = vmatprep.subr.mxu0 0.0
    %2998 = vmatpush2.msra.mxu0 0.0
    %2999 = vmatprep.subr.mxu0 0.0
    %3000 = vmatpush2.msra.mxu0 0.0
    %3001 = vmatprep.subr.mxu0 0.0
    %3002 = vmatpush2.msra.mxu0 0.0
    %3003 = vmatprep.subr.mxu0 0.0
    %3004 = vmatpush2.msra.mxu0 0.0
    %3005 = vmatprep.subr.mxu0 0.0
    %3006 = vmatpush2.msra.mxu0 0.0
    %3007 = vmatprep.subr.mxu0 0.0
    %3008 = vmatpush2.msra.mxu0 0.0
    %3009 = vmatprep.subr.mxu0 0.0
    %3010 = vmatpush2.msra.mxu0 0.0
    %3011 = vmatprep.subr.mxu0 0.0
    %3012 = vmatpush2.msra.mxu0 0.0
    %3013 = vmatprep.subr.mxu0 0.0
    %3014 = vmatpush2.msra.mxu0 0.0
    %3015 = vmatprep.subr.mxu0 0.0
    %3016 = vmatpush2.msra.mxu0 0.0
    %3017 = vmatprep.subr.mxu0 0.0
    %3018 = vmatpush2.msra.mxu0 0.0
    %3019 = vmatprep.subr.mxu0 0.0
    %3020 = vmatpush2.msra.mxu0 0.0
    %3021 = vmatprep.mubr.f32.mxu0 0.0
    %3022 = vmatmul.mubr.f32.gmra.mxu0 %v2952
    %v3023 = vpop.f32.mrf.mxu0
    %v3024 = vadd.f32 %v2950, %v3023
    %v3025 = vpop.f32.mrf.mxu0
    %3026 = vmatprep.mubr.f32.mxu0 0.0
    %3027 = vmatmul.mubr.f32.gmra.mxu0 %v2955
    %v3028 = vpop.f32.mrf.mxu0
    %v3029 = vadd.f32 %v2950, %v3028
    %v3030 = vpop.f32.mrf.mxu0
    %3031 = vdwg.mxu0
    %v3032 = vmax.f32 %v3024, 0.0
    %v3033 = vmax.f32 %v3029, 0.0
    %v3034 = vlaneseq
    %v3035 = vshrl.u32 %v3034, 7
    %v3036 = vsub.s32 5, %v3035
    %v3037 = vrot.slane %v54, %v3036
    %v3039 = vsel %vm1531, %v3032, 0
    %v3042 = vsel %vm1531, %v3033, 0
    %3044 = vmatprep.subr.mxu0 0.0
    %3045 = vmatpush1.msra.mxu0 0.0
    %3046 = vmatprep.subr.mxu0 0.0
    %3047 = vmatpush1.msra.mxu0 0.0
    %3048 = vmatprep.subr.mxu0 0.0
    %3049 = vmatpush1.msra.mxu0 0.0
    %3050 = vmatprep.subr.mxu0 0.0
    %3051 = vmatpush1.msra.mxu0 0.0
    %3052 = vmatprep.subr.mxu0 0.0
    %3053 = vmatpush1.msra.mxu0 0.0
    %3054 = vmatprep.subr.mxu0 0.0
    %3055 = vmatpush1.msra.mxu0 0.0
    %3056 = vmatprep.subr.mxu0 0.0
    %3057 = vmatpush1.msra.mxu0 0.0
    %3058 = vmatprep.subr.mxu0 0.0
    %3059 = vmatpush1.msra.mxu0 0.0
    %3060 = vmatprep.subr.mxu0 0.0
    %3061 = vmatpush1.msra.mxu0 %v1673
    %3062 = vmatprep.subr.mxu0 0.0
    %3063 = vmatpush1.msra.mxu0 %v1672
    %3064 = vmatprep.subr.mxu0 0.0
    %3065 = vmatpush1.msra.mxu0 %v1671
    %3066 = vmatprep.subr.mxu0 0.0
    %3067 = vmatpush1.msra.mxu0 %v1670
    %3068 = vmatprep.subr.mxu0 0.0
    %3069 = vmatpush1.msra.mxu0 %v1669
    %3070 = vmatprep.subr.mxu0 0.0
    %3071 = vmatpush1.msra.mxu0 %v1668
    %3072 = vmatprep.subr.mxu0 0.0
    %3073 = vmatpush1.msra.mxu0 %v1667
    %3074 = vmatprep.subr.mxu0 0.0
    %3075 = vmatpush1.msra.mxu0 %v1666
    %3076 = vmatprep.subr.mxu0 0.0
    %3077 = vmatpush2.msra.mxu0 0.0
    %3078 = vmatprep.subr.mxu0 0.0
    %3079 = vmatpush2.msra.mxu0 0.0
    %3080 = vmatprep.subr.mxu0 0.0
    %3081 = vmatpush2.msra.mxu0 0.0
    %3082 = vmatprep.subr.mxu0 0.0
    %3083 = vmatpush2.msra.mxu0 0.0
    %3084 = vmatprep.subr.mxu0 0.0
    %3085 = vmatpush2.msra.mxu0 0.0
    %3086 = vmatprep.subr.mxu0 0.0
    %3087 = vmatpush2.msra.mxu0 0.0
    %3088 = vmatprep.subr.mxu0 0.0
    %3089 = vmatpush2.msra.mxu0 0.0
    %3090 = vmatprep.subr.mxu0 0.0
    %3091 = vmatpush2.msra.mxu0 0.0
    %3092 = vmatprep.subr.mxu0 0.0
    %3093 = vmatpush2.msra.mxu0 0.0
    %3094 = vmatprep.subr.mxu0 0.0
    %3095 = vmatpush2.msra.mxu0 0.0
    %3096 = vmatprep.subr.mxu0 0.0
    %3097 = vmatpush2.msra.mxu0 0.0
    %3098 = vmatprep.subr.mxu0 0.0
    %3099 = vmatpush2.msra.mxu0 0.0
    %3100 = vmatprep.subr.mxu0 0.0
    %3101 = vmatpush2.msra.mxu0 0.0
    %3102 = vmatprep.subr.mxu0 0.0
    %3103 = vmatpush2.msra.mxu0 0.0
    %3104 = vmatprep.subr.mxu0 0.0
    %3105 = vmatpush2.msra.mxu0 0.0
    %3106 = vmatprep.subr.mxu0 0.0
    %3107 = vmatpush2.msra.mxu0 0.0
    %3108 = vmatprep.mubr.f32.mxu0 0.0
    %3109 = vmatmul.mubr.f32.gmra.mxu0 %v3039
    %v3110 = vpop.f32.mrf.mxu0
    %v3111 = vadd.f32 %v3037, %v3110
    %v3112 = vpop.f32.mrf.mxu0
    %3113 = vmatprep.mubr.f32.mxu0 0.0
    %3114 = vmatmul.mubr.f32.gmra.mxu0 %v3042
    %v3115 = vpop.f32.mrf.mxu0
    %v3116 = vadd.f32 %v3037, %v3115
    %v3117 = vpop.f32.mrf.mxu0
    %3118 = vdwg.mxu0
    %v3119 = vadd.f32 %v2945, %v3111
    %v3120 = vadd.f32 %v2946, %v3116
    %v3121 = vsel %vm167, %v3119, 0.0
    %3122 = vadd.xlane.f32.xlu0 %v3121
    %v3123 = vpop.xlane.xlu0 %3122
    %v3124 = vsel %vm167, %v3120, 0.0
    %3125 = vadd.xlane.f32.xlu0 %v3124
    %v3126 = vpop.xlane.xlu0 %3125
    %v3127 = vmul.f32 %v3123, %v1407
    %v3128 = vmul.f32 %v3126, %v1407
    %v3129 = vsub.f32 %v3119, %v3127
    %v3130 = vsub.f32 %v3120, %v3128
    %v3131 = vmul.f32 %v3129, %v3129
    %v3132 = vmul.f32 %v3130, %v3130
    %v3133 = vsel %vm167, %v3131, 0.0
    %3134 = vadd.xlane.f32.xlu0 %v3133
    %v3135 = vpop.xlane.xlu0 %3134
    %v3136 = vsel %vm167, %v3132, 0.0
    %3137 = vadd.xlane.f32.xlu0 %v3136
    %v3138 = vpop.xlane.xlu0 %3137
    %v3139 = vmul.f32 %v3135, %v1407
    %v3140 = vmul.f32 %v3138, %v1407
    %v3141 = vadd.f32 %v3139, 1e-05
    %v3142 = vadd.f32 %v3140, 1e-05
    %v3143 = vrsqrt.pop %v3141
    %v3144 = vrsqrt.pop %v3142
    %v3145 = vmul.f32 %v3129, %v3143
    %v3146 = vmul.f32 %v3130, %v3144
    %v3147 = vlaneseq
    %v3148 = vshrl.u32 %v3147, 7
    %v3149 = vsub.s32 6, %v3148
    %v3150 = vrot.slane %v54, %v3149
    %v3151 = vmul.f32 %v3145, %v3150
    %v3152 = vmul.f32 %v3146, %v3150
    %v3153 = vlaneseq
    %v3154 = vshrl.u32 %v3153, 7
    %v3155 = vsub.s32 7, %v3154
    %v3156 = vrot.slane %v54, %v3155
    %v3157 = vadd.f32 %v3151, %v3156
    %v3158 = vadd.f32 %v3152, %v3156
    %v3160 = vsel %vm343, %v47, 0
    %3162 = vmatprep.subr.mxu0 0.0
    %3163 = vmatpush1.msra.mxu0 0.0
    %3164 = vmatprep.subr.mxu0 0.0
    %3165 = vmatpush1.msra.mxu0 0.0
    %3166 = vmatprep.subr.mxu0 0.0
    %3167 = vmatpush1.msra.mxu0 0.0
    %3168 = vmatprep.subr.mxu0 0.0
    %3169 = vmatpush1.msra.mxu0 0.0
    %3170 = vmatprep.subr.mxu0 0.0
    %3171 = vmatpush1.msra.mxu0 0.0
    %3172 = vmatprep.subr.mxu0 0.0
    %3173 = vmatpush1.msra.mxu0 0.0
    %3174 = vmatprep.subr.mxu0 0.0
    %3175 = vmatpush1.msra.mxu0 0.0
    %3176 = vmatprep.subr.mxu0 0.0
    %3177 = vmatpush1.msra.mxu0 0.0
    %3178 = vmatprep.subr.mxu0 0.0
    %3179 = vmatpush1.msra.mxu0 0.0
    %3180 = vmatprep.subr.mxu0 0.0
    %3181 = vmatpush1.msra.mxu0 0.0
    %3182 = vmatprep.subr.mxu0 0.0
    %3183 = vmatpush1.msra.mxu0 0.0
    %3184 = vmatprep.subr.mxu0 0.0
    %3185 = vmatpush1.msra.mxu0 0.0
    %3186 = vmatprep.subr.mxu0 0.0
    %3187 = vmatpush1.msra.mxu0 0.0
    %3188 = vmatprep.subr.mxu0 0.0
    %3189 = vmatpush1.msra.mxu0 0.0
    %3190 = vmatprep.subr.mxu0 0.0
    %3191 = vmatpush1.msra.mxu0 %v3158
    %3192 = vmatprep.subr.mxu0 0.0
    %3193 = vmatpush1.msra.mxu0 %v3157
    %3194 = vmatprep.subr.mxu0 0.0
    %3195 = vmatpush2.msra.mxu0 0.0
    %3196 = vmatprep.subr.mxu0 0.0
    %3197 = vmatpush2.msra.mxu0 0.0
    %3198 = vmatprep.subr.mxu0 0.0
    %3199 = vmatpush2.msra.mxu0 0.0
    %3200 = vmatprep.subr.mxu0 0.0
    %3201 = vmatpush2.msra.mxu0 0.0
    %3202 = vmatprep.subr.mxu0 0.0
    %3203 = vmatpush2.msra.mxu0 0.0
    %3204 = vmatprep.subr.mxu0 0.0
    %3205 = vmatpush2.msra.mxu0 0.0
    %3206 = vmatprep.subr.mxu0 0.0
    %3207 = vmatpush2.msra.mxu0 0.0
    %3208 = vmatprep.subr.mxu0 0.0
    %3209 = vmatpush2.msra.mxu0 0.0
    %3210 = vmatprep.subr.mxu0 0.0
    %3211 = vmatpush2.msra.mxu0 0.0
    %3212 = vmatprep.subr.mxu0 0.0
    %3213 = vmatpush2.msra.mxu0 0.0
    %3214 = vmatprep.subr.mxu0 0.0
    %3215 = vmatpush2.msra.mxu0 0.0
    %3216 = vmatprep.subr.mxu0 0.0
    %3217 = vmatpush2.msra.mxu0 0.0
    %3218 = vmatprep.subr.mxu0 0.0
    %3219 = vmatpush2.msra.mxu0 0.0
    %3220 = vmatprep.subr.mxu0 0.0
    %3221 = vmatpush2.msra.mxu0 0.0
    %3222 = vmatprep.subr.mxu0 0.0
    %3223 = vmatpush2.msra.mxu0 0.0
    %3224 = vmatprep.subr.mxu0 0.0
    %3225 = vmatpush2.msra.mxu0 0.0
    %3226 = vmatprep.mubr.f32.mxu0 0.0
    %3227 = vmatmul.mubr.f32.gmra.mxu0 %v3160
    %v3228 = vpop.f32.mrf.mxu0
    %v3229 = vadd.f32 0.0, %v3228
    %v3230 = vpop.f32.mrf.mxu0
    %3231 = vdwg.mxu0
    %v3232 = vlaneseq
    %v3233 = vshrl.u32 %v3232, 7
    %v3234 = vsub.s32 0, %v3233
    %v3235 = vrot.slane %v52, %v3234
    %v3237 = vsel %vm167, %v3229, 0
    %3239 = vmatprep.subr.mxu0 0.0
    %3240 = vmatpush1.msra.mxu0 0.0
    %3241 = vmatprep.subr.mxu0 0.0
    %3242 = vmatpush1.msra.mxu0 0.0
    %3243 = vmatprep.subr.mxu0 0.0
    %3244 = vmatpush1.msra.mxu0 0.0
    %3245 = vmatprep.subr.mxu0 0.0
    %3246 = vmatpush1.msra.mxu0 0.0
    %3247 = vmatprep.subr.mxu0 0.0
    %3248 = vmatpush1.msra.mxu0 0.0
    %3249 = vmatprep.subr.mxu0 0.0
    %3250 = vmatpush1.msra.mxu0 0.0
    %3251 = vmatprep.subr.mxu0 0.0
    %3252 = vmatpush1.msra.mxu0 0.0
    %3253 = vmatprep.subr.mxu0 0.0
    %3254 = vmatpush1.msra.mxu0 0.0
    %3255 = vmatprep.subr.mxu0 0.0
    %3256 = vmatpush1.msra.mxu0 0.0
    %3257 = vmatprep.subr.mxu0 0.0
    %3258 = vmatpush1.msra.mxu0 0.0
    %3259 = vmatprep.subr.mxu0 0.0
    %3260 = vmatpush1.msra.mxu0 0.0
    %3261 = vmatprep.subr.mxu0 0.0
    %3262 = vmatpush1.msra.mxu0 0.0
    %3263 = vmatprep.subr.mxu0 0.0
    %3264 = vmatpush1.msra.mxu0 %v51
    %3265 = vmatprep.subr.mxu0 0.0
    %3266 = vmatpush1.msra.mxu0 %v50
    %3267 = vmatprep.subr.mxu0 0.0
    %3268 = vmatpush1.msra.mxu0 %v49
    %3269 = vmatprep.subr.mxu0 0.0
    %3270 = vmatpush1.msra.mxu0 %v48
    %3271 = vmatprep.subr.mxu0 0.0
    %3272 = vmatpush2.msra.mxu0 0.0
    %3273 = vmatprep.subr.mxu0 0.0
    %3274 = vmatpush2.msra.mxu0 0.0
    %3275 = vmatprep.subr.mxu0 0.0
    %3276 = vmatpush2.msra.mxu0 0.0
    %3277 = vmatprep.subr.mxu0 0.0
    %3278 = vmatpush2.msra.mxu0 0.0
    %3279 = vmatprep.subr.mxu0 0.0
    %3280 = vmatpush2.msra.mxu0 0.0
    %3281 = vmatprep.subr.mxu0 0.0
    %3282 = vmatpush2.msra.mxu0 0.0
    %3283 = vmatprep.subr.mxu0 0.0
    %3284 = vmatpush2.msra.mxu0 0.0
    %3285 = vmatprep.subr.mxu0 0.0
    %3286 = vmatpush2.msra.mxu0 0.0
    %3287 = vmatprep.subr.mxu0 0.0
    %3288 = vmatpush2.msra.mxu0 0.0
    %3289 = vmatprep.subr.mxu0 0.0
    %3290 = vmatpush2.msra.mxu0 0.0
    %3291 = vmatprep.subr.mxu0 0.0
    %3292 = vmatpush2.msra.mxu0 0.0
    %3293 = vmatprep.subr.mxu0 0.0
    %3294 = vmatpush2.msra.mxu0 0.0
    %3295 = vmatprep.subr.mxu0 0.0
    %3296 = vmatpush2.msra.mxu0 0.0
    %3297 = vmatprep.subr.mxu0 0.0
    %3298 = vmatpush2.msra.mxu0 0.0
    %3299 = vmatprep.subr.mxu0 0.0
    %3300 = vmatpush2.msra.mxu0 0.0
    %3301 = vmatprep.subr.mxu0 0.0
    %3302 = vmatpush2.msra.mxu0 0.0
    %3303 = vmatprep.mubr.f32.mxu0 0.0
    %3304 = vmatmul.mubr.f32.gmra.mxu0 %v3237
    %v3305 = vpop.f32.mrf.mxu0
    %v3306 = vadd.f32 %v3235, %v3305
    %v3307 = vpop.f32.mrf.mxu0
    %3308 = vdwg.mxu0
    %3309 = vst [vmem:[%s3] sm:$0xff] %v3306
    // Predicated region
    $region22: #{transformer_qnetwork_forward.1} parent=1 // pred_check
      _
    $region23: #{transformer_qnetwork_forward.1} parent=1 // pred_check_branch
      %3311 = sbr.rel (0) target = $region25
    $region24: #{transformer_qnetwork_forward.1} parent=1 // pred_region
      _
    $region25: #{transformer_qnetwork_forward.1} parent=1 // pred_fallthru
      _
    // Predicated region
    $region26: #{transformer_qnetwork_forward.1} parent=1 // pred_check
      _
    $region27: #{transformer_qnetwork_forward.1} parent=1 // pred_check_branch
      %3313 = sbr.rel (0) target = $region29
    $region28: #{transformer_qnetwork_forward.1} parent=1 // pred_region
      _
    $region29: #{transformer_qnetwork_forward.1} parent=1 // pred_fallthru
      _
    %3314 = vsyncpa [#allocation3], 1
    %3315 = vsyncpa [#allocation5], 1

</llo_original>
